<compile_context>
chip_gen: v7x
topology: tpu7x:2x2x1
jax: 0.10.0
libtpu: 0.0.40
codegen_flags: <defaults>
</compile_context>

<pallas_src>
import functools

import jax
import jax.numpy as jnp
import numpy as np
from jax.experimental import pallas as pl
from jax.experimental.pallas import tpu as pltpu

LN_EPS = 1e-5
HEAD_ROWS = 8  # output head weight padded to 8 rows (MXU-friendly M dim); row 0 is real


def _round_up(x, m):
    return (x + m - 1) // m * m


# ----------------------------------------------------------------------------
# Math helpers (shared by the kernel body and the pure-JAX f32 reference)
# ----------------------------------------------------------------------------
def _layer_norm(h, gamma, beta):
    mu = jnp.mean(h, axis=-1, keepdims=True)
    var = jnp.mean((h - mu) * (h - mu), axis=-1, keepdims=True)
    return (h - mu) * jax.lax.rsqrt(var + LN_EPS) * gamma + beta


# ----------------------------------------------------------------------------
# Fused forward kernel (whole network per batch tile; activations stay in VMEM)
# ----------------------------------------------------------------------------
def _make_fused_kernel(has_input_proj, layer_has_proj):
    """Param refs arrive in consumption order:
         [w_in (in,d0) bf16, b_in (1,d0) f32]?                 input projection
         per layer: [w_p bf16, v_p (3,d) f32]? ,
                    w1 bf16, v1 (3,d) f32, w2 bf16, v2 (3,d) f32
         w_out (HEAD_ROWS, prev) bf16, b_out (1,1) f32          output head
       where v* rows are [bias; ln_gamma; ln_beta].  Last positional arg = out ref.
    """

    def kernel(x_ref, *refs):
        out_ref = refs[-1]
        params = iter(refs[:-1])

        def nxt():
            return next(params)[...]

        x = x_ref[...]                                # (tile_b, in_dim) f32
        xb = x.astype(jnp.bfloat16)                   # bf16 copy feeding the MXU

        if has_input_proj:
            w, b = nxt(), nxt()
            x = jnp.dot(xb, w, preferred_element_type=jnp.float32) + b
            xb = x.astype(jnp.bfloat16)

        # TODO(synk): for deep nets with a uniform hidden dim, stack per-layer weights
        # into (L, d, d) and iterate with lax.fori_loop instead of fully unrolling.
        for has_proj in layer_has_proj:
            if has_proj:                              # Linear -> LayerNorm -> ReLU
                w, v = nxt(), nxt()
                h = jnp.dot(xb, w, preferred_element_type=jnp.float32) + v[0:1, :]
                x = jnp.maximum(_layer_norm(h, v[1:2, :], v[2:3, :]), 0.0)
                xb = x.astype(jnp.bfloat16)
            # ResidualBlock: x + LN2(Linear2(Dropout(ReLU(LN1(Linear1(x))))))
            w1, v1, w2, v2 = nxt(), nxt(), nxt(), nxt()
            h = jnp.dot(xb, w1, preferred_element_type=jnp.float32) + v1[0:1, :]
            h = jnp.maximum(_layer_norm(h, v1[1:2, :], v1[2:3, :]), 0.0)
            # TODO(synk): nn.Dropout(0.5) is identity in eval mode; training-mode
            # stochastic dropout (pltpu.prng_*) is not implemented here.
            h = jnp.dot(h.astype(jnp.bfloat16), w2,
                        preferred_element_type=jnp.float32) + v2[0:1, :]
            h = _layer_norm(h, v2[1:2, :], v2[2:3, :])
            x = x + h                                 # residual carry stays f32
            xb = x.astype(jnp.bfloat16)

        # Output head -> one lane-dense (1, tile_b) row per tile:
        #   sigmoid(w_out @ x^T + b_out).  f32 transpose is a cheap XLU op; the
        #   HEAD_ROWS padding keeps the matmul M dim MXU-friendly.
        wo, bo = nxt(), nxt()                         # (HEAD_ROWS, prev) bf16, (1,1) f32
        xt = x.T.astype(jnp.bfloat16)                 # (prev, tile_b)
        head = jnp.dot(wo, xt, preferred_element_type=jnp.float32)  # (HEAD_ROWS, tile_b)
        out_ref[0] = jax.nn.sigmoid(head[0:1, :] + bo)

    return kernel


def res_ffn_forward(params, x, *, tile_b=512):
    """Fused ResFFNClassifier forward; returns (batch, 1) f32 probabilities."""
    batch, in_dim = x.shape

    # Big tiles amortize the ~0.35us/step grid overhead; clamp so tiny batches still
    # yield a legal (multiple-of-8) block.  On v7x prefer a tile_b giving an even
    # grid >= 2 so both TensorCores get work; on v5e/v6e grid=1 is fine.
    tile_b = int(min(tile_b, _round_up(batch, 8)))
    tile_b = _round_up(tile_b, 8)
    num_tiles = int(pl.cdiv(batch, tile_b))

    # Flatten params in exactly the order the kernel consumes them.
    flat_params = []
    has_input_proj = params["input_proj"] is not None
    if has_input_proj:
        flat_params += list(params["input_proj"])
    layer_has_proj = []
    for layer in params["layers"]:
        hp = layer["proj"] is not None
        layer_has_proj.append(hp)
        if hp:
            flat_params += list(layer["proj"])
        flat_params += list(layer["res"])
    flat_params += list(params["output"])

    kernel = _make_fused_kernel(has_input_proj, tuple(layer_has_proj))

    # x: batch-tiled.  No wrapper-side jnp.pad: the last tile's out-of-bounds rows
    # read garbage, but all math is row-independent and those rows are sliced off.
    x_spec = pl.BlockSpec((tile_b, in_dim), lambda i: (i, 0))
    # Weights / packed bias+LN vectors: full-array blocks, constant index_map ->
    # fetched once and VMEM-resident across the whole grid; single-buffered since
    # double-buffering an invariant block only wastes VMEM (critical on v7x).
    param_specs = [
        pl.BlockSpec(p.shape, lambda i: (0, 0), pipeline_mode=pl.Buffered(1))
        for p in flat_params
    ]
    # One lane-dense (1, tile_b) output row per tile; out array (num_tiles, 1, tile_b).
    out_spec = pl.BlockSpec((1, 1, tile_b), lambda i: (i, 0, 0))

    # Generation-aware VMEM budget: ~75% of this chip's VMEM, never below the footprint.
    param_bytes = sum(int(np.prod(p.shape)) * p.dtype.itemsize for p in flat_params)
    max_dim = max([in_dim, tile_b] + [int(d) for p in flat_params for d in p.shape])
    act_bytes = tile_b * max_dim * 4                       # one f32 activation tile
    io_bytes = 2 * (tile_b * in_dim * 4) + 2 * (tile_b * 4)  # double-buffered x / out tiles
    required = param_bytes + io_bytes + 8 * act_bytes        # + live-intermediate headroom
    try:
        vmem_cap = pltpu.get_tpu_info().vmem_capacity_bytes
    except Exception:  # not queryable (e.g. interpret on CPU): assume v7x's 64 MiB/TC
        vmem_cap = 64 << 20
    vmem_limit = int(max(int(vmem_cap * 0.75), required))

    out = pl.pallas_call(
        kernel,
        out_shape=jax.ShapeDtypeStruct((num_tiles, 1, tile_b), jnp.float32),
        grid=(num_tiles,),
        in_specs=[x_spec] + param_specs,
        out_specs=out_spec,
        compiler_params=pltpu.CompilerParams(
            dimension_semantics=("parallel",),  # batch tiles shard across TCs on v7x
            vmem_limit_bytes=vmem_limit,
        ),
    )(x, *flat_params)
    return out.reshape(-1)[:batch, None]


# ----------------------------------------------------------------------------
# Parameter initialization (nn.Linear-style uniform init; weights -> bf16)
# ----------------------------------------------------------------------------
def init_linear(key, in_dim, out_dim):
    k1, k2 = jax.random.split(key)
    bound = 1.0 / float(np.sqrt(in_dim))
    w = jax.random.uniform(k1, (in_dim, out_dim), jnp.float32, -bound, bound)
    b = jax.random.uniform(k2, (out_dim,), jnp.float32, -bound, bound)
    return w.astype(jnp.bfloat16), b  # weight bf16 for the MXU, bias f32


def _pack_vec(bias, dim):
    """Pack [bias; ln_gamma; ln_beta] into one lane-dense (3, dim) f32 array."""
    return jnp.stack(
        [bias, jnp.ones((dim,), jnp.float32), jnp.zeros((dim,), jnp.float32)]
    )


def init_res_ffn(key, input_dim, architecture):
    params = {}
    keys = jax.random.split(key, 3 * len(architecture) + 2)
    ki = 0
    prev = input_dim
    if prev != architecture[0]:
        w, b = init_linear(keys[ki], prev, architecture[0])
        ki += 1
        params["input_proj"] = (w, b.reshape(1, -1))
        prev = architecture[0]
    else:
        params["input_proj"] = None
    layers = []
    for hidden in architecture:
        layer = {}
        if prev != hidden:
            w, b = init_linear(keys[ki], prev, hidden)
            ki += 1
            layer["proj"] = (w, _pack_vec(b, hidden))
        else:
            layer["proj"] = None
        w1, b1 = init_linear(keys[ki], hidden, hidden)
        ki += 1
        w2, b2 = init_linear(keys[ki], hidden, hidden)
        ki += 1
        layer["res"] = (w1, _pack_vec(b1, hidden), w2, _pack_vec(b2, hidden))
        layers.append(layer)
        prev = hidden
    params["layers"] = layers  # <-- was missing; caused KeyError: 'layers'
    # Output head: weight padded to (HEAD_ROWS, prev) so the in-kernel w_out @ x^T
    # matmul has an MXU-friendly M dim; bias kept as (1, 1) f32.
    wo, bo = init_linear(keys[ki], prev, 1)
    wo_rows = jnp.zeros((HEAD_ROWS, prev), jnp.bfloat16).at[0, :].set(wo[:, 0])
    params["output"] = (wo_rows, bo.reshape(1, 1))
    return params


# ----------------------------------------------------------------------------
# Pure-JAX f32 reference with the original PyTorch-module math (weights are the
# stored bf16 values upcast to f32; all matmuls / LN / sigmoid in f32).
# ----------------------------------------------------------------------------
def res_ffn_reference(params, x):
    def linear(a, w, b):
        return a @ w.astype(jnp.float32) + b

    if params["input_proj"] is not None:
        w, b = params["input_proj"]
        x = linear(x, w, b)
    for layer in params["layers"]:
        if layer["proj"] is not None:
            w, v = layer["proj"]
            x = jnp.maximum(_layer_norm(linear(x, w, v[0:1]), v[1:2], v[2:3]), 0.0)
        w1, v1, w2, v2 = layer["res"]
        h = jnp.maximum(_layer_norm(linear(x, w1, v1[0:1]), v1[1:2], v1[2:3]), 0.0)
        h = _layer_norm(linear(h, w2, v2[0:1]), v2[1:2], v2[2:3])
        x = x + h
    wo, bo = params["output"]
    logits = x @ wo[0:1].astype(jnp.float32).T + bo[0, 0]
    return jax.nn.sigmoid(logits)


if __name__ == "__main__":
    batch = 256
    input_dim = 16
    # Multiples of 128 keep the v6e/v7x 256x256 MXUs fed; [128, 256] exercises both
    # the input_proj and the between-block projection paths.
    architecture = [128, 256]

    key = jax.random.PRNGKey(0)
    kx, kp = jax.random.split(key)
    x = jax.random.normal(kx, (batch, input_dim), jnp.float32)
    params = init_res_ffn(kp, input_dim, architecture)

    # tile_b=128 -> grid=(2,): even and >= 2 so both v7x TensorCores stay busy.
    fwd = jax.jit(functools.partial(res_ffn_forward, params, tile_b=128))
    y = jax.block_until_ready(fwd(x))

    # Kernel uses bf16 MXU operands with f32 accumulation; reference is pure f32,
    # hence the modest tolerance.
    y_ref = jax.block_until_ready(res_ffn_reference(params, x))

    assert y.shape == (batch, 1), y.shape
    np.testing.assert_allclose(np.asarray(y), np.asarray(y_ref), rtol=2e-2, atol=3e-2)
    print("KERNEL_OK")
</pallas_src>

<mosaic_0001>
module attributes {stable_mosaic.version = 11 : i64} {
  func.func @kernel(%arg0: i32, %arg1: memref<128x16xf32, #tpu.memory_space<vmem>>, %arg2: memref<16x128xbf16, #tpu.memory_space<vmem>>, %arg3: memref<1x128xf32, #tpu.memory_space<vmem>>, %arg4: memref<128x128xbf16, #tpu.memory_space<vmem>>, %arg5: memref<3x128xf32, #tpu.memory_space<vmem>>, %arg6: memref<128x128xbf16, #tpu.memory_space<vmem>>, %arg7: memref<3x128xf32, #tpu.memory_space<vmem>>, %arg8: memref<128x256xbf16, #tpu.memory_space<vmem>>, %arg9: memref<3x256xf32, #tpu.memory_space<vmem>>, %arg10: memref<256x256xbf16, #tpu.memory_space<vmem>>, %arg11: memref<3x256xf32, #tpu.memory_space<vmem>>, %arg12: memref<256x256xbf16, #tpu.memory_space<vmem>>, %arg13: memref<3x256xf32, #tpu.memory_space<vmem>>, %arg14: memref<8x256xbf16, #tpu.memory_space<vmem>>, %arg15: memref<1x1xf32, #tpu.memory_space<vmem>>, %arg16: memref<1x1x128xf32, #tpu.memory_space<vmem>>) attributes {dimension_semantics = [#tpu.dimension_semantics<parallel>], iteration_bounds = array<i64: 2>, scalar_prefetch = 0 : i64, scratch_operands = 0 : i64, tpu.core_type = #tpu.core_type<tc>, window_params = [{transform_indices = @transform_0, window_bounds = array<i64: 128, 16>}, {pipeline_mode = #tpu.pipeline_mode<synchronous>, transform_indices = @transform_1, window_bounds = array<i64: 16, 128>}, {pipeline_mode = #tpu.pipeline_mode<synchronous>, transform_indices = @transform_2, window_bounds = array<i64: 1, 128>}, {pipeline_mode = #tpu.pipeline_mode<synchronous>, transform_indices = @transform_3, window_bounds = array<i64: 128, 128>}, {pipeline_mode = #tpu.pipeline_mode<synchronous>, transform_indices = @transform_4, window_bounds = array<i64: 3, 128>}, {pipeline_mode = #tpu.pipeline_mode<synchronous>, transform_indices = @transform_5, window_bounds = array<i64: 128, 128>}, {pipeline_mode = #tpu.pipeline_mode<synchronous>, transform_indices = @transform_6, window_bounds = array<i64: 3, 128>}, {pipeline_mode = #tpu.pipeline_mode<synchronous>, transform_indices = @transform_7, window_bounds = array<i64: 128, 256>}, {pipeline_mode = #tpu.pipeline_mode<synchronous>, transform_indices = @transform_8, window_bounds = array<i64: 3, 256>}, {pipeline_mode = #tpu.pipeline_mode<synchronous>, transform_indices = @transform_9, window_bounds = array<i64: 256, 256>}, {pipeline_mode = #tpu.pipeline_mode<synchronous>, transform_indices = @transform_10, window_bounds = array<i64: 3, 256>}, {pipeline_mode = #tpu.pipeline_mode<synchronous>, transform_indices = @transform_11, window_bounds = array<i64: 256, 256>}, {pipeline_mode = #tpu.pipeline_mode<synchronous>, transform_indices = @transform_12, window_bounds = array<i64: 3, 256>}, {pipeline_mode = #tpu.pipeline_mode<synchronous>, transform_indices = @transform_13, window_bounds = array<i64: 8, 256>}, {pipeline_mode = #tpu.pipeline_mode<synchronous>, transform_indices = @transform_14, window_bounds = array<i64: 1, 1>}, {transform_indices = @transform_15, window_bounds = array<i64: 1, 1, 128>}]} {
    %c0 = arith.constant 0 : index
    %c0_0 = arith.constant 0 : index
    %0 = vector.load %arg1[%c0, %c0_0] : memref<128x16xf32, #tpu.memory_space<vmem>>, vector<128x16xf32>
    %1 = arith.truncf %0 : vector<128x16xf32> to vector<128x16xbf16>
    %c0_1 = arith.constant 0 : index
    %c0_2 = arith.constant 0 : index
    %2 = vector.load %arg2[%c0_1, %c0_2] : memref<16x128xbf16, #tpu.memory_space<vmem>>, vector<16x128xbf16>
    %c0_3 = arith.constant 0 : index
    %c0_4 = arith.constant 0 : index
    %3 = vector.load %arg3[%c0_3, %c0_4] : memref<1x128xf32, #tpu.memory_space<vmem>>, vector<1x128xf32>
    %cst = arith.constant dense<0.000000e+00> : vector<128x128xf32>
    %4 = tpu.matmul %1, %2, %cst {dimension_numbers = #tpu.dot_dimension_numbers<[1], [0], [0], [1], [0, 0, 1, 1], [], []>} : vector<128x16xbf16>, vector<16x128xbf16>, vector<128x128xf32> -> vector<128x128xf32>
    %5 = vector.broadcast %3 : vector<1x128xf32> to vector<128x128xf32>
    %6 = arith.addf %4, %5 : vector<128x128xf32>
    %7 = arith.truncf %6 : vector<128x128xf32> to vector<128x128xbf16>
    %c0_5 = arith.constant 0 : index
    %c0_6 = arith.constant 0 : index
    %8 = vector.load %arg4[%c0_5, %c0_6] : memref<128x128xbf16, #tpu.memory_space<vmem>>, vector<128x128xbf16>
    %c0_7 = arith.constant 0 : index
    %c0_8 = arith.constant 0 : index
    %9 = vector.load %arg5[%c0_7, %c0_8] : memref<3x128xf32, #tpu.memory_space<vmem>>, vector<3x128xf32>
    %c0_9 = arith.constant 0 : index
    %c0_10 = arith.constant 0 : index
    %10 = vector.load %arg6[%c0_9, %c0_10] : memref<128x128xbf16, #tpu.memory_space<vmem>>, vector<128x128xbf16>
    %c0_11 = arith.constant 0 : index
    %c0_12 = arith.constant 0 : index
    %11 = vector.load %arg7[%c0_11, %c0_12] : memref<3x128xf32, #tpu.memory_space<vmem>>, vector<3x128xf32>
    %cst_13 = arith.constant dense<0.000000e+00> : vector<128x128xf32>
    %12 = tpu.matmul %7, %8, %cst_13 {dimension_numbers = #tpu.dot_dimension_numbers<[1], [0], [0], [1], [0, 0, 1, 1], [], []>} : vector<128x128xbf16>, vector<128x128xbf16>, vector<128x128xf32> -> vector<128x128xf32>
    %13 = vector.extract_strided_slice %9 {offsets = [0, 0], sizes = [1, 128], strides = [1, 1]} : vector<3x128xf32> to vector<1x128xf32>
    %14 = vector.broadcast %13 : vector<1x128xf32> to vector<128x128xf32>
    %15 = arith.addf %12, %14 : vector<128x128xf32>
    %16 = vector.extract_strided_slice %9 {offsets = [1, 0], sizes = [1, 128], strides = [1, 1]} : vector<3x128xf32> to vector<1x128xf32>
    %17 = vector.extract_strided_slice %9 {offsets = [2, 0], sizes = [1, 128], strides = [1, 1]} : vector<3x128xf32> to vector<1x128xf32>
    %cst_14 = arith.constant dense<0.000000e+00> : vector<128xf32>
    %18 = vector.multi_reduction <add>, %15, %cst_14 [1] : vector<128x128xf32> to vector<128xf32>
    %19 = vector.shape_cast %18 : vector<128xf32> to vector<128x1xf32>
    %cst_15 = arith.constant 1.280000e+02 : f32
    %20 = vector.broadcast %cst_15 : f32 to vector<128x1xf32>
    %21 = arith.divf %19, %20 : vector<128x1xf32>
    %22 = vector.broadcast %21 : vector<128x1xf32> to vector<128x128xf32>
    %23 = arith.subf %15, %22 : vector<128x128xf32>
    %24 = vector.broadcast %21 : vector<128x1xf32> to vector<128x128xf32>
    %25 = arith.subf %15, %24 : vector<128x128xf32>
    %26 = arith.mulf %23, %25 : vector<128x128xf32>
    %cst_16 = arith.constant dense<0.000000e+00> : vector<128xf32>
    %27 = vector.multi_reduction <add>, %26, %cst_16 [1] : vector<128x128xf32> to vector<128xf32>
    %28 = vector.shape_cast %27 : vector<128xf32> to vector<128x1xf32>
    %cst_17 = arith.constant 1.280000e+02 : f32
    %29 = vector.broadcast %cst_17 : f32 to vector<128x1xf32>
    %30 = arith.divf %28, %29 : vector<128x1xf32>
    %31 = vector.broadcast %21 : vector<128x1xf32> to vector<128x128xf32>
    %32 = arith.subf %15, %31 : vector<128x128xf32>
    %cst_18 = arith.constant 9.99999974E-6 : f32
    %33 = vector.broadcast %cst_18 : f32 to vector<128x1xf32>
    %34 = arith.addf %30, %33 : vector<128x1xf32>
    %35 = math.rsqrt %34 : vector<128x1xf32>
    %36 = vector.broadcast %35 : vector<128x1xf32> to vector<128x128xf32>
    %37 = arith.mulf %32, %36 : vector<128x128xf32>
    %38 = vector.broadcast %16 : vector<1x128xf32> to vector<128x128xf32>
    %39 = arith.mulf %37, %38 : vector<128x128xf32>
    %40 = vector.broadcast %17 : vector<1x128xf32> to vector<128x128xf32>
    %41 = arith.addf %39, %40 : vector<128x128xf32>
    %cst_19 = arith.constant 0.000000e+00 : f32
    %42 = vector.broadcast %cst_19 : f32 to vector<128x128xf32>
    %43 = arith.maximumf %41, %42 : vector<128x128xf32>
    %44 = arith.truncf %43 : vector<128x128xf32> to vector<128x128xbf16>
    %cst_20 = arith.constant dense<0.000000e+00> : vector<128x128xf32>
    %45 = tpu.matmul %44, %10, %cst_20 {dimension_numbers = #tpu.dot_dimension_numbers<[1], [0], [0], [1], [0, 0, 1, 1], [], []>} : vector<128x128xbf16>, vector<128x128xbf16>, vector<128x128xf32> -> vector<128x128xf32>
    %46 = vector.extract_strided_slice %11 {offsets = [0, 0], sizes = [1, 128], strides = [1, 1]} : vector<3x128xf32> to vector<1x128xf32>
    %47 = vector.broadcast %46 : vector<1x128xf32> to vector<128x128xf32>
    %48 = arith.addf %45, %47 : vector<128x128xf32>
    %49 = vector.extract_strided_slice %11 {offsets = [1, 0], sizes = [1, 128], strides = [1, 1]} : vector<3x128xf32> to vector<1x128xf32>
    %50 = vector.extract_strided_slice %11 {offsets = [2, 0], sizes = [1, 128], strides = [1, 1]} : vector<3x128xf32> to vector<1x128xf32>
    %cst_21 = arith.constant dense<0.000000e+00> : vector<128xf32>
    %51 = vector.multi_reduction <add>, %48, %cst_21 [1] : vector<128x128xf32> to vector<128xf32>
    %52 = vector.shape_cast %51 : vector<128xf32> to vector<128x1xf32>
    %cst_22 = arith.constant 1.280000e+02 : f32
    %53 = vector.broadcast %cst_22 : f32 to vector<128x1xf32>
    %54 = arith.divf %52, %53 : vector<128x1xf32>
    %55 = vector.broadcast %54 : vector<128x1xf32> to vector<128x128xf32>
    %56 = arith.subf %48, %55 : vector<128x128xf32>
    %57 = vector.broadcast %54 : vector<128x1xf32> to vector<128x128xf32>
    %58 = arith.subf %48, %57 : vector<128x128xf32>
    %59 = arith.mulf %56, %58 : vector<128x128xf32>
    %cst_23 = arith.constant dense<0.000000e+00> : vector<128xf32>
    %60 = vector.multi_reduction <add>, %59, %cst_23 [1] : vector<128x128xf32> to vector<128xf32>
    %61 = vector.shape_cast %60 : vector<128xf32> to vector<128x1xf32>
    %cst_24 = arith.constant 1.280000e+02 : f32
    %62 = vector.broadcast %cst_24 : f32 to vector<128x1xf32>
    %63 = arith.divf %61, %62 : vector<128x1xf32>
    %64 = vector.broadcast %54 : vector<128x1xf32> to vector<128x128xf32>
    %65 = arith.subf %48, %64 : vector<128x128xf32>
    %cst_25 = arith.constant 9.99999974E-6 : f32
    %66 = vector.broadcast %cst_25 : f32 to vector<128x1xf32>
    %67 = arith.addf %63, %66 : vector<128x1xf32>
    %68 = math.rsqrt %67 : vector<128x1xf32>
    %69 = vector.broadcast %68 : vector<128x1xf32> to vector<128x128xf32>
    %70 = arith.mulf %65, %69 : vector<128x128xf32>
    %71 = vector.broadcast %49 : vector<1x128xf32> to vector<128x128xf32>
    %72 = arith.mulf %70, %71 : vector<128x128xf32>
    %73 = vector.broadcast %50 : vector<1x128xf32> to vector<128x128xf32>
    %74 = arith.addf %72, %73 : vector<128x128xf32>
    %75 = arith.addf %6, %74 : vector<128x128xf32>
    %76 = arith.truncf %75 : vector<128x128xf32> to vector<128x128xbf16>
    %c0_26 = arith.constant 0 : index
    %c0_27 = arith.constant 0 : index
    %77 = vector.load %arg8[%c0_26, %c0_27] : memref<128x256xbf16, #tpu.memory_space<vmem>>, vector<128x256xbf16>
    %c0_28 = arith.constant 0 : index
    %c0_29 = arith.constant 0 : index
    %78 = vector.load %arg9[%c0_28, %c0_29] : memref<3x256xf32, #tpu.memory_space<vmem>>, vector<3x256xf32>
    %cst_30 = arith.constant dense<0.000000e+00> : vector<128x256xf32>
    %79 = tpu.matmul %76, %77, %cst_30 {dimension_numbers = #tpu.dot_dimension_numbers<[1], [0], [0], [1], [0, 0, 1, 1], [], []>} : vector<128x128xbf16>, vector<128x256xbf16>, vector<128x256xf32> -> vector<128x256xf32>
    %80 = vector.extract_strided_slice %78 {offsets = [0, 0], sizes = [1, 256], strides = [1, 1]} : vector<3x256xf32> to vector<1x256xf32>
    %81 = vector.broadcast %80 : vector<1x256xf32> to vector<128x256xf32>
    %82 = arith.addf %79, %81 : vector<128x256xf32>
    %83 = vector.extract_strided_slice %78 {offsets = [1, 0], sizes = [1, 256], strides = [1, 1]} : vector<3x256xf32> to vector<1x256xf32>
    %84 = vector.extract_strided_slice %78 {offsets = [2, 0], sizes = [1, 256], strides = [1, 1]} : vector<3x256xf32> to vector<1x256xf32>
    %cst_31 = arith.constant dense<0.000000e+00> : vector<128xf32>
    %85 = vector.multi_reduction <add>, %82, %cst_31 [1] : vector<128x256xf32> to vector<128xf32>
    %86 = vector.shape_cast %85 : vector<128xf32> to vector<128x1xf32>
    %cst_32 = arith.constant 2.560000e+02 : f32
    %87 = vector.broadcast %cst_32 : f32 to vector<128x1xf32>
    %88 = arith.divf %86, %87 : vector<128x1xf32>
    %89 = vector.broadcast %88 : vector<128x1xf32> to vector<128x256xf32>
    %90 = arith.subf %82, %89 : vector<128x256xf32>
    %91 = vector.broadcast %88 : vector<128x1xf32> to vector<128x256xf32>
    %92 = arith.subf %82, %91 : vector<128x256xf32>
    %93 = arith.mulf %90, %92 : vector<128x256xf32>
    %cst_33 = arith.constant dense<0.000000e+00> : vector<128xf32>
    %94 = vector.multi_reduction <add>, %93, %cst_33 [1] : vector<128x256xf32> to vector<128xf32>
    %95 = vector.shape_cast %94 : vector<128xf32> to vector<128x1xf32>
    %cst_34 = arith.constant 2.560000e+02 : f32
    %96 = vector.broadcast %cst_34 : f32 to vector<128x1xf32>
    %97 = arith.divf %95, %96 : vector<128x1xf32>
    %98 = vector.broadcast %88 : vector<128x1xf32> to vector<128x256xf32>
    %99 = arith.subf %82, %98 : vector<128x256xf32>
    %cst_35 = arith.constant 9.99999974E-6 : f32
    %100 = vector.broadcast %cst_35 : f32 to vector<128x1xf32>
    %101 = arith.addf %97, %100 : vector<128x1xf32>
    %102 = math.rsqrt %101 : vector<128x1xf32>
    %103 = vector.broadcast %102 : vector<128x1xf32> to vector<128x256xf32>
    %104 = arith.mulf %99, %103 : vector<128x256xf32>
    %105 = vector.broadcast %83 : vector<1x256xf32> to vector<128x256xf32>
    %106 = arith.mulf %104, %105 : vector<128x256xf32>
    %107 = vector.broadcast %84 : vector<1x256xf32> to vector<128x256xf32>
    %108 = arith.addf %106, %107 : vector<128x256xf32>
    %cst_36 = arith.constant 0.000000e+00 : f32
    %109 = vector.broadcast %cst_36 : f32 to vector<128x256xf32>
    %110 = arith.maximumf %108, %109 : vector<128x256xf32>
    %111 = arith.truncf %110 : vector<128x256xf32> to vector<128x256xbf16>
    %c0_37 = arith.constant 0 : index
    %c0_38 = arith.constant 0 : index
    %112 = vector.load %arg10[%c0_37, %c0_38] : memref<256x256xbf16, #tpu.memory_space<vmem>>, vector<256x256xbf16>
    %c0_39 = arith.constant 0 : index
    %c0_40 = arith.constant 0 : index
    %113 = vector.load %arg11[%c0_39, %c0_40] : memref<3x256xf32, #tpu.memory_space<vmem>>, vector<3x256xf32>
    %c0_41 = arith.constant 0 : index
    %c0_42 = arith.constant 0 : index
    %114 = vector.load %arg12[%c0_41, %c0_42] : memref<256x256xbf16, #tpu.memory_space<vmem>>, vector<256x256xbf16>
    %c0_43 = arith.constant 0 : index
    %c0_44 = arith.constant 0 : index
    %115 = vector.load %arg13[%c0_43, %c0_44] : memref<3x256xf32, #tpu.memory_space<vmem>>, vector<3x256xf32>
    %cst_45 = arith.constant dense<0.000000e+00> : vector<128x256xf32>
    %116 = tpu.matmul %111, %112, %cst_45 {dimension_numbers = #tpu.dot_dimension_numbers<[1], [0], [0], [1], [0, 0, 1, 1], [], []>} : vector<128x256xbf16>, vector<256x256xbf16>, vector<128x256xf32> -> vector<128x256xf32>
    %117 = vector.extract_strided_slice %113 {offsets = [0, 0], sizes = [1, 256], strides = [1, 1]} : vector<3x256xf32> to vector<1x256xf32>
    %118 = vector.broadcast %117 : vector<1x256xf32> to vector<128x256xf32>
    %119 = arith.addf %116, %118 : vector<128x256xf32>
    %120 = vector.extract_strided_slice %113 {offsets = [1, 0], sizes = [1, 256], strides = [1, 1]} : vector<3x256xf32> to vector<1x256xf32>
    %121 = vector.extract_strided_slice %113 {offsets = [2, 0], sizes = [1, 256], strides = [1, 1]} : vector<3x256xf32> to vector<1x256xf32>
    %cst_46 = arith.constant dense<0.000000e+00> : vector<128xf32>
    %122 = vector.multi_reduction <add>, %119, %cst_46 [1] : vector<128x256xf32> to vector<128xf32>
    %123 = vector.shape_cast %122 : vector<128xf32> to vector<128x1xf32>
    %cst_47 = arith.constant 2.560000e+02 : f32
    %124 = vector.broadcast %cst_47 : f32 to vector<128x1xf32>
    %125 = arith.divf %123, %124 : vector<128x1xf32>
    %126 = vector.broadcast %125 : vector<128x1xf32> to vector<128x256xf32>
    %127 = arith.subf %119, %126 : vector<128x256xf32>
    %128 = vector.broadcast %125 : vector<128x1xf32> to vector<128x256xf32>
    %129 = arith.subf %119, %128 : vector<128x256xf32>
    %130 = arith.mulf %127, %129 : vector<128x256xf32>
    %cst_48 = arith.constant dense<0.000000e+00> : vector<128xf32>
    %131 = vector.multi_reduction <add>, %130, %cst_48 [1] : vector<128x256xf32> to vector<128xf32>
    %132 = vector.shape_cast %131 : vector<128xf32> to vector<128x1xf32>
    %cst_49 = arith.constant 2.560000e+02 : f32
    %133 = vector.broadcast %cst_49 : f32 to vector<128x1xf32>
    %134 = arith.divf %132, %133 : vector<128x1xf32>
    %135 = vector.broadcast %125 : vector<128x1xf32> to vector<128x256xf32>
    %136 = arith.subf %119, %135 : vector<128x256xf32>
    %cst_50 = arith.constant 9.99999974E-6 : f32
    %137 = vector.broadcast %cst_50 : f32 to vector<128x1xf32>
    %138 = arith.addf %134, %137 : vector<128x1xf32>
    %139 = math.rsqrt %138 : vector<128x1xf32>
    %140 = vector.broadcast %139 : vector<128x1xf32> to vector<128x256xf32>
    %141 = arith.mulf %136, %140 : vector<128x256xf32>
    %142 = vector.broadcast %120 : vector<1x256xf32> to vector<128x256xf32>
    %143 = arith.mulf %141, %142 : vector<128x256xf32>
    %144 = vector.broadcast %121 : vector<1x256xf32> to vector<128x256xf32>
    %145 = arith.addf %143, %144 : vector<128x256xf32>
    %cst_51 = arith.constant 0.000000e+00 : f32
    %146 = vector.broadcast %cst_51 : f32 to vector<128x256xf32>
    %147 = arith.maximumf %145, %146 : vector<128x256xf32>
    %148 = arith.truncf %147 : vector<128x256xf32> to vector<128x256xbf16>
    %cst_52 = arith.constant dense<0.000000e+00> : vector<128x256xf32>
    %149 = tpu.matmul %148, %114, %cst_52 {dimension_numbers = #tpu.dot_dimension_numbers<[1], [0], [0], [1], [0, 0, 1, 1], [], []>} : vector<128x256xbf16>, vector<256x256xbf16>, vector<128x256xf32> -> vector<128x256xf32>
    %150 = vector.extract_strided_slice %115 {offsets = [0, 0], sizes = [1, 256], strides = [1, 1]} : vector<3x256xf32> to vector<1x256xf32>
    %151 = vector.broadcast %150 : vector<1x256xf32> to vector<128x256xf32>
    %152 = arith.addf %149, %151 : vector<128x256xf32>
    %153 = vector.extract_strided_slice %115 {offsets = [1, 0], sizes = [1, 256], strides = [1, 1]} : vector<3x256xf32> to vector<1x256xf32>
    %154 = vector.extract_strided_slice %115 {offsets = [2, 0], sizes = [1, 256], strides = [1, 1]} : vector<3x256xf32> to vector<1x256xf32>
    %cst_53 = arith.constant dense<0.000000e+00> : vector<128xf32>
    %155 = vector.multi_reduction <add>, %152, %cst_53 [1] : vector<128x256xf32> to vector<128xf32>
    %156 = vector.shape_cast %155 : vector<128xf32> to vector<128x1xf32>
    %cst_54 = arith.constant 2.560000e+02 : f32
    %157 = vector.broadcast %cst_54 : f32 to vector<128x1xf32>
    %158 = arith.divf %156, %157 : vector<128x1xf32>
    %159 = vector.broadcast %158 : vector<128x1xf32> to vector<128x256xf32>
    %160 = arith.subf %152, %159 : vector<128x256xf32>
    %161 = vector.broadcast %158 : vector<128x1xf32> to vector<128x256xf32>
    %162 = arith.subf %152, %161 : vector<128x256xf32>
    %163 = arith.mulf %160, %162 : vector<128x256xf32>
    %cst_55 = arith.constant dense<0.000000e+00> : vector<128xf32>
    %164 = vector.multi_reduction <add>, %163, %cst_55 [1] : vector<128x256xf32> to vector<128xf32>
    %165 = vector.shape_cast %164 : vector<128xf32> to vector<128x1xf32>
    %cst_56 = arith.constant 2.560000e+02 : f32
    %166 = vector.broadcast %cst_56 : f32 to vector<128x1xf32>
    %167 = arith.divf %165, %166 : vector<128x1xf32>
    %168 = vector.broadcast %158 : vector<128x1xf32> to vector<128x256xf32>
    %169 = arith.subf %152, %168 : vector<128x256xf32>
    %cst_57 = arith.constant 9.99999974E-6 : f32
    %170 = vector.broadcast %cst_57 : f32 to vector<128x1xf32>
    %171 = arith.addf %167, %170 : vector<128x1xf32>
    %172 = math.rsqrt %171 : vector<128x1xf32>
    %173 = vector.broadcast %172 : vector<128x1xf32> to vector<128x256xf32>
    %174 = arith.mulf %169, %173 : vector<128x256xf32>
    %175 = vector.broadcast %153 : vector<1x256xf32> to vector<128x256xf32>
    %176 = arith.mulf %174, %175 : vector<128x256xf32>
    %177 = vector.broadcast %154 : vector<1x256xf32> to vector<128x256xf32>
    %178 = arith.addf %176, %177 : vector<128x256xf32>
    %179 = arith.addf %110, %178 : vector<128x256xf32>
    %c0_58 = arith.constant 0 : index
    %c0_59 = arith.constant 0 : index
    %180 = vector.load %arg14[%c0_58, %c0_59] : memref<8x256xbf16, #tpu.memory_space<vmem>>, vector<8x256xbf16>
    %c0_60 = arith.constant 0 : index
    %c0_61 = arith.constant 0 : index
    %181 = vector.load %arg15[%c0_60, %c0_61] : memref<1x1xf32, #tpu.memory_space<vmem>>, vector<1x1xf32>
    %182 = tpu.transpose %179, [1, 0] : vector<128x256xf32> -> vector<256x128xf32>
    %183 = arith.truncf %182 : vector<256x128xf32> to vector<256x128xbf16>
    %cst_62 = arith.constant dense<0.000000e+00> : vector<8x128xf32>
    %184 = tpu.matmul %180, %183, %cst_62 {dimension_numbers = #tpu.dot_dimension_numbers<[1], [0], [0], [1], [0, 0, 1, 1], [], []>} : vector<8x256xbf16>, vector<256x128xbf16>, vector<8x128xf32> -> vector<8x128xf32>
    %185 = vector.extract_strided_slice %184 {offsets = [0, 0], sizes = [1, 128], strides = [1, 1]} : vector<8x128xf32> to vector<1x128xf32>
    %186 = vector.broadcast %181 : vector<1x1xf32> to vector<1x128xf32>
    %187 = arith.addf %185, %186 : vector<1x128xf32>
    %188 = arith.negf %187 : vector<1x128xf32>
    %189 = math.exp %188 : vector<1x128xf32>
    %cst_63 = arith.constant 1.000000e+00 : f32
    %190 = vector.broadcast %cst_63 : f32 to vector<1x128xf32>
    %191 = arith.addf %190, %189 : vector<1x128xf32>
    %192 = arith.divf %190, %191 : vector<1x128xf32>
    %c0_64 = arith.constant 0 : index
    %c0_65 = arith.constant 0 : index
    %c0_66 = arith.constant 0 : index
    %193 = vector.load %arg16[%c0_64, %c0_65, %c0_66] : memref<1x1x128xf32, #tpu.memory_space<vmem>>, vector<1x1x128xf32>
    %194 = vector.shape_cast %193 : vector<1x1x128xf32> to vector<1x128xf32>
    %195 = vector.shape_cast %192 : vector<1x128xf32> to vector<1x1x128xf32>
    tpu.vector_store %arg16[%c0_64, %c0_65, %c0_66], %195 {strides = array<i32>} : memref<1x1x128xf32, #tpu.memory_space<vmem>>, vector<1x1x128xf32>,
    return
  }
  func.func @transform_0(%arg0: i32) -> (i32, i32) {
    %c0_i32 = arith.constant 0 : i32
    %c0_i32_0 = arith.constant 0 : i32
    return %arg0, %c0_i32 : i32, i32
  }
  func.func @transform_1(%arg0: i32) -> (i32, i32) {
    %c0_i32 = arith.constant 0 : i32
    %c0_i32_0 = arith.constant 0 : i32
    %c0_i32_1 = arith.constant 0 : i32
    return %c0_i32, %c0_i32_0 : i32, i32
  }
  func.func @transform_2(%arg0: i32) -> (i32, i32) {
    %c0_i32 = arith.constant 0 : i32
    %c0_i32_0 = arith.constant 0 : i32
    %c0_i32_1 = arith.constant 0 : i32
    return %c0_i32, %c0_i32_0 : i32, i32
  }
  func.func @transform_3(%arg0: i32) -> (i32, i32) {
    %c0_i32 = arith.constant 0 : i32
    %c0_i32_0 = arith.constant 0 : i32
    %c0_i32_1 = arith.constant 0 : i32
    return %c0_i32, %c0_i32_0 : i32, i32
  }
  func.func @transform_4(%arg0: i32) -> (i32, i32) {
    %c0_i32 = arith.constant 0 : i32
    %c0_i32_0 = arith.constant 0 : i32
    %c0_i32_1 = arith.constant 0 : i32
    return %c0_i32, %c0_i32_0 : i32, i32
  }
  func.func @transform_5(%arg0: i32) -> (i32, i32) {
    %c0_i32 = arith.constant 0 : i32
    %c0_i32_0 = arith.constant 0 : i32
    %c0_i32_1 = arith.constant 0 : i32
    return %c0_i32, %c0_i32_0 : i32, i32
  }
  func.func @transform_6(%arg0: i32) -> (i32, i32) {
    %c0_i32 = arith.constant 0 : i32
    %c0_i32_0 = arith.constant 0 : i32
    %c0_i32_1 = arith.constant 0 : i32
    return %c0_i32, %c0_i32_0 : i32, i32
  }
  func.func @transform_7(%arg0: i32) -> (i32, i32) {
    %c0_i32 = arith.constant 0 : i32
    %c0_i32_0 = arith.constant 0 : i32
    %c0_i32_1 = arith.constant 0 : i32
    return %c0_i32, %c0_i32_0 : i32, i32
  }
  func.func @transform_8(%arg0: i32) -> (i32, i32) {
    %c0_i32 = arith.constant 0 : i32
    %c0_i32_0 = arith.constant 0 : i32
    %c0_i32_1 = arith.constant 0 : i32
    return %c0_i32, %c0_i32_0 : i32, i32
  }
  func.func @transform_9(%arg0: i32) -> (i32, i32) {
    %c0_i32 = arith.constant 0 : i32
    %c0_i32_0 = arith.constant 0 : i32
    %c0_i32_1 = arith.constant 0 : i32
    return %c0_i32, %c0_i32_0 : i32, i32
  }
  func.func @transform_10(%arg0: i32) -> (i32, i32) {
    %c0_i32 = arith.constant 0 : i32
    %c0_i32_0 = arith.constant 0 : i32
    %c0_i32_1 = arith.constant 0 : i32
    return %c0_i32, %c0_i32_0 : i32, i32
  }
  func.func @transform_11(%arg0: i32) -> (i32, i32) {
    %c0_i32 = arith.constant 0 : i32
    %c0_i32_0 = arith.constant 0 : i32
    %c0_i32_1 = arith.constant 0 : i32
    return %c0_i32, %c0_i32_0 : i32, i32
  }
  func.func @transform_12(%arg0: i32) -> (i32, i32) {
    %c0_i32 = arith.constant 0 : i32
    %c0_i32_0 = arith.constant 0 : i32
    %c0_i32_1 = arith.constant 0 : i32
    return %c0_i32, %c0_i32_0 : i32, i32
  }
  func.func @transform_13(%arg0: i32) -> (i32, i32) {
    %c0_i32 = arith.constant 0 : i32
    %c0_i32_0 = arith.constant 0 : i32
    %c0_i32_1 = arith.constant 0 : i32
    return %c0_i32, %c0_i32_0 : i32, i32
  }
  func.func @transform_14(%arg0: i32) -> (i32, i32) {
    %c0_i32 = arith.constant 0 : i32
    %c0_i32_0 = arith.constant 0 : i32
    %c0_i32_1 = arith.constant 0 : i32
    return %c0_i32, %c0_i32_0 : i32, i32
  }
  func.func @transform_15(%arg0: i32) -> (i32, i32, i32) {
    %c0_i32 = arith.constant 0 : i32
    %c0_i32_0 = arith.constant 0 : i32
    %c0_i32_1 = arith.constant 0 : i32
    return %arg0, %c0_i32, %c0_i32_0 : i32, i32, i32
  }
}

</mosaic_0001>

<llo_original>
// kernel: res_ffn_forward.1
$region0: #{res_ffn_forward.1}
  #allocation0 [shape = 'u32[]', space=smem, size = 0x4, offset = 0x4, fixed_abs, tag = 'smem constant byte address 0x4 - core index']
  #allocation1 [shape = 'u32[144,128]{1,0:T(1,128)}', space=vmem, size = 0x12000, scoped, tag = 'internal scratch']
  #allocation2 [shape = 'f32[1,1]{1,0:T(1,128)S(1)}', space=vmem, size = 0x200, scoped, tag = 'scoped memory for res_ffn_forward.1']
  %s0 = inlined_call_operand.vmem [shape: f32[256,16], index: 0, kind: input, shape index: {}]
  %s1 = inlined_call_operand.vmem [shape: bf16[16,128], index: 1, kind: input, shape index: {}]
  %s2 = inlined_call_operand.vmem [shape: f32[1,128], index: 2, kind: input, shape index: {}]
  %s3 = inlined_call_operand.vmem [shape: bf16[128,128], index: 3, kind: input, shape index: {}]
  %s4 = inlined_call_operand.vmem [shape: f32[3,128], index: 4, kind: input, shape index: {}]
  %s5 = inlined_call_operand.vmem [shape: bf16[128,128], index: 5, kind: input, shape index: {}]
  %s6 = inlined_call_operand.vmem [shape: f32[3,128], index: 6, kind: input, shape index: {}]
  %s7 = inlined_call_operand.vmem [shape: bf16[128,256], index: 7, kind: input, shape index: {}]
  %s8 = inlined_call_operand.vmem [shape: f32[3,256], index: 8, kind: input, shape index: {}]
  %s9 = inlined_call_operand.vmem [shape: bf16[256,256], index: 9, kind: input, shape index: {}]
  %s10 = inlined_call_operand.vmem [shape: f32[3,256], index: 10, kind: input, shape index: {}]
  %s11 = inlined_call_operand.vmem [shape: bf16[256,256], index: 11, kind: input, shape index: {}]
  %s12 = inlined_call_operand.vmem [shape: f32[3,256], index: 12, kind: input, shape index: {}]
  %s13 = inlined_call_operand.vmem [shape: bf16[8,256], index: 13, kind: input, shape index: {}]
  %s14 = inlined_call_operand.<no memory space> [shape: f32[1,1], index: 14, kind: input, shape index: {}]
  %s15 = inlined_call_operand.hbm [shape: f32[2,1,128], index: 15, kind: output, shape index: {}]
  %s16 = sld [smem:[#allocation0]]
  $region93: #{res_ffn_forward.1} parent=0
    _
  %s18 = ssub.s32 1, %s16
  %s19 = scalar_select 0, %s18, %s16
  %v20 = vstv %s14
  %21 = vst [vmem:[#allocation2] sm:$0x1] %v20
  $region1: #{res_ffn_forward.1} parent=0
    #allocation3 [shape = 'u8[1024]{0}', space=vmem, size = 0x400, scoped, tag = 'output window, operand 0']
    #allocation4 [shape = 's32[2]{0}', space=sflag, size = 0x8, scoped, tag = 'scoped memory for res_ffn_forward.1']
    %22 = vsyncpa [#allocation4], 0
    %s23 = scalar_lea.sflag [#allocation4], 1
    %24 = vsyncpa %s23, 0
    loop: start=0, step=1, limit=4
    $region2: #{res_ffn_forward.1} parent=1 // loop_pre_header
      _
    $region3: #{res_ffn_forward.1} parent=1 // loop_header
      %s26 = sphi 0, %s30
      %p27 = scmp.ge.s32.totalorder %s26, 4
      %s36 = sphi 0, %s38
      %s39 = sphi 0, %s36
      %s40 = sphi 0, %s39
      %s56 = sphi 0, %s40
      %s60 = sphi 0, %s60
      %s62 = sphi 0, %s60
      %s63 = sphi 0, %s62
      %s77 = sphi 0, %s63
      %s81 = sphi 0, %s81
      %s83 = sphi 0, %s81
      %s84 = sphi 0, %s83
      %s98 = sphi 0, %s84
      %s102 = sphi 0, %s102
      %s104 = sphi 0, %s102
      %s105 = sphi 0, %s104
      %s119 = sphi 0, %s105
      %s123 = sphi 0, %s123
      %s125 = sphi 0, %s123
      %s126 = sphi 0, %s125
      %s140 = sphi 0, %s126
      %s144 = sphi 0, %s144
      %s146 = sphi 0, %s144
      %s147 = sphi 0, %s146
      %s161 = sphi 0, %s147
      %s165 = sphi 0, %s165
      %s167 = sphi 0, %s165
      %s168 = sphi 0, %s167
      %s182 = sphi 0, %s168
      %s186 = sphi 0, %s186
      %s188 = sphi 0, %s186
      %s189 = sphi 0, %s188
      %s203 = sphi 0, %s189
      %s207 = sphi 0, %s207
      %s209 = sphi 0, %s207
      %s210 = sphi 0, %s209
      %s224 = sphi 0, %s210
      %s228 = sphi 0, %s228
      %s230 = sphi 0, %s228
      %s231 = sphi 0, %s230
      %s245 = sphi 0, %s231
      %s249 = sphi 0, %s249
      %s251 = sphi 0, %s249
      %s252 = sphi 0, %s251
      %s266 = sphi 0, %s252
      %s270 = sphi 0, %s270
      %s272 = sphi 0, %s270
      %s273 = sphi 0, %s272
      %s287 = sphi 0, %s273
      %s291 = sphi 0, %s291
      %s293 = sphi 0, %s291
      %s294 = sphi 0, %s293
      %s308 = sphi 0, %s294
      %s312 = sphi 0, %s312
      %s314 = sphi 0, %s312
      %s315 = sphi 0, %s314
      %s329 = sphi 0, %s315
      %s333 = sphi 0, %s333
      %s335 = sphi 0, %s333
      %s336 = sphi 0, %s335
      %s350 = sphi 0, %s336
      %s356 = sphi 0, %s358
      %s359 = sphi 0, %s356
      %s360 = sphi 0, %s359
      %s376 = sphi 0, %s360
    $region4: #{res_ffn_forward.1} parent=1 // loop_header_branch
      %29 = sbr.rel (%p27) target = $region8
    $region5: #{res_ffn_forward.1} parent=1 // loop_body
      %s31 = ssub.s32 %s26, 1
      %s32 = ssub.s32 %s26, 2
      %s33 = sadd.s32 %s26, 1
      %s34 = ssub.s32 %s26, %s33
      %p35 = scmp.eq.s32.totalorder %s34, 0
      %s37 = sadd.s32 %s36, 1
      %s38 = scalar_select %p35, %s36, %s37
      %p41 = pneg %p35
      %p42 = scmp.eq.s32.totalorder %s26, 1
      %p43 = por %p41, %p42
      %p44 = scmp.ne.s32.totalorder %s36, %s39
      %p45 = scmp.eq.s32.totalorder %s26, 0
      %p46 = por %p44, %p45
      %p47 = scmp.ne.s32.totalorder %s36, %s39
      %p48 = scmp.eq.s32.totalorder %s31, 1
      %p49 = por %p47, %p48
      %p50 = scmp.ne.s32.totalorder %s39, %s40
      %p51 = scmp.eq.s32.totalorder %s31, 0
      %p52 = por %p50, %p51
      %p53 = scmp.ne.s32.totalorder %s39, %s40
      %p54 = scmp.eq.s32.totalorder %s32, 1
      %p55 = por %p53, %p54
      %p57 = scmp.ne.s32.totalorder %s40, %s56
      %p58 = scmp.eq.s32.totalorder %s32, 0
      %p59 = por %p57, %p58
      %s61 = sadd.s32 %s60, 1
      %p64 = scmp.eq.s32.totalorder %s26, 1
      %p65 = scmp.ne.s32.totalorder %s60, %s62
      %p66 = scmp.eq.s32.totalorder %s26, 0
      %p67 = por %p65, %p66
      %p68 = scmp.ne.s32.totalorder %s60, %s62
      %p69 = scmp.eq.s32.totalorder %s31, 1
      %p70 = por %p68, %p69
      %p71 = scmp.ne.s32.totalorder %s62, %s63
      %p72 = scmp.eq.s32.totalorder %s31, 0
      %p73 = por %p71, %p72
      %p74 = scmp.ne.s32.totalorder %s62, %s63
      %p75 = scmp.eq.s32.totalorder %s32, 1
      %p76 = por %p74, %p75
      %p78 = scmp.ne.s32.totalorder %s63, %s77
      %p79 = scmp.eq.s32.totalorder %s32, 0
      %p80 = por %p78, %p79
      %s82 = sadd.s32 %s81, 1
      %p85 = scmp.eq.s32.totalorder %s26, 1
      %p86 = scmp.ne.s32.totalorder %s81, %s83
      %p87 = scmp.eq.s32.totalorder %s26, 0
      %p88 = por %p86, %p87
      %p89 = scmp.ne.s32.totalorder %s81, %s83
      %p90 = scmp.eq.s32.totalorder %s31, 1
      %p91 = por %p89, %p90
      %p92 = scmp.ne.s32.totalorder %s83, %s84
      %p93 = scmp.eq.s32.totalorder %s31, 0
      %p94 = por %p92, %p93
      %p95 = scmp.ne.s32.totalorder %s83, %s84
      %p96 = scmp.eq.s32.totalorder %s32, 1
      %p97 = por %p95, %p96
      %p99 = scmp.ne.s32.totalorder %s84, %s98
      %p100 = scmp.eq.s32.totalorder %s32, 0
      %p101 = por %p99, %p100
      %s103 = sadd.s32 %s102, 1
      %p106 = scmp.eq.s32.totalorder %s26, 1
      %p107 = scmp.ne.s32.totalorder %s102, %s104
      %p108 = scmp.eq.s32.totalorder %s26, 0
      %p109 = por %p107, %p108
      %p110 = scmp.ne.s32.totalorder %s102, %s104
      %p111 = scmp.eq.s32.totalorder %s31, 1
      %p112 = por %p110, %p111
      %p113 = scmp.ne.s32.totalorder %s104, %s105
      %p114 = scmp.eq.s32.totalorder %s31, 0
      %p115 = por %p113, %p114
      %p116 = scmp.ne.s32.totalorder %s104, %s105
      %p117 = scmp.eq.s32.totalorder %s32, 1
      %p118 = por %p116, %p117
      %p120 = scmp.ne.s32.totalorder %s105, %s119
      %p121 = scmp.eq.s32.totalorder %s32, 0
      %p122 = por %p120, %p121
      %s124 = sadd.s32 %s123, 1
      %p127 = scmp.eq.s32.totalorder %s26, 1
      %p128 = scmp.ne.s32.totalorder %s123, %s125
      %p129 = scmp.eq.s32.totalorder %s26, 0
      %p130 = por %p128, %p129
      %p131 = scmp.ne.s32.totalorder %s123, %s125
      %p132 = scmp.eq.s32.totalorder %s31, 1
      %p133 = por %p131, %p132
      %p134 = scmp.ne.s32.totalorder %s125, %s126
      %p135 = scmp.eq.s32.totalorder %s31, 0
      %p136 = por %p134, %p135
      %p137 = scmp.ne.s32.totalorder %s125, %s126
      %p138 = scmp.eq.s32.totalorder %s32, 1
      %p139 = por %p137, %p138
      %p141 = scmp.ne.s32.totalorder %s126, %s140
      %p142 = scmp.eq.s32.totalorder %s32, 0
      %p143 = por %p141, %p142
      %s145 = sadd.s32 %s144, 1
      %p148 = scmp.eq.s32.totalorder %s26, 1
      %p149 = scmp.ne.s32.totalorder %s144, %s146
      %p150 = scmp.eq.s32.totalorder %s26, 0
      %p151 = por %p149, %p150
      %p152 = scmp.ne.s32.totalorder %s144, %s146
      %p153 = scmp.eq.s32.totalorder %s31, 1
      %p154 = por %p152, %p153
      %p155 = scmp.ne.s32.totalorder %s146, %s147
      %p156 = scmp.eq.s32.totalorder %s31, 0
      %p157 = por %p155, %p156
      %p158 = scmp.ne.s32.totalorder %s146, %s147
      %p159 = scmp.eq.s32.totalorder %s32, 1
      %p160 = por %p158, %p159
      %p162 = scmp.ne.s32.totalorder %s147, %s161
      %p163 = scmp.eq.s32.totalorder %s32, 0
      %p164 = por %p162, %p163
      %s166 = sadd.s32 %s165, 1
      %p169 = scmp.eq.s32.totalorder %s26, 1
      %p170 = scmp.ne.s32.totalorder %s165, %s167
      %p171 = scmp.eq.s32.totalorder %s26, 0
      %p172 = por %p170, %p171
      %p173 = scmp.ne.s32.totalorder %s165, %s167
      %p174 = scmp.eq.s32.totalorder %s31, 1
      %p175 = por %p173, %p174
      %p176 = scmp.ne.s32.totalorder %s167, %s168
      %p177 = scmp.eq.s32.totalorder %s31, 0
      %p178 = por %p176, %p177
      %p179 = scmp.ne.s32.totalorder %s167, %s168
      %p180 = scmp.eq.s32.totalorder %s32, 1
      %p181 = por %p179, %p180
      %p183 = scmp.ne.s32.totalorder %s168, %s182
      %p184 = scmp.eq.s32.totalorder %s32, 0
      %p185 = por %p183, %p184
      %s187 = sadd.s32 %s186, 1
      %p190 = scmp.eq.s32.totalorder %s26, 1
      %p191 = scmp.ne.s32.totalorder %s186, %s188
      %p192 = scmp.eq.s32.totalorder %s26, 0
      %p193 = por %p191, %p192
      %p194 = scmp.ne.s32.totalorder %s186, %s188
      %p195 = scmp.eq.s32.totalorder %s31, 1
      %p196 = por %p194, %p195
      %p197 = scmp.ne.s32.totalorder %s188, %s189
      %p198 = scmp.eq.s32.totalorder %s31, 0
      %p199 = por %p197, %p198
      %p200 = scmp.ne.s32.totalorder %s188, %s189
      %p201 = scmp.eq.s32.totalorder %s32, 1
      %p202 = por %p200, %p201
      %p204 = scmp.ne.s32.totalorder %s189, %s203
      %p205 = scmp.eq.s32.totalorder %s32, 0
      %p206 = por %p204, %p205
      %s208 = sadd.s32 %s207, 1
      %p211 = scmp.eq.s32.totalorder %s26, 1
      %p212 = scmp.ne.s32.totalorder %s207, %s209
      %p213 = scmp.eq.s32.totalorder %s26, 0
      %p214 = por %p212, %p213
      %p215 = scmp.ne.s32.totalorder %s207, %s209
      %p216 = scmp.eq.s32.totalorder %s31, 1
      %p217 = por %p215, %p216
      %p218 = scmp.ne.s32.totalorder %s209, %s210
      %p219 = scmp.eq.s32.totalorder %s31, 0
      %p220 = por %p218, %p219
      %p221 = scmp.ne.s32.totalorder %s209, %s210
      %p222 = scmp.eq.s32.totalorder %s32, 1
      %p223 = por %p221, %p222
      %p225 = scmp.ne.s32.totalorder %s210, %s224
      %p226 = scmp.eq.s32.totalorder %s32, 0
      %p227 = por %p225, %p226
      %s229 = sadd.s32 %s228, 1
      %p232 = scmp.eq.s32.totalorder %s26, 1
      %p233 = scmp.ne.s32.totalorder %s228, %s230
      %p234 = scmp.eq.s32.totalorder %s26, 0
      %p235 = por %p233, %p234
      %p236 = scmp.ne.s32.totalorder %s228, %s230
      %p237 = scmp.eq.s32.totalorder %s31, 1
      %p238 = por %p236, %p237
      %p239 = scmp.ne.s32.totalorder %s230, %s231
      %p240 = scmp.eq.s32.totalorder %s31, 0
      %p241 = por %p239, %p240
      %p242 = scmp.ne.s32.totalorder %s230, %s231
      %p243 = scmp.eq.s32.totalorder %s32, 1
      %p244 = por %p242, %p243
      %p246 = scmp.ne.s32.totalorder %s231, %s245
      %p247 = scmp.eq.s32.totalorder %s32, 0
      %p248 = por %p246, %p247
      %s250 = sadd.s32 %s249, 1
      %p253 = scmp.eq.s32.totalorder %s26, 1
      %p254 = scmp.ne.s32.totalorder %s249, %s251
      %p255 = scmp.eq.s32.totalorder %s26, 0
      %p256 = por %p254, %p255
      %p257 = scmp.ne.s32.totalorder %s249, %s251
      %p258 = scmp.eq.s32.totalorder %s31, 1
      %p259 = por %p257, %p258
      %p260 = scmp.ne.s32.totalorder %s251, %s252
      %p261 = scmp.eq.s32.totalorder %s31, 0
      %p262 = por %p260, %p261
      %p263 = scmp.ne.s32.totalorder %s251, %s252
      %p264 = scmp.eq.s32.totalorder %s32, 1
      %p265 = por %p263, %p264
      %p267 = scmp.ne.s32.totalorder %s252, %s266
      %p268 = scmp.eq.s32.totalorder %s32, 0
      %p269 = por %p267, %p268
      %s271 = sadd.s32 %s270, 1
      %p274 = scmp.eq.s32.totalorder %s26, 1
      %p275 = scmp.ne.s32.totalorder %s270, %s272
      %p276 = scmp.eq.s32.totalorder %s26, 0
      %p277 = por %p275, %p276
      %p278 = scmp.ne.s32.totalorder %s270, %s272
      %p279 = scmp.eq.s32.totalorder %s31, 1
      %p280 = por %p278, %p279
      %p281 = scmp.ne.s32.totalorder %s272, %s273
      %p282 = scmp.eq.s32.totalorder %s31, 0
      %p283 = por %p281, %p282
      %p284 = scmp.ne.s32.totalorder %s272, %s273
      %p285 = scmp.eq.s32.totalorder %s32, 1
      %p286 = por %p284, %p285
      %p288 = scmp.ne.s32.totalorder %s273, %s287
      %p289 = scmp.eq.s32.totalorder %s32, 0
      %p290 = por %p288, %p289
      %s292 = sadd.s32 %s291, 1
      %p295 = scmp.eq.s32.totalorder %s26, 1
      %p296 = scmp.ne.s32.totalorder %s291, %s293
      %p297 = scmp.eq.s32.totalorder %s26, 0
      %p298 = por %p296, %p297
      %p299 = scmp.ne.s32.totalorder %s291, %s293
      %p300 = scmp.eq.s32.totalorder %s31, 1
      %p301 = por %p299, %p300
      %p302 = scmp.ne.s32.totalorder %s293, %s294
      %p303 = scmp.eq.s32.totalorder %s31, 0
      %p304 = por %p302, %p303
      %p305 = scmp.ne.s32.totalorder %s293, %s294
      %p306 = scmp.eq.s32.totalorder %s32, 1
      %p307 = por %p305, %p306
      %p309 = scmp.ne.s32.totalorder %s294, %s308
      %p310 = scmp.eq.s32.totalorder %s32, 0
      %p311 = por %p309, %p310
      %s313 = sadd.s32 %s312, 1
      %p316 = scmp.eq.s32.totalorder %s26, 1
      %p317 = scmp.ne.s32.totalorder %s312, %s314
      %p318 = scmp.eq.s32.totalorder %s26, 0
      %p319 = por %p317, %p318
      %p320 = scmp.ne.s32.totalorder %s312, %s314
      %p321 = scmp.eq.s32.totalorder %s31, 1
      %p322 = por %p320, %p321
      %p323 = scmp.ne.s32.totalorder %s314, %s315
      %p324 = scmp.eq.s32.totalorder %s31, 0
      %p325 = por %p323, %p324
      %p326 = scmp.ne.s32.totalorder %s314, %s315
      %p327 = scmp.eq.s32.totalorder %s32, 1
      %p328 = por %p326, %p327
      %p330 = scmp.ne.s32.totalorder %s315, %s329
      %p331 = scmp.eq.s32.totalorder %s32, 0
      %p332 = por %p330, %p331
      %s334 = sadd.s32 %s333, 1
      %p337 = scmp.eq.s32.totalorder %s26, 1
      %p338 = scmp.ne.s32.totalorder %s333, %s335
      %p339 = scmp.eq.s32.totalorder %s26, 0
      %p340 = por %p338, %p339
      %p341 = scmp.ne.s32.totalorder %s333, %s335
      %p342 = scmp.eq.s32.totalorder %s31, 1
      %p343 = por %p341, %p342
      %p344 = scmp.ne.s32.totalorder %s335, %s336
      %p345 = scmp.eq.s32.totalorder %s31, 0
      %p346 = por %p344, %p345
      %p347 = scmp.ne.s32.totalorder %s335, %s336
      %p348 = scmp.eq.s32.totalorder %s32, 1
      %p349 = por %p347, %p348
      %p351 = scmp.ne.s32.totalorder %s336, %s350
      %p352 = scmp.eq.s32.totalorder %s32, 0
      %p353 = por %p351, %p352
      %s354 = ssub.s32 %s26, %s33
      %p355 = scmp.eq.s32.totalorder %s354, 0
      %s357 = sadd.s32 %s356, 1
      %s358 = scalar_select %p355, %s356, %s357
      %p361 = pneg %p355
      %p362 = scmp.eq.s32.totalorder %s26, 1
      %p363 = por %p361, %p362
      %p364 = scmp.ne.s32.totalorder %s356, %s359
      %p365 = scmp.eq.s32.totalorder %s26, 0
      %p366 = por %p364, %p365
      %p367 = scmp.ne.s32.totalorder %s356, %s359
      %p368 = scmp.eq.s32.totalorder %s31, 1
      %p369 = por %p367, %p368
      %p370 = scmp.ne.s32.totalorder %s359, %s360
      %p371 = scmp.eq.s32.totalorder %s31, 0
      %p372 = por %p370, %p371
      %p373 = scmp.ne.s32.totalorder %s359, %s360
      %p374 = scmp.eq.s32.totalorder %s32, 1
      %p375 = por %p373, %p374
      %p377 = scmp.ne.s32.totalorder %s360, %s376
      %p378 = scmp.eq.s32.totalorder %s32, 0
      %p379 = por %p377, %p378
      %p380 = scmp.le.s32.totalorder 1, %s26
      %p381 = scmp.lt.s32.totalorder %s26, 3
      %p382 = pnand %p380, %p381
      %p383 = pneg %p382
      // Predicated region
      $region9: #{res_ffn_forward.1} parent=5 // pred_check
        _
      $region10: #{res_ffn_forward.1} parent=5 // pred_check_branch
        %385 = sbr.rel (%p382) target = $region12
      $region11: #{res_ffn_forward.1} parent=5 // pred_region
        %s386 = ssub.s32 %s26, 1
        // Predicated region
        $region13: #{res_ffn_forward.1} parent=11 // pred_check
          %p387 = pneg %p73
        $region14: #{res_ffn_forward.1} parent=11 // pred_check_branch
          %389 = sbr.rel (%p387) target = $region16
        $region15: #{res_ffn_forward.1} parent=11 // pred_region
          _
        $region16: #{res_ffn_forward.1} parent=11 // pred_fallthru
          _
        // Predicated region
        $region17: #{res_ffn_forward.1} parent=11 // pred_check
          %p390 = pneg %p94
        $region18: #{res_ffn_forward.1} parent=11 // pred_check_branch
          %392 = sbr.rel (%p390) target = $region20
        $region19: #{res_ffn_forward.1} parent=11 // pred_region
          _
        $region20: #{res_ffn_forward.1} parent=11 // pred_fallthru
          _
        // Predicated region
        $region21: #{res_ffn_forward.1} parent=11 // pred_check
          %p393 = pneg %p115
        $region22: #{res_ffn_forward.1} parent=11 // pred_check_branch
          %395 = sbr.rel (%p393) target = $region24
        $region23: #{res_ffn_forward.1} parent=11 // pred_region
          _
        $region24: #{res_ffn_forward.1} parent=11 // pred_fallthru
          _
        // Predicated region
        $region25: #{res_ffn_forward.1} parent=11 // pred_check
          %p396 = pneg %p136
        $region26: #{res_ffn_forward.1} parent=11 // pred_check_branch
          %398 = sbr.rel (%p396) target = $region28
        $region27: #{res_ffn_forward.1} parent=11 // pred_region
          _
        $region28: #{res_ffn_forward.1} parent=11 // pred_fallthru
          _
        // Predicated region
        $region29: #{res_ffn_forward.1} parent=11 // pred_check
          %p399 = pneg %p157
        $region30: #{res_ffn_forward.1} parent=11 // pred_check_branch
          %401 = sbr.rel (%p399) target = $region32
        $region31: #{res_ffn_forward.1} parent=11 // pred_region
          _
        $region32: #{res_ffn_forward.1} parent=11 // pred_fallthru
          _
        // Predicated region
        $region33: #{res_ffn_forward.1} parent=11 // pred_check
          %p402 = pneg %p178
        $region34: #{res_ffn_forward.1} parent=11 // pred_check_branch
          %404 = sbr.rel (%p402) target = $region36
        $region35: #{res_ffn_forward.1} parent=11 // pred_region
          _
        $region36: #{res_ffn_forward.1} parent=11 // pred_fallthru
          _
        // Predicated region
        $region37: #{res_ffn_forward.1} parent=11 // pred_check
          %p405 = pneg %p199
        $region38: #{res_ffn_forward.1} parent=11 // pred_check_branch
          %407 = sbr.rel (%p405) target = $region40
        $region39: #{res_ffn_forward.1} parent=11 // pred_region
          _
        $region40: #{res_ffn_forward.1} parent=11 // pred_fallthru
          _
        // Predicated region
        $region41: #{res_ffn_forward.1} parent=11 // pred_check
          %p408 = pneg %p220
        $region42: #{res_ffn_forward.1} parent=11 // pred_check_branch
          %410 = sbr.rel (%p408) target = $region44
        $region43: #{res_ffn_forward.1} parent=11 // pred_region
          _
        $region44: #{res_ffn_forward.1} parent=11 // pred_fallthru
          _
        // Predicated region
        $region45: #{res_ffn_forward.1} parent=11 // pred_check
          %p411 = pneg %p241
        $region46: #{res_ffn_forward.1} parent=11 // pred_check_branch
          %413 = sbr.rel (%p411) target = $region48
        $region47: #{res_ffn_forward.1} parent=11 // pred_region
          _
        $region48: #{res_ffn_forward.1} parent=11 // pred_fallthru
          _
        // Predicated region
        $region49: #{res_ffn_forward.1} parent=11 // pred_check
          %p414 = pneg %p262
        $region50: #{res_ffn_forward.1} parent=11 // pred_check_branch
          %416 = sbr.rel (%p414) target = $region52
        $region51: #{res_ffn_forward.1} parent=11 // pred_region
          _
        $region52: #{res_ffn_forward.1} parent=11 // pred_fallthru
          _
        // Predicated region
        $region53: #{res_ffn_forward.1} parent=11 // pred_check
          %p417 = pneg %p283
        $region54: #{res_ffn_forward.1} parent=11 // pred_check_branch
          %419 = sbr.rel (%p417) target = $region56
        $region55: #{res_ffn_forward.1} parent=11 // pred_region
          _
        $region56: #{res_ffn_forward.1} parent=11 // pred_fallthru
          _
        // Predicated region
        $region57: #{res_ffn_forward.1} parent=11 // pred_check
          %p420 = pneg %p304
        $region58: #{res_ffn_forward.1} parent=11 // pred_check_branch
          %422 = sbr.rel (%p420) target = $region60
        $region59: #{res_ffn_forward.1} parent=11 // pred_region
          _
        $region60: #{res_ffn_forward.1} parent=11 // pred_fallthru
          _
        // Predicated region
        $region61: #{res_ffn_forward.1} parent=11 // pred_check
          %p423 = pneg %p325
        $region62: #{res_ffn_forward.1} parent=11 // pred_check_branch
          %425 = sbr.rel (%p423) target = $region64
        $region63: #{res_ffn_forward.1} parent=11 // pred_region
          _
        $region64: #{res_ffn_forward.1} parent=11 // pred_fallthru
          _
        // Predicated region
        $region65: #{res_ffn_forward.1} parent=11 // pred_check
          %p426 = pneg %p346
        $region66: #{res_ffn_forward.1} parent=11 // pred_check_branch
          %428 = sbr.rel (%p426) target = $region68
        $region67: #{res_ffn_forward.1} parent=11 // pred_region
          _
        $region68: #{res_ffn_forward.1} parent=11 // pred_fallthru
          _
      $region12: #{res_ffn_forward.1} parent=5 // pred_fallthru
        _
      %p429 = scmp.lt.s32.totalorder %s26, 2
      // Predicated region
      $region69: #{res_ffn_forward.1} parent=5 // pred_check
        %p430 = pneg %p429
      $region70: #{res_ffn_forward.1} parent=5 // pred_check_branch
        %432 = sbr.rel (%p430) target = $region72
      $region71: #{res_ffn_forward.1} parent=5 // pred_region
        // Predicated region
        $region73: #{res_ffn_forward.1} parent=71 // pred_check
          %p433 = pneg %p46
        $region74: #{res_ffn_forward.1} parent=71 // pred_check_branch
          %435 = sbr.rel (%p433) target = $region76
        $region75: #{res_ffn_forward.1} parent=71 // pred_region
          %s436 = smul.u32 16, %s26
          %p437 = scmp.lt.s32.totalorder %s436, 31
          %s438 = scalar_select %p437, %s436, 31
          %s439 = smul.addr %s438, 8
          %s440 = scalar_lea.vmem %s0, %s439
          %s441 = smul.u32 16, %s26
        $region76: #{res_ffn_forward.1} parent=71 // pred_fallthru
          _
      $region72: #{res_ffn_forward.1} parent=5 // pred_fallthru
        _
      %p442 = scmp.le.s32.totalorder 1, %s26
      %p443 = scmp.lt.s32.totalorder %s26, 3
      %p444 = pnand %p442, %p443
      %p445 = pneg %p444
      // Predicated region
      $region77: #{res_ffn_forward.1} parent=5 // pred_check
        _
      $region78: #{res_ffn_forward.1} parent=5 // pred_check_branch
        %447 = sbr.rel (%p444) target = $region80
      $region79: #{res_ffn_forward.1} parent=5 // pred_region
        %s448 = ssub.s32 %s26, 1
        %s449 = smul.u32 16, %s31
        %p450 = scmp.lt.s32.totalorder %s449, 31
        %s451 = scalar_select %p450, %s449, 31
        %s452 = smul.addr %s451, 8
        %s453 = scalar_lea.vmem %s0, %s452
        %p454 = pneg %p52
        %p455 = pneg %p49
        %p456 = pneg %p73
        %p457 = pneg %p70
        %p458 = pneg %p94
        %p459 = pneg %p91
        %p460 = pneg %p115
        %p461 = pneg %p112
        %p462 = pneg %p136
        %p463 = pneg %p133
        %p464 = pneg %p157
        %p465 = pneg %p154
        %p466 = pneg %p178
        %p467 = pneg %p175
        %p468 = pneg %p199
        %p469 = pneg %p196
        %p470 = pneg %p220
        %p471 = pneg %p217
        %p472 = pneg %p241
        %p473 = pneg %p238
        %p474 = pneg %p262
        %p475 = pneg %p259
        %p476 = pneg %p283
        %p477 = pneg %p280
        %p478 = pneg %p304
        %p479 = pneg %p301
        %p480 = pneg %p325
        %p481 = pneg %p322
        %p482 = pneg %p346
        %p483 = pneg %p343
        %p484 = pneg %p372
        %p485 = pneg %p369
        %s486 = sand.u32 %s359, 1
        %s487 = scalar_lea.sflag [#allocation4], %s486
        %s488 = sand.u32 %s359, 1
        %s489 = scalar_lea.vmem [#allocation3], %s488
        %s490 = smul.u32 16, %s31
        %p491 = scmp.lt.s32.totalorder %s490, 31
        %s492 = scalar_select %p491, %s490, 31
        %s493 = smul.addr %s492, 8
        %s494 = scalar_lea.vmem %s0, %s493
        %s495 = smul.u32 16, %s31
        %v497 = vld [vmem:[%s494] sm:$0xff]
        %v498 = vld [vmem:[%s494 + $0x8] sm:$0xff]
        %v499 = vld [vmem:[%s494 + $0x10] sm:$0xff]
        %v500 = vld [vmem:[%s494 + $0x18] sm:$0xff]
        %v501 = vld [vmem:[%s494 + $0x20] sm:$0xff]
        %v502 = vld [vmem:[%s494 + $0x28] sm:$0xff]
        %v503 = vld [vmem:[%s494 + $0x30] sm:$0xff]
        %v504 = vld [vmem:[%s494 + $0x38] sm:$0xff]
        %v505 = vld [vmem:[%s494 + $0x40] sm:$0xff]
        %v506 = vld [vmem:[%s494 + $0x48] sm:$0xff]
        %v507 = vld [vmem:[%s494 + $0x50] sm:$0xff]
        %v508 = vld [vmem:[%s494 + $0x58] sm:$0xff]
        %v509 = vld [vmem:[%s494 + $0x60] sm:$0xff]
        %v510 = vld [vmem:[%s494 + $0x68] sm:$0xff]
        %v511 = vld [vmem:[%s494 + $0x70] sm:$0xff]
        %v512 = vld [vmem:[%s494 + $0x78] sm:$0xff]
        %v513 = vpack.c.bf16 %v498, %v497
        %v514 = vpack.c.bf16 %v500, %v499
        %v515 = vpack.c.bf16 %v502, %v501
        %v516 = vpack.c.bf16 %v504, %v503
        %v517 = vpack.c.bf16 %v506, %v505
        %v518 = vpack.c.bf16 %v508, %v507
        %v519 = vpack.c.bf16 %v510, %v509
        %v520 = vpack.c.bf16 %v512, %v511
        %v521 = vld [vmem:[%s1] sm:$0xf]
        %v522 = vld [vmem:[%s1 + $0x4] sm:$0xf]
        %v523 = vld [vmem:[%s2] sm:$0x1]
        %v525 = vlaneseq
        %v526 = vshrl.u32 %v525, 7
        %v527 = vsub.s32 0, %v526
        %v528 = vrot.slane %v523, %v527
        %v532 = vunpack.c.l.b16 %v521
        %v533 = vunpack.c.l.b16 %v522
        %v534 = vpack.c.b16 %v533, %v532
        %vm536 = vcmask 130048
        %v538 = vsel %vm536, %v513, 0
        %v541 = vsel %vm536, %v514, 0
        %v544 = vsel %vm536, %v515, 0
        %v547 = vsel %vm536, %v516, 0
        %v550 = vsel %vm536, %v517, 0
        %v553 = vsel %vm536, %v518, 0
        %v556 = vsel %vm536, %v519, 0
        %v559 = vsel %vm536, %v520, 0
        %561 = vmatprep.subr.bf16.mxu0 0
        %562 = vmatpush1.bf16.msra.mxu0 %v534
        %563 = vmatprep.subr.bf16.mxu0 0
        %564 = vmatpush1.bf16.msra.mxu0 0
        %565 = vmatprep.subr.bf16.mxu0 0
        %566 = vmatpush1.bf16.msra.mxu0 0
        %567 = vmatprep.subr.bf16.mxu0 0
        %568 = vmatpush1.bf16.msra.mxu0 0
        %569 = vmatprep.subr.bf16.mxu0 0
        %570 = vmatpush1.bf16.msra.mxu0 0
        %571 = vmatprep.subr.bf16.mxu0 0
        %572 = vmatpush1.bf16.msra.mxu0 0
        %573 = vmatprep.subr.bf16.mxu0 0
        %574 = vmatpush1.bf16.msra.mxu0 0
        %575 = vmatprep.subr.bf16.mxu0 0
        %576 = vmatpush1.bf16.msra.mxu0 0
        %577 = vmatprep.subr.bf16.mxu0 0
        %578 = vmatpush1.bf16.msra.mxu0 0
        %579 = vmatprep.subr.bf16.mxu0 0
        %580 = vmatpush1.bf16.msra.mxu0 0
        %581 = vmatprep.subr.bf16.mxu0 0
        %582 = vmatpush1.bf16.msra.mxu0 0
        %583 = vmatprep.subr.bf16.mxu0 0
        %584 = vmatpush1.bf16.msra.mxu0 0
        %585 = vmatprep.subr.bf16.mxu0 0
        %586 = vmatpush1.bf16.msra.mxu0 0
        %587 = vmatprep.subr.bf16.mxu0 0
        %588 = vmatpush1.bf16.msra.mxu0 0
        %589 = vmatprep.subr.bf16.mxu0 0
        %590 = vmatpush1.bf16.msra.mxu0 0
        %591 = vmatprep.subr.bf16.mxu0 0
        %592 = vmatpush1.bf16.msra.mxu0 0
        %593 = vmatprep.mubr.bf16.mxu0 0
        %594 = vmatmul.mubr.bf16.gmra.mrb[0].mxu0 %v538
        %v595 = vpop.f32.mrb[0].mxu0
        %v596 = vadd.f32 %v528, %v595
        %v597 = vpop.f32.mrb[0].mxu0
        %v598 = vpop.f32.mrb[0].mxu0
        %v599 = vadd.f32 %v528, %v598
        %v600 = vpop.f32.mrb[0].mxu0
        %601 = vmatprep.mubr.bf16.mxu0 0
        %602 = vmatmul.mubr.bf16.gmra.mrb[0].mxu0 %v541
        %v603 = vpop.f32.mrb[0].mxu0
        %v604 = vadd.f32 %v528, %v603
        %v605 = vpop.f32.mrb[0].mxu0
        %v606 = vpop.f32.mrb[0].mxu0
        %v607 = vadd.f32 %v528, %v606
        %v608 = vpop.f32.mrb[0].mxu0
        %609 = vmatprep.mubr.bf16.mxu0 0
        %610 = vmatmul.mubr.bf16.gmra.mrb[0].mxu0 %v544
        %v611 = vpop.f32.mrb[0].mxu0
        %v612 = vadd.f32 %v528, %v611
        %v613 = vpop.f32.mrb[0].mxu0
        %v614 = vpop.f32.mrb[0].mxu0
        %v615 = vadd.f32 %v528, %v614
        %v616 = vpop.f32.mrb[0].mxu0
        %617 = vmatprep.mubr.bf16.mxu0 0
        %618 = vmatmul.mubr.bf16.gmra.mrb[0].mxu0 %v547
        %v619 = vpop.f32.mrb[0].mxu0
        %v620 = vadd.f32 %v528, %v619
        %v621 = vpop.f32.mrb[0].mxu0
        %v622 = vpop.f32.mrb[0].mxu0
        %v623 = vadd.f32 %v528, %v622
        %v624 = vpop.f32.mrb[0].mxu0
        %625 = vmatprep.mubr.bf16.mxu0 0
        %626 = vmatmul.mubr.bf16.gmra.mrb[0].mxu0 %v550
        %v627 = vpop.f32.mrb[0].mxu0
        %v628 = vadd.f32 %v528, %v627
        %v629 = vpop.f32.mrb[0].mxu0
        %v630 = vpop.f32.mrb[0].mxu0
        %v631 = vadd.f32 %v528, %v630
        %v632 = vpop.f32.mrb[0].mxu0
        %633 = vmatprep.mubr.bf16.mxu0 0
        %634 = vmatmul.mubr.bf16.gmra.mrb[0].mxu0 %v553
        %v635 = vpop.f32.mrb[0].mxu0
        %v636 = vadd.f32 %v528, %v635
        %v637 = vpop.f32.mrb[0].mxu0
        %v638 = vpop.f32.mrb[0].mxu0
        %v639 = vadd.f32 %v528, %v638
        %v640 = vpop.f32.mrb[0].mxu0
        %641 = vmatprep.mubr.bf16.mxu0 0
        %642 = vmatmul.mubr.bf16.gmra.mrb[0].mxu0 %v556
        %v643 = vpop.f32.mrb[0].mxu0
        %v644 = vadd.f32 %v528, %v643
        %v645 = vpop.f32.mrb[0].mxu0
        %v646 = vpop.f32.mrb[0].mxu0
        %v647 = vadd.f32 %v528, %v646
        %v648 = vpop.f32.mrb[0].mxu0
        %649 = vmatprep.mubr.bf16.mxu0 0
        %650 = vmatmul.mubr.bf16.gmra.mrb[0].mxu0 %v559
        %v651 = vpop.f32.mrb[0].mxu0
        %v652 = vadd.f32 %v528, %v651
        %v653 = vpop.f32.mrb[0].mxu0
        %v654 = vpop.f32.mrb[0].mxu0
        %v655 = vadd.f32 %v528, %v654
        %v656 = vpop.f32.mrb[0].mxu0
        %657 = vdwg.mxu0
        %v658 = vpack.c.bf16 %v599, %v596
        %v659 = vpack.c.bf16 %v607, %v604
        %v660 = vpack.c.bf16 %v615, %v612
        %v661 = vpack.c.bf16 %v623, %v620
        %v662 = vpack.c.bf16 %v631, %v628
        %v663 = vpack.c.bf16 %v639, %v636
        %v664 = vpack.c.bf16 %v647, %v644
        %v665 = vpack.c.bf16 %v655, %v652
        %v666 = vld [vmem:[%s3] sm:$0xf]
        %v667 = vld [vmem:[%s3 + $0x4] sm:$0xf]
        %v668 = vld [vmem:[%s3 + $0x8] sm:$0xf]
        %v669 = vld [vmem:[%s3 + $0xc] sm:$0xf]
        %v670 = vld [vmem:[%s3 + $0x10] sm:$0xf]
        %v671 = vld [vmem:[%s3 + $0x14] sm:$0xf]
        %v672 = vld [vmem:[%s3 + $0x18] sm:$0xf]
        %v673 = vld [vmem:[%s3 + $0x1c] sm:$0xf]
        %v674 = vld [vmem:[%s3 + $0x20] sm:$0xf]
        %v675 = vld [vmem:[%s3 + $0x24] sm:$0xf]
        %v676 = vld [vmem:[%s3 + $0x28] sm:$0xf]
        %v677 = vld [vmem:[%s3 + $0x2c] sm:$0xf]
        %v678 = vld [vmem:[%s3 + $0x30] sm:$0xf]
        %v679 = vld [vmem:[%s3 + $0x34] sm:$0xf]
        %v680 = vld [vmem:[%s3 + $0x38] sm:$0xf]
        %v681 = vld [vmem:[%s3 + $0x3c] sm:$0xf]
        %v682 = vld [vmem:[%s4] sm:$0x7]
        %v683 = vld [vmem:[%s5] sm:$0xf]
        %v684 = vld [vmem:[%s5 + $0x4] sm:$0xf]
        %v685 = vld [vmem:[%s5 + $0x8] sm:$0xf]
        %v686 = vld [vmem:[%s5 + $0xc] sm:$0xf]
        %v687 = vld [vmem:[%s5 + $0x10] sm:$0xf]
        %v688 = vld [vmem:[%s5 + $0x14] sm:$0xf]
        %v689 = vld [vmem:[%s5 + $0x18] sm:$0xf]
        %v690 = vld [vmem:[%s5 + $0x1c] sm:$0xf]
        %v691 = vld [vmem:[%s5 + $0x20] sm:$0xf]
        %v692 = vld [vmem:[%s5 + $0x24] sm:$0xf]
        %v693 = vld [vmem:[%s5 + $0x28] sm:$0xf]
        %v694 = vld [vmem:[%s5 + $0x2c] sm:$0xf]
        %v695 = vld [vmem:[%s5 + $0x30] sm:$0xf]
        %v696 = vld [vmem:[%s5 + $0x34] sm:$0xf]
        %v697 = vld [vmem:[%s5 + $0x38] sm:$0xf]
        %v698 = vld [vmem:[%s5 + $0x3c] sm:$0xf]
        %v699 = vld [vmem:[%s6] sm:$0x7]
        %v700 = vlaneseq
        %v701 = vshrl.u32 %v700, 7
        %v702 = vsub.s32 0, %v701
        %v703 = vrot.slane %v682, %v702
        %v720 = vunpack.c.l.b16 %v666
        %v721 = vunpack.c.l.b16 %v667
        %v722 = vunpack.c.l.b16 %v668
        %v723 = vunpack.c.l.b16 %v669
        %v724 = vunpack.c.l.b16 %v670
        %v725 = vunpack.c.l.b16 %v671
        %v726 = vunpack.c.l.b16 %v672
        %v727 = vunpack.c.l.b16 %v673
        %v728 = vunpack.c.l.b16 %v674
        %v729 = vunpack.c.l.b16 %v675
        %v730 = vunpack.c.l.b16 %v676
        %v731 = vunpack.c.l.b16 %v677
        %v732 = vunpack.c.l.b16 %v678
        %v733 = vunpack.c.l.b16 %v679
        %v734 = vunpack.c.l.b16 %v680
        %v735 = vunpack.c.l.b16 %v681
        %v736 = vpack.c.b16 %v721, %v720
        %v737 = vpack.c.b16 %v723, %v722
        %v738 = vpack.c.b16 %v725, %v724
        %v739 = vpack.c.b16 %v727, %v726
        %v740 = vpack.c.b16 %v729, %v728
        %v741 = vpack.c.b16 %v731, %v730
        %v742 = vpack.c.b16 %v733, %v732
        %v743 = vpack.c.b16 %v735, %v734
        %752 = vmatprep.subr.bf16.mxu0 0
        %753 = vmatpush1.bf16.msra.mxu0 %v736
        %754 = vmatprep.subr.bf16.mxu0 0
        %755 = vmatpush1.bf16.msra.mxu0 %v737
        %756 = vmatprep.subr.bf16.mxu0 0
        %757 = vmatpush1.bf16.msra.mxu0 %v738
        %758 = vmatprep.subr.bf16.mxu0 0
        %759 = vmatpush1.bf16.msra.mxu0 %v739
        %760 = vmatprep.subr.bf16.mxu0 0
        %761 = vmatpush1.bf16.msra.mxu0 %v740
        %762 = vmatprep.subr.bf16.mxu0 0
        %763 = vmatpush1.bf16.msra.mxu0 %v741
        %764 = vmatprep.subr.bf16.mxu0 0
        %765 = vmatpush1.bf16.msra.mxu0 %v742
        %766 = vmatprep.subr.bf16.mxu0 0
        %767 = vmatpush1.bf16.msra.mxu0 %v743
        %768 = vmatprep.subr.bf16.mxu0 0
        %769 = vmatpush1.bf16.msra.mxu0 0
        %770 = vmatprep.subr.bf16.mxu0 0
        %771 = vmatpush1.bf16.msra.mxu0 0
        %772 = vmatprep.subr.bf16.mxu0 0
        %773 = vmatpush1.bf16.msra.mxu0 0
        %774 = vmatprep.subr.bf16.mxu0 0
        %775 = vmatpush1.bf16.msra.mxu0 0
        %776 = vmatprep.subr.bf16.mxu0 0
        %777 = vmatpush1.bf16.msra.mxu0 0
        %778 = vmatprep.subr.bf16.mxu0 0
        %779 = vmatpush1.bf16.msra.mxu0 0
        %780 = vmatprep.subr.bf16.mxu0 0
        %781 = vmatpush1.bf16.msra.mxu0 0
        %782 = vmatprep.subr.bf16.mxu0 0
        %783 = vmatpush1.bf16.msra.mxu0 0
        %784 = vmatprep.mubr.bf16.mxu0 0
        %785 = vmatmul.mubr.bf16.gmra.mrb[0].mxu0 %v658
        %v786 = vpop.f32.mrb[0].mxu0
        %v787 = vadd.f32 %v703, %v786
        %v788 = vpop.f32.mrb[0].mxu0
        %v789 = vpop.f32.mrb[0].mxu0
        %v790 = vadd.f32 %v703, %v789
        %v791 = vpop.f32.mrb[0].mxu0
        %792 = vmatprep.mubr.bf16.mxu0 0
        %793 = vmatmul.mubr.bf16.gmra.mrb[0].mxu0 %v659
        %v794 = vpop.f32.mrb[0].mxu0
        %v795 = vadd.f32 %v703, %v794
        %v796 = vpop.f32.mrb[0].mxu0
        %v797 = vpop.f32.mrb[0].mxu0
        %v798 = vadd.f32 %v703, %v797
        %v799 = vpop.f32.mrb[0].mxu0
        %800 = vmatprep.mubr.bf16.mxu0 0
        %801 = vmatmul.mubr.bf16.gmra.mrb[0].mxu0 %v660
        %v802 = vpop.f32.mrb[0].mxu0
        %v803 = vadd.f32 %v703, %v802
        %v804 = vpop.f32.mrb[0].mxu0
        %v805 = vpop.f32.mrb[0].mxu0
        %v806 = vadd.f32 %v703, %v805
        %v807 = vpop.f32.mrb[0].mxu0
        %808 = vmatprep.mubr.bf16.mxu0 0
        %809 = vmatmul.mubr.bf16.gmra.mrb[0].mxu0 %v661
        %v810 = vpop.f32.mrb[0].mxu0
        %v811 = vadd.f32 %v703, %v810
        %v812 = vpop.f32.mrb[0].mxu0
        %v813 = vpop.f32.mrb[0].mxu0
        %v814 = vadd.f32 %v703, %v813
        %v815 = vpop.f32.mrb[0].mxu0
        %816 = vmatprep.mubr.bf16.mxu0 0
        %817 = vmatmul.mubr.bf16.gmra.mrb[0].mxu0 %v662
        %v818 = vpop.f32.mrb[0].mxu0
        %v819 = vadd.f32 %v703, %v818
        %v820 = vpop.f32.mrb[0].mxu0
        %v821 = vpop.f32.mrb[0].mxu0
        %v822 = vadd.f32 %v703, %v821
        %v823 = vpop.f32.mrb[0].mxu0
        %824 = vmatprep.mubr.bf16.mxu0 0
        %825 = vmatmul.mubr.bf16.gmra.mrb[0].mxu0 %v663
        %v826 = vpop.f32.mrb[0].mxu0
        %v827 = vadd.f32 %v703, %v826
        %v828 = vpop.f32.mrb[0].mxu0
        %v829 = vpop.f32.mrb[0].mxu0
        %v830 = vadd.f32 %v703, %v829
        %v831 = vpop.f32.mrb[0].mxu0
        %832 = vmatprep.mubr.bf16.mxu0 0
        %833 = vmatmul.mubr.bf16.gmra.mrb[0].mxu0 %v664
        %v834 = vpop.f32.mrb[0].mxu0
        %v835 = vadd.f32 %v703, %v834
        %v836 = vpop.f32.mrb[0].mxu0
        %v837 = vpop.f32.mrb[0].mxu0
        %v838 = vadd.f32 %v703, %v837
        %v839 = vpop.f32.mrb[0].mxu0
        %840 = vmatprep.mubr.bf16.mxu0 0
        %841 = vmatmul.mubr.bf16.gmra.mrb[0].mxu0 %v665
        %v842 = vpop.f32.mrb[0].mxu0
        %v843 = vadd.f32 %v703, %v842
        %v844 = vpop.f32.mrb[0].mxu0
        %v845 = vpop.f32.mrb[0].mxu0
        %v846 = vadd.f32 %v703, %v845
        %v847 = vpop.f32.mrb[0].mxu0
        %848 = vdwg.mxu0
        %849 = vadd.xlane.f32.xlu0 %v787
        %v850 = vpop.xlane.xlu0 %849
        %851 = vadd.xlane.f32.xlu0 %v790
        %v852 = vpop.xlane.xlu0 %851
        %853 = vadd.xlane.f32.xlu0 %v795
        %v854 = vpop.xlane.xlu0 %853
        %855 = vadd.xlane.f32.xlu0 %v798
        %v856 = vpop.xlane.xlu0 %855
        %857 = vadd.xlane.f32.xlu0 %v803
        %v858 = vpop.xlane.xlu0 %857
        %859 = vadd.xlane.f32.xlu0 %v806
        %v860 = vpop.xlane.xlu0 %859
        %861 = vadd.xlane.f32.xlu0 %v811
        %v862 = vpop.xlane.xlu0 %861
        %863 = vadd.xlane.f32.xlu0 %v814
        %v864 = vpop.xlane.xlu0 %863
        %865 = vadd.xlane.f32.xlu0 %v819
        %v866 = vpop.xlane.xlu0 %865
        %867 = vadd.xlane.f32.xlu0 %v822
        %v868 = vpop.xlane.xlu0 %867
        %869 = vadd.xlane.f32.xlu0 %v827
        %v870 = vpop.xlane.xlu0 %869
        %871 = vadd.xlane.f32.xlu0 %v830
        %v872 = vpop.xlane.xlu0 %871
        %873 = vadd.xlane.f32.xlu0 %v835
        %v874 = vpop.xlane.xlu0 %873
        %875 = vadd.xlane.f32.xlu0 %v838
        %v876 = vpop.xlane.xlu0 %875
        %877 = vadd.xlane.f32.xlu0 %v843
        %v878 = vpop.xlane.xlu0 %877
        %879 = vadd.xlane.f32.xlu0 %v846
        %v880 = vpop.xlane.xlu0 %879
        %v881 = vrcp.pop 128.0
        %v882 = vmul.f32 %v850, %v881
        %v883 = vmul.f32 %v852, %v881
        %v884 = vmul.f32 %v854, %v881
        %v885 = vmul.f32 %v856, %v881
        %v886 = vmul.f32 %v858, %v881
        %v887 = vmul.f32 %v860, %v881
        %v888 = vmul.f32 %v862, %v881
        %v889 = vmul.f32 %v864, %v881
        %v890 = vmul.f32 %v866, %v881
        %v891 = vmul.f32 %v868, %v881
        %v892 = vmul.f32 %v870, %v881
        %v893 = vmul.f32 %v872, %v881
        %v894 = vmul.f32 %v874, %v881
        %v895 = vmul.f32 %v876, %v881
        %v896 = vmul.f32 %v878, %v881
        %v897 = vmul.f32 %v880, %v881
        %v898 = vsub.f32 %v787, %v882
        %v899 = vsub.f32 %v790, %v883
        %v900 = vsub.f32 %v795, %v884
        %v901 = vsub.f32 %v798, %v885
        %v902 = vsub.f32 %v803, %v886
        %v903 = vsub.f32 %v806, %v887
        %v904 = vsub.f32 %v811, %v888
        %v905 = vsub.f32 %v814, %v889
        %v906 = vsub.f32 %v819, %v890
        %v907 = vsub.f32 %v822, %v891
        %v908 = vsub.f32 %v827, %v892
        %v909 = vsub.f32 %v830, %v893
        %v910 = vsub.f32 %v835, %v894
        %v911 = vsub.f32 %v838, %v895
        %v912 = vsub.f32 %v843, %v896
        %v913 = vsub.f32 %v846, %v897
        %v914 = vmul.f32 %v898, %v898
        %v915 = vmul.f32 %v899, %v899
        %v916 = vmul.f32 %v900, %v900
        %v917 = vmul.f32 %v901, %v901
        %v918 = vmul.f32 %v902, %v902
        %v919 = vmul.f32 %v903, %v903
        %v920 = vmul.f32 %v904, %v904
        %v921 = vmul.f32 %v905, %v905
        %v922 = vmul.f32 %v906, %v906
        %v923 = vmul.f32 %v907, %v907
        %v924 = vmul.f32 %v908, %v908
        %v925 = vmul.f32 %v909, %v909
        %v926 = vmul.f32 %v910, %v910
        %v927 = vmul.f32 %v911, %v911
        %v928 = vmul.f32 %v912, %v912
        %v929 = vmul.f32 %v913, %v913
        %930 = vadd.xlane.f32.xlu0 %v914
        %v931 = vpop.xlane.xlu0 %930
        %932 = vadd.xlane.f32.xlu0 %v915
        %v933 = vpop.xlane.xlu0 %932
        %934 = vadd.xlane.f32.xlu0 %v916
        %v935 = vpop.xlane.xlu0 %934
        %936 = vadd.xlane.f32.xlu0 %v917
        %v937 = vpop.xlane.xlu0 %936
        %938 = vadd.xlane.f32.xlu0 %v918
        %v939 = vpop.xlane.xlu0 %938
        %940 = vadd.xlane.f32.xlu0 %v919
        %v941 = vpop.xlane.xlu0 %940
        %942 = vadd.xlane.f32.xlu0 %v920
        %v943 = vpop.xlane.xlu0 %942
        %944 = vadd.xlane.f32.xlu0 %v921
        %v945 = vpop.xlane.xlu0 %944
        %946 = vadd.xlane.f32.xlu0 %v922
        %v947 = vpop.xlane.xlu0 %946
        %948 = vadd.xlane.f32.xlu0 %v923
        %v949 = vpop.xlane.xlu0 %948
        %950 = vadd.xlane.f32.xlu0 %v924
        %v951 = vpop.xlane.xlu0 %950
        %952 = vadd.xlane.f32.xlu0 %v925
        %v953 = vpop.xlane.xlu0 %952
        %954 = vadd.xlane.f32.xlu0 %v926
        %v955 = vpop.xlane.xlu0 %954
        %956 = vadd.xlane.f32.xlu0 %v927
        %v957 = vpop.xlane.xlu0 %956
        %958 = vadd.xlane.f32.xlu0 %v928
        %v959 = vpop.xlane.xlu0 %958
        %960 = vadd.xlane.f32.xlu0 %v929
        %v961 = vpop.xlane.xlu0 %960
        %v962 = vmul.f32 %v931, %v881
        %v963 = vmul.f32 %v933, %v881
        %v964 = vmul.f32 %v935, %v881
        %v965 = vmul.f32 %v937, %v881
        %v966 = vmul.f32 %v939, %v881
        %v967 = vmul.f32 %v941, %v881
        %v968 = vmul.f32 %v943, %v881
        %v969 = vmul.f32 %v945, %v881
        %v970 = vmul.f32 %v947, %v881
        %v971 = vmul.f32 %v949, %v881
        %v972 = vmul.f32 %v951, %v881
        %v973 = vmul.f32 %v953, %v881
        %v974 = vmul.f32 %v955, %v881
        %v975 = vmul.f32 %v957, %v881
        %v976 = vmul.f32 %v959, %v881
        %v977 = vmul.f32 %v961, %v881
        %v978 = vadd.f32 %v962, 1e-05
        %v979 = vadd.f32 %v963, 1e-05
        %v980 = vadd.f32 %v964, 1e-05
        %v981 = vadd.f32 %v965, 1e-05
        %v982 = vadd.f32 %v966, 1e-05
        %v983 = vadd.f32 %v967, 1e-05
        %v984 = vadd.f32 %v968, 1e-05
        %v985 = vadd.f32 %v969, 1e-05
        %v986 = vadd.f32 %v970, 1e-05
        %v987 = vadd.f32 %v971, 1e-05
        %v988 = vadd.f32 %v972, 1e-05
        %v989 = vadd.f32 %v973, 1e-05
        %v990 = vadd.f32 %v974, 1e-05
        %v991 = vadd.f32 %v975, 1e-05
        %v992 = vadd.f32 %v976, 1e-05
        %v993 = vadd.f32 %v977, 1e-05
        %v994 = vrsqrt.pop %v978
        %v995 = vrsqrt.pop %v979
        %v996 = vrsqrt.pop %v980
        %v997 = vrsqrt.pop %v981
        %v998 = vrsqrt.pop %v982
        %v999 = vrsqrt.pop %v983
        %v1000 = vrsqrt.pop %v984
        %v1001 = vrsqrt.pop %v985
        %v1002 = vrsqrt.pop %v986
        %v1003 = vrsqrt.pop %v987
        %v1004 = vrsqrt.pop %v988
        %v1005 = vrsqrt.pop %v989
        %v1006 = vrsqrt.pop %v990
        %v1007 = vrsqrt.pop %v991
        %v1008 = vrsqrt.pop %v992
        %v1009 = vrsqrt.pop %v993
        %v1010 = vmul.f32 %v898, %v994
        %v1011 = vmul.f32 %v899, %v995
        %v1012 = vmul.f32 %v900, %v996
        %v1013 = vmul.f32 %v901, %v997
        %v1014 = vmul.f32 %v902, %v998
        %v1015 = vmul.f32 %v903, %v999
        %v1016 = vmul.f32 %v904, %v1000
        %v1017 = vmul.f32 %v905, %v1001
        %v1018 = vmul.f32 %v906, %v1002
        %v1019 = vmul.f32 %v907, %v1003
        %v1020 = vmul.f32 %v908, %v1004
        %v1021 = vmul.f32 %v909, %v1005
        %v1022 = vmul.f32 %v910, %v1006
        %v1023 = vmul.f32 %v911, %v1007
        %v1024 = vmul.f32 %v912, %v1008
        %v1025 = vmul.f32 %v913, %v1009
        %v1026 = vlaneseq
        %v1027 = vshrl.u32 %v1026, 7
        %v1028 = vsub.s32 1, %v1027
        %v1029 = vrot.slane %v682, %v1028
        %v1030 = vmul.f32 %v1010, %v1029
        %v1031 = vmul.f32 %v1011, %v1029
        %v1032 = vmul.f32 %v1012, %v1029
        %v1033 = vmul.f32 %v1013, %v1029
        %v1034 = vmul.f32 %v1014, %v1029
        %v1035 = vmul.f32 %v1015, %v1029
        %v1036 = vmul.f32 %v1016, %v1029
        %v1037 = vmul.f32 %v1017, %v1029
        %v1038 = vmul.f32 %v1018, %v1029
        %v1039 = vmul.f32 %v1019, %v1029
        %v1040 = vmul.f32 %v1020, %v1029
        %v1041 = vmul.f32 %v1021, %v1029
        %v1042 = vmul.f32 %v1022, %v1029
        %v1043 = vmul.f32 %v1023, %v1029
        %v1044 = vmul.f32 %v1024, %v1029
        %v1045 = vmul.f32 %v1025, %v1029
        %v1046 = vlaneseq
        %v1047 = vshrl.u32 %v1046, 7
        %v1048 = vsub.s32 2, %v1047
        %v1049 = vrot.slane %v682, %v1048
        %v1050 = vadd.f32 %v1030, %v1049
        %v1051 = vadd.f32 %v1031, %v1049
        %v1052 = vadd.f32 %v1032, %v1049
        %v1053 = vadd.f32 %v1033, %v1049
        %v1054 = vadd.f32 %v1034, %v1049
        %v1055 = vadd.f32 %v1035, %v1049
        %v1056 = vadd.f32 %v1036, %v1049
        %v1057 = vadd.f32 %v1037, %v1049
        %v1058 = vadd.f32 %v1038, %v1049
        %v1059 = vadd.f32 %v1039, %v1049
        %v1060 = vadd.f32 %v1040, %v1049
        %v1061 = vadd.f32 %v1041, %v1049
        %v1062 = vadd.f32 %v1042, %v1049
        %v1063 = vadd.f32 %v1043, %v1049
        %v1064 = vadd.f32 %v1044, %v1049
        %v1065 = vadd.f32 %v1045, %v1049
        %v1066 = vmax.f32 %v1050, 0.0
        %v1067 = vmax.f32 %v1051, 0.0
        %v1068 = vmax.f32 %v1052, 0.0
        %v1069 = vmax.f32 %v1053, 0.0
        %v1070 = vmax.f32 %v1054, 0.0
        %v1071 = vmax.f32 %v1055, 0.0
        %v1072 = vmax.f32 %v1056, 0.0
        %v1073 = vmax.f32 %v1057, 0.0
        %v1074 = vmax.f32 %v1058, 0.0
        %v1075 = vmax.f32 %v1059, 0.0
        %v1076 = vmax.f32 %v1060, 0.0
        %v1077 = vmax.f32 %v1061, 0.0
        %v1078 = vmax.f32 %v1062, 0.0
        %v1079 = vmax.f32 %v1063, 0.0
        %v1080 = vmax.f32 %v1064, 0.0
        %v1081 = vmax.f32 %v1065, 0.0
        %v1082 = vpack.c.bf16 %v1067, %v1066
        %v1083 = vpack.c.bf16 %v1069, %v1068
        %v1084 = vpack.c.bf16 %v1071, %v1070
        %v1085 = vpack.c.bf16 %v1073, %v1072
        %v1086 = vpack.c.bf16 %v1075, %v1074
        %v1087 = vpack.c.bf16 %v1077, %v1076
        %v1088 = vpack.c.bf16 %v1079, %v1078
        %v1089 = vpack.c.bf16 %v1081, %v1080
        %v1090 = vlaneseq
        %v1091 = vshrl.u32 %v1090, 7
        %v1092 = vsub.s32 0, %v1091
        %v1093 = vrot.slane %v699, %v1092
        %v1110 = vunpack.c.l.b16 %v683
        %v1111 = vunpack.c.l.b16 %v684
        %v1112 = vunpack.c.l.b16 %v685
        %v1113 = vunpack.c.l.b16 %v686
        %v1114 = vunpack.c.l.b16 %v687
        %v1115 = vunpack.c.l.b16 %v688
        %v1116 = vunpack.c.l.b16 %v689
        %v1117 = vunpack.c.l.b16 %v690
        %v1118 = vunpack.c.l.b16 %v691
        %v1119 = vunpack.c.l.b16 %v692
        %v1120 = vunpack.c.l.b16 %v693
        %v1121 = vunpack.c.l.b16 %v694
        %v1122 = vunpack.c.l.b16 %v695
        %v1123 = vunpack.c.l.b16 %v696
        %v1124 = vunpack.c.l.b16 %v697
        %v1125 = vunpack.c.l.b16 %v698
        %v1126 = vpack.c.b16 %v1111, %v1110
        %v1127 = vpack.c.b16 %v1113, %v1112
        %v1128 = vpack.c.b16 %v1115, %v1114
        %v1129 = vpack.c.b16 %v1117, %v1116
        %v1130 = vpack.c.b16 %v1119, %v1118
        %v1131 = vpack.c.b16 %v1121, %v1120
        %v1132 = vpack.c.b16 %v1123, %v1122
        %v1133 = vpack.c.b16 %v1125, %v1124
        %1142 = vmatprep.subr.bf16.mxu0 0
        %1143 = vmatpush1.bf16.msra.mxu0 %v1126
        %1144 = vmatprep.subr.bf16.mxu0 0
        %1145 = vmatpush1.bf16.msra.mxu0 %v1127
        %1146 = vmatprep.subr.bf16.mxu0 0
        %1147 = vmatpush1.bf16.msra.mxu0 %v1128
        %1148 = vmatprep.subr.bf16.mxu0 0
        %1149 = vmatpush1.bf16.msra.mxu0 %v1129
        %1150 = vmatprep.subr.bf16.mxu0 0
        %1151 = vmatpush1.bf16.msra.mxu0 %v1130
        %1152 = vmatprep.subr.bf16.mxu0 0
        %1153 = vmatpush1.bf16.msra.mxu0 %v1131
        %1154 = vmatprep.subr.bf16.mxu0 0
        %1155 = vmatpush1.bf16.msra.mxu0 %v1132
        %1156 = vmatprep.subr.bf16.mxu0 0
        %1157 = vmatpush1.bf16.msra.mxu0 %v1133
        %1158 = vmatprep.subr.bf16.mxu0 0
        %1159 = vmatpush1.bf16.msra.mxu0 0
        %1160 = vmatprep.subr.bf16.mxu0 0
        %1161 = vmatpush1.bf16.msra.mxu0 0
        %1162 = vmatprep.subr.bf16.mxu0 0
        %1163 = vmatpush1.bf16.msra.mxu0 0
        %1164 = vmatprep.subr.bf16.mxu0 0
        %1165 = vmatpush1.bf16.msra.mxu0 0
        %1166 = vmatprep.subr.bf16.mxu0 0
        %1167 = vmatpush1.bf16.msra.mxu0 0
        %1168 = vmatprep.subr.bf16.mxu0 0
        %1169 = vmatpush1.bf16.msra.mxu0 0
        %1170 = vmatprep.subr.bf16.mxu0 0
        %1171 = vmatpush1.bf16.msra.mxu0 0
        %1172 = vmatprep.subr.bf16.mxu0 0
        %1173 = vmatpush1.bf16.msra.mxu0 0
        %1174 = vmatprep.mubr.bf16.mxu0 0
        %1175 = vmatmul.mubr.bf16.gmra.mrb[0].mxu0 %v1082
        %v1176 = vpop.f32.mrb[0].mxu0
        %v1177 = vadd.f32 %v1093, %v1176
        %v1178 = vpop.f32.mrb[0].mxu0
        %v1179 = vpop.f32.mrb[0].mxu0
        %v1180 = vadd.f32 %v1093, %v1179
        %v1181 = vpop.f32.mrb[0].mxu0
        %1182 = vmatprep.mubr.bf16.mxu0 0
        %1183 = vmatmul.mubr.bf16.gmra.mrb[0].mxu0 %v1083
        %v1184 = vpop.f32.mrb[0].mxu0
        %v1185 = vadd.f32 %v1093, %v1184
        %v1186 = vpop.f32.mrb[0].mxu0
        %v1187 = vpop.f32.mrb[0].mxu0
        %v1188 = vadd.f32 %v1093, %v1187
        %v1189 = vpop.f32.mrb[0].mxu0
        %1190 = vmatprep.mubr.bf16.mxu0 0
        %1191 = vmatmul.mubr.bf16.gmra.mrb[0].mxu0 %v1084
        %v1192 = vpop.f32.mrb[0].mxu0
        %v1193 = vadd.f32 %v1093, %v1192
        %v1194 = vpop.f32.mrb[0].mxu0
        %v1195 = vpop.f32.mrb[0].mxu0
        %v1196 = vadd.f32 %v1093, %v1195
        %v1197 = vpop.f32.mrb[0].mxu0
        %1198 = vmatprep.mubr.bf16.mxu0 0
        %1199 = vmatmul.mubr.bf16.gmra.mrb[0].mxu0 %v1085
        %v1200 = vpop.f32.mrb[0].mxu0
        %v1201 = vadd.f32 %v1093, %v1200
        %v1202 = vpop.f32.mrb[0].mxu0
        %v1203 = vpop.f32.mrb[0].mxu0
        %v1204 = vadd.f32 %v1093, %v1203
        %v1205 = vpop.f32.mrb[0].mxu0
        %1206 = vmatprep.mubr.bf16.mxu0 0
        %1207 = vmatmul.mubr.bf16.gmra.mrb[0].mxu0 %v1086
        %v1208 = vpop.f32.mrb[0].mxu0
        %v1209 = vadd.f32 %v1093, %v1208
        %v1210 = vpop.f32.mrb[0].mxu0
        %v1211 = vpop.f32.mrb[0].mxu0
        %v1212 = vadd.f32 %v1093, %v1211
        %v1213 = vpop.f32.mrb[0].mxu0
        %1214 = vmatprep.mubr.bf16.mxu0 0
        %1215 = vmatmul.mubr.bf16.gmra.mrb[0].mxu0 %v1087
        %v1216 = vpop.f32.mrb[0].mxu0
        %v1217 = vadd.f32 %v1093, %v1216
        %v1218 = vpop.f32.mrb[0].mxu0
        %v1219 = vpop.f32.mrb[0].mxu0
        %v1220 = vadd.f32 %v1093, %v1219
        %v1221 = vpop.f32.mrb[0].mxu0
        %1222 = vmatprep.mubr.bf16.mxu0 0
        %1223 = vmatmul.mubr.bf16.gmra.mrb[0].mxu0 %v1088
        %v1224 = vpop.f32.mrb[0].mxu0
        %v1225 = vadd.f32 %v1093, %v1224
        %v1226 = vpop.f32.mrb[0].mxu0
        %v1227 = vpop.f32.mrb[0].mxu0
        %v1228 = vadd.f32 %v1093, %v1227
        %v1229 = vpop.f32.mrb[0].mxu0
        %1230 = vmatprep.mubr.bf16.mxu0 0
        %1231 = vmatmul.mubr.bf16.gmra.mrb[0].mxu0 %v1089
        %v1232 = vpop.f32.mrb[0].mxu0
        %v1233 = vadd.f32 %v1093, %v1232
        %v1234 = vpop.f32.mrb[0].mxu0
        %v1235 = vpop.f32.mrb[0].mxu0
        %v1236 = vadd.f32 %v1093, %v1235
        %v1237 = vpop.f32.mrb[0].mxu0
        %1238 = vdwg.mxu0
        %1239 = vadd.xlane.f32.xlu0 %v1177
        %v1240 = vpop.xlane.xlu0 %1239
        %1241 = vadd.xlane.f32.xlu0 %v1180
        %v1242 = vpop.xlane.xlu0 %1241
        %1243 = vadd.xlane.f32.xlu0 %v1185
        %v1244 = vpop.xlane.xlu0 %1243
        %1245 = vadd.xlane.f32.xlu0 %v1188
        %v1246 = vpop.xlane.xlu0 %1245
        %1247 = vadd.xlane.f32.xlu0 %v1193
        %v1248 = vpop.xlane.xlu0 %1247
        %1249 = vadd.xlane.f32.xlu0 %v1196
        %v1250 = vpop.xlane.xlu0 %1249
        %1251 = vadd.xlane.f32.xlu0 %v1201
        %v1252 = vpop.xlane.xlu0 %1251
        %1253 = vadd.xlane.f32.xlu0 %v1204
        %v1254 = vpop.xlane.xlu0 %1253
        %1255 = vadd.xlane.f32.xlu0 %v1209
        %v1256 = vpop.xlane.xlu0 %1255
        %1257 = vadd.xlane.f32.xlu0 %v1212
        %v1258 = vpop.xlane.xlu0 %1257
        %1259 = vadd.xlane.f32.xlu0 %v1217
        %v1260 = vpop.xlane.xlu0 %1259
        %1261 = vadd.xlane.f32.xlu0 %v1220
        %v1262 = vpop.xlane.xlu0 %1261
        %1263 = vadd.xlane.f32.xlu0 %v1225
        %v1264 = vpop.xlane.xlu0 %1263
        %1265 = vadd.xlane.f32.xlu0 %v1228
        %v1266 = vpop.xlane.xlu0 %1265
        %1267 = vadd.xlane.f32.xlu0 %v1233
        %v1268 = vpop.xlane.xlu0 %1267
        %1269 = vadd.xlane.f32.xlu0 %v1236
        %v1270 = vpop.xlane.xlu0 %1269
        %v1271 = vmul.f32 %v1240, %v881
        %v1272 = vmul.f32 %v1242, %v881
        %v1273 = vmul.f32 %v1244, %v881
        %v1274 = vmul.f32 %v1246, %v881
        %v1275 = vmul.f32 %v1248, %v881
        %v1276 = vmul.f32 %v1250, %v881
        %v1277 = vmul.f32 %v1252, %v881
        %v1278 = vmul.f32 %v1254, %v881
        %v1279 = vmul.f32 %v1256, %v881
        %v1280 = vmul.f32 %v1258, %v881
        %v1281 = vmul.f32 %v1260, %v881
        %v1282 = vmul.f32 %v1262, %v881
        %v1283 = vmul.f32 %v1264, %v881
        %v1284 = vmul.f32 %v1266, %v881
        %v1285 = vmul.f32 %v1268, %v881
        %v1286 = vmul.f32 %v1270, %v881
        %v1287 = vsub.f32 %v1177, %v1271
        %v1288 = vsub.f32 %v1180, %v1272
        %v1289 = vsub.f32 %v1185, %v1273
        %v1290 = vsub.f32 %v1188, %v1274
        %v1291 = vsub.f32 %v1193, %v1275
        %v1292 = vsub.f32 %v1196, %v1276
        %v1293 = vsub.f32 %v1201, %v1277
        %v1294 = vsub.f32 %v1204, %v1278
        %v1295 = vsub.f32 %v1209, %v1279
        %v1296 = vsub.f32 %v1212, %v1280
        %v1297 = vsub.f32 %v1217, %v1281
        %v1298 = vsub.f32 %v1220, %v1282
        %v1299 = vsub.f32 %v1225, %v1283
        %v1300 = vsub.f32 %v1228, %v1284
        %v1301 = vsub.f32 %v1233, %v1285
        %v1302 = vsub.f32 %v1236, %v1286
        %v1303 = vmul.f32 %v1287, %v1287
        %v1304 = vmul.f32 %v1288, %v1288
        %v1305 = vmul.f32 %v1289, %v1289
        %v1306 = vmul.f32 %v1290, %v1290
        %v1307 = vmul.f32 %v1291, %v1291
        %v1308 = vmul.f32 %v1292, %v1292
        %v1309 = vmul.f32 %v1293, %v1293
        %v1310 = vmul.f32 %v1294, %v1294
        %v1311 = vmul.f32 %v1295, %v1295
        %v1312 = vmul.f32 %v1296, %v1296
        %v1313 = vmul.f32 %v1297, %v1297
        %v1314 = vmul.f32 %v1298, %v1298
        %v1315 = vmul.f32 %v1299, %v1299
        %v1316 = vmul.f32 %v1300, %v1300
        %v1317 = vmul.f32 %v1301, %v1301
        %v1318 = vmul.f32 %v1302, %v1302
        %1319 = vadd.xlane.f32.xlu0 %v1303
        %v1320 = vpop.xlane.xlu0 %1319
        %1321 = vadd.xlane.f32.xlu0 %v1304
        %v1322 = vpop.xlane.xlu0 %1321
        %1323 = vadd.xlane.f32.xlu0 %v1305
        %v1324 = vpop.xlane.xlu0 %1323
        %1325 = vadd.xlane.f32.xlu0 %v1306
        %v1326 = vpop.xlane.xlu0 %1325
        %1327 = vadd.xlane.f32.xlu0 %v1307
        %v1328 = vpop.xlane.xlu0 %1327
        %1329 = vadd.xlane.f32.xlu0 %v1308
        %v1330 = vpop.xlane.xlu0 %1329
        %1331 = vadd.xlane.f32.xlu0 %v1309
        %v1332 = vpop.xlane.xlu0 %1331
        %1333 = vadd.xlane.f32.xlu0 %v1310
        %v1334 = vpop.xlane.xlu0 %1333
        %1335 = vadd.xlane.f32.xlu0 %v1311
        %v1336 = vpop.xlane.xlu0 %1335
        %1337 = vadd.xlane.f32.xlu0 %v1312
        %v1338 = vpop.xlane.xlu0 %1337
        %1339 = vadd.xlane.f32.xlu0 %v1313
        %v1340 = vpop.xlane.xlu0 %1339
        %1341 = vadd.xlane.f32.xlu0 %v1314
        %v1342 = vpop.xlane.xlu0 %1341
        %1343 = vadd.xlane.f32.xlu0 %v1315
        %v1344 = vpop.xlane.xlu0 %1343
        %1345 = vadd.xlane.f32.xlu0 %v1316
        %v1346 = vpop.xlane.xlu0 %1345
        %1347 = vadd.xlane.f32.xlu0 %v1317
        %v1348 = vpop.xlane.xlu0 %1347
        %1349 = vadd.xlane.f32.xlu0 %v1318
        %v1350 = vpop.xlane.xlu0 %1349
        %v1351 = vmul.f32 %v1320, %v881
        %v1352 = vmul.f32 %v1322, %v881
        %v1353 = vmul.f32 %v1324, %v881
        %v1354 = vmul.f32 %v1326, %v881
        %v1355 = vmul.f32 %v1328, %v881
        %v1356 = vmul.f32 %v1330, %v881
        %v1357 = vmul.f32 %v1332, %v881
        %v1358 = vmul.f32 %v1334, %v881
        %v1359 = vmul.f32 %v1336, %v881
        %v1360 = vmul.f32 %v1338, %v881
        %v1361 = vmul.f32 %v1340, %v881
        %v1362 = vmul.f32 %v1342, %v881
        %v1363 = vmul.f32 %v1344, %v881
        %v1364 = vmul.f32 %v1346, %v881
        %v1365 = vmul.f32 %v1348, %v881
        %v1366 = vmul.f32 %v1350, %v881
        %v1367 = vadd.f32 %v1351, 1e-05
        %v1368 = vadd.f32 %v1352, 1e-05
        %v1369 = vadd.f32 %v1353, 1e-05
        %v1370 = vadd.f32 %v1354, 1e-05
        %v1371 = vadd.f32 %v1355, 1e-05
        %v1372 = vadd.f32 %v1356, 1e-05
        %v1373 = vadd.f32 %v1357, 1e-05
        %v1374 = vadd.f32 %v1358, 1e-05
        %v1375 = vadd.f32 %v1359, 1e-05
        %v1376 = vadd.f32 %v1360, 1e-05
        %v1377 = vadd.f32 %v1361, 1e-05
        %v1378 = vadd.f32 %v1362, 1e-05
        %v1379 = vadd.f32 %v1363, 1e-05
        %v1380 = vadd.f32 %v1364, 1e-05
        %v1381 = vadd.f32 %v1365, 1e-05
        %v1382 = vadd.f32 %v1366, 1e-05
        %v1383 = vrsqrt.pop %v1367
        %v1384 = vrsqrt.pop %v1368
        %v1385 = vrsqrt.pop %v1369
        %v1386 = vrsqrt.pop %v1370
        %v1387 = vrsqrt.pop %v1371
        %v1388 = vrsqrt.pop %v1372
        %v1389 = vrsqrt.pop %v1373
        %v1390 = vrsqrt.pop %v1374
        %v1391 = vrsqrt.pop %v1375
        %v1392 = vrsqrt.pop %v1376
        %v1393 = vrsqrt.pop %v1377
        %v1394 = vrsqrt.pop %v1378
        %v1395 = vrsqrt.pop %v1379
        %v1396 = vrsqrt.pop %v1380
        %v1397 = vrsqrt.pop %v1381
        %v1398 = vrsqrt.pop %v1382
        %v1399 = vmul.f32 %v1287, %v1383
        %v1400 = vmul.f32 %v1288, %v1384
        %v1401 = vmul.f32 %v1289, %v1385
        %v1402 = vmul.f32 %v1290, %v1386
        %v1403 = vmul.f32 %v1291, %v1387
        %v1404 = vmul.f32 %v1292, %v1388
        %v1405 = vmul.f32 %v1293, %v1389
        %v1406 = vmul.f32 %v1294, %v1390
        %v1407 = vmul.f32 %v1295, %v1391
        %v1408 = vmul.f32 %v1296, %v1392
        %v1409 = vmul.f32 %v1297, %v1393
        %v1410 = vmul.f32 %v1298, %v1394
        %v1411 = vmul.f32 %v1299, %v1395
        %v1412 = vmul.f32 %v1300, %v1396
        %v1413 = vmul.f32 %v1301, %v1397
        %v1414 = vmul.f32 %v1302, %v1398
        %v1415 = vlaneseq
        %v1416 = vshrl.u32 %v1415, 7
        %v1417 = vsub.s32 1, %v1416
        %v1418 = vrot.slane %v699, %v1417
        %v1419 = vmul.f32 %v1399, %v1418
        %v1420 = vmul.f32 %v1400, %v1418
        %v1421 = vmul.f32 %v1401, %v1418
        %v1422 = vmul.f32 %v1402, %v1418
        %v1423 = vmul.f32 %v1403, %v1418
        %v1424 = vmul.f32 %v1404, %v1418
        %v1425 = vmul.f32 %v1405, %v1418
        %v1426 = vmul.f32 %v1406, %v1418
        %v1427 = vmul.f32 %v1407, %v1418
        %v1428 = vmul.f32 %v1408, %v1418
        %v1429 = vmul.f32 %v1409, %v1418
        %v1430 = vmul.f32 %v1410, %v1418
        %v1431 = vmul.f32 %v1411, %v1418
        %v1432 = vmul.f32 %v1412, %v1418
        %v1433 = vmul.f32 %v1413, %v1418
        %v1434 = vmul.f32 %v1414, %v1418
        %v1435 = vlaneseq
        %v1436 = vshrl.u32 %v1435, 7
        %v1437 = vsub.s32 2, %v1436
        %v1438 = vrot.slane %v699, %v1437
        %v1439 = vadd.f32 %v1419, %v1438
        %v1440 = vadd.f32 %v1420, %v1438
        %v1441 = vadd.f32 %v1421, %v1438
        %v1442 = vadd.f32 %v1422, %v1438
        %v1443 = vadd.f32 %v1423, %v1438
        %v1444 = vadd.f32 %v1424, %v1438
        %v1445 = vadd.f32 %v1425, %v1438
        %v1446 = vadd.f32 %v1426, %v1438
        %v1447 = vadd.f32 %v1427, %v1438
        %v1448 = vadd.f32 %v1428, %v1438
        %v1449 = vadd.f32 %v1429, %v1438
        %v1450 = vadd.f32 %v1430, %v1438
        %v1451 = vadd.f32 %v1431, %v1438
        %v1452 = vadd.f32 %v1432, %v1438
        %v1453 = vadd.f32 %v1433, %v1438
        %v1454 = vadd.f32 %v1434, %v1438
        %v1455 = vadd.f32 %v596, %v1439
        %v1456 = vadd.f32 %v599, %v1440
        %v1457 = vadd.f32 %v604, %v1441
        %v1458 = vadd.f32 %v607, %v1442
        %v1459 = vadd.f32 %v612, %v1443
        %v1460 = vadd.f32 %v615, %v1444
        %v1461 = vadd.f32 %v620, %v1445
        %v1462 = vadd.f32 %v623, %v1446
        %v1463 = vadd.f32 %v628, %v1447
        %v1464 = vadd.f32 %v631, %v1448
        %v1465 = vadd.f32 %v636, %v1449
        %v1466 = vadd.f32 %v639, %v1450
        %v1467 = vadd.f32 %v644, %v1451
        %v1468 = vadd.f32 %v647, %v1452
        %v1469 = vadd.f32 %v652, %v1453
        %v1470 = vadd.f32 %v655, %v1454
        %v1471 = vpack.c.bf16 %v1456, %v1455
        %v1472 = vpack.c.bf16 %v1458, %v1457
        %v1473 = vpack.c.bf16 %v1460, %v1459
        %v1474 = vpack.c.bf16 %v1462, %v1461
        %v1475 = vpack.c.bf16 %v1464, %v1463
        %v1476 = vpack.c.bf16 %v1466, %v1465
        %v1477 = vpack.c.bf16 %v1468, %v1467
        %v1478 = vpack.c.bf16 %v1470, %v1469
        %v1479 = vld [vmem:[%s7] sm:$0xff]
        %v1480 = vld [vmem:[%s7 + $0x8] sm:$0xff]
        %v1481 = vld [vmem:[%s7 + $0x10] sm:$0xff]
        %v1482 = vld [vmem:[%s7 + $0x18] sm:$0xff]
        %v1483 = vld [vmem:[%s7 + $0x20] sm:$0xff]
        %v1484 = vld [vmem:[%s7 + $0x28] sm:$0xff]
        %v1485 = vld [vmem:[%s7 + $0x30] sm:$0xff]
        %v1486 = vld [vmem:[%s7 + $0x38] sm:$0xff]
        %v1487 = vld [vmem:[%s7 + $0x40] sm:$0xff]
        %v1488 = vld [vmem:[%s7 + $0x48] sm:$0xff]
        %v1489 = vld [vmem:[%s7 + $0x50] sm:$0xff]
        %v1490 = vld [vmem:[%s7 + $0x58] sm:$0xff]
        %v1491 = vld [vmem:[%s7 + $0x60] sm:$0xff]
        %v1492 = vld [vmem:[%s7 + $0x68] sm:$0xff]
        %v1493 = vld [vmem:[%s7 + $0x70] sm:$0xff]
        %v1494 = vld [vmem:[%s7 + $0x78] sm:$0xff]
        %v1495 = vld [vmem:[%s8] sm:$0x77]
        %v1497 = vlaneseq
        %v1498 = vshrl.u32 %v1497, 7
        %v1499 = vsub.s32 0, %v1498
        %v1500 = vrot.slane %v1495, %v1499
        %v1501 = vlaneseq
        %v1502 = vshrl.u32 %v1501, 7
        %v1503 = vsub.s32 4, %v1502
        %v1504 = vrot.slane %v1495, %v1503
        %v1507 = vlaneseq
        %v1508 = vshrl.u32 %v1507, 7
        %v1509 = vsub.s32 0, %v1508
        %v1510 = vrot.slane %v1500, %v1509
        %v1511 = vlaneseq
        %v1512 = vshrl.u32 %v1511, 7
        %v1513 = vsub.s32 0, %v1512
        %v1514 = vrot.slane %v1504, %v1513
        %v1531 = vunpack.c.l.b16 %v1479
        %v1532 = vunpack.c.h.b16 %v1479
        %v1533 = vunpack.c.l.b16 %v1480
        %v1534 = vunpack.c.h.b16 %v1480
        %v1535 = vunpack.c.l.b16 %v1481
        %v1536 = vunpack.c.h.b16 %v1481
        %v1537 = vunpack.c.l.b16 %v1482
        %v1538 = vunpack.c.h.b16 %v1482
        %v1539 = vunpack.c.l.b16 %v1483
        %v1540 = vunpack.c.h.b16 %v1483
        %v1541 = vunpack.c.l.b16 %v1484
        %v1542 = vunpack.c.h.b16 %v1484
        %v1543 = vunpack.c.l.b16 %v1485
        %v1544 = vunpack.c.h.b16 %v1485
        %v1545 = vunpack.c.l.b16 %v1486
        %v1546 = vunpack.c.h.b16 %v1486
        %v1547 = vunpack.c.l.b16 %v1487
        %v1548 = vunpack.c.h.b16 %v1487
        %v1549 = vunpack.c.l.b16 %v1488
        %v1550 = vunpack.c.h.b16 %v1488
        %v1551 = vunpack.c.l.b16 %v1489
        %v1552 = vunpack.c.h.b16 %v1489
        %v1553 = vunpack.c.l.b16 %v1490
        %v1554 = vunpack.c.h.b16 %v1490
        %v1555 = vunpack.c.l.b16 %v1491
        %v1556 = vunpack.c.h.b16 %v1491
        %v1557 = vunpack.c.l.b16 %v1492
        %v1558 = vunpack.c.h.b16 %v1492
        %v1559 = vunpack.c.l.b16 %v1493
        %v1560 = vunpack.c.h.b16 %v1493
        %v1561 = vunpack.c.l.b16 %v1494
        %v1562 = vunpack.c.h.b16 %v1494
        %v1563 = vpack.c.b16 %v1533, %v1531
        %v1564 = vpack.c.b16 %v1534, %v1532
        %v1565 = vpack.c.b16 %v1537, %v1535
        %v1566 = vpack.c.b16 %v1538, %v1536
        %v1567 = vpack.c.b16 %v1541, %v1539
        %v1568 = vpack.c.b16 %v1542, %v1540
        %v1569 = vpack.c.b16 %v1545, %v1543
        %v1570 = vpack.c.b16 %v1546, %v1544
        %v1571 = vpack.c.b16 %v1549, %v1547
        %v1572 = vpack.c.b16 %v1550, %v1548
        %v1573 = vpack.c.b16 %v1553, %v1551
        %v1574 = vpack.c.b16 %v1554, %v1552
        %v1575 = vpack.c.b16 %v1557, %v1555
        %v1576 = vpack.c.b16 %v1558, %v1556
        %v1577 = vpack.c.b16 %v1561, %v1559
        %v1578 = vpack.c.b16 %v1562, %v1560
        %1595 = vmatprep.subr.bf16.mxu0 %v1564
        %1596 = vmatpush1.bf16.msra.mxu0 %v1563
        %1597 = vmatprep.subr.bf16.mxu0 %v1566
        %1598 = vmatpush1.bf16.msra.mxu0 %v1565
        %1599 = vmatprep.subr.bf16.mxu0 %v1568
        %1600 = vmatpush1.bf16.msra.mxu0 %v1567
        %1601 = vmatprep.subr.bf16.mxu0 %v1570
        %1602 = vmatpush1.bf16.msra.mxu0 %v1569
        %1603 = vmatprep.subr.bf16.mxu0 %v1572
        %1604 = vmatpush1.bf16.msra.mxu0 %v1571
        %1605 = vmatprep.subr.bf16.mxu0 %v1574
        %1606 = vmatpush1.bf16.msra.mxu0 %v1573
        %1607 = vmatprep.subr.bf16.mxu0 %v1576
        %1608 = vmatpush1.bf16.msra.mxu0 %v1575
        %1609 = vmatprep.subr.bf16.mxu0 %v1578
        %1610 = vmatpush1.bf16.msra.mxu0 %v1577
        %1611 = vmatprep.subr.bf16.mxu0 0
        %1612 = vmatpush1.bf16.msra.mxu0 0
        %1613 = vmatprep.subr.bf16.mxu0 0
        %1614 = vmatpush1.bf16.msra.mxu0 0
        %1615 = vmatprep.subr.bf16.mxu0 0
        %1616 = vmatpush1.bf16.msra.mxu0 0
        %1617 = vmatprep.subr.bf16.mxu0 0
        %1618 = vmatpush1.bf16.msra.mxu0 0
        %1619 = vmatprep.subr.bf16.mxu0 0
        %1620 = vmatpush1.bf16.msra.mxu0 0
        %1621 = vmatprep.subr.bf16.mxu0 0
        %1622 = vmatpush1.bf16.msra.mxu0 0
        %1623 = vmatprep.subr.bf16.mxu0 0
        %1624 = vmatpush1.bf16.msra.mxu0 0
        %1625 = vmatprep.subr.bf16.mxu0 0
        %1626 = vmatpush1.bf16.msra.mxu0 0
        %1627 = vmatprep.mubr.bf16.mxu0 0
        %1628 = vmatmul.mubr.bf16.gmra.mrb[0].mxu0 %v1471
        %v1629 = vpop.f32.mrb[0].mxu0
        %v1630 = vadd.f32 %v1510, %v1629
        %v1631 = vpop.f32.mrb[0].mxu0
        %v1632 = vadd.f32 %v1514, %v1631
        %v1633 = vpop.f32.mrb[0].mxu0
        %v1634 = vadd.f32 %v1510, %v1633
        %v1635 = vpop.f32.mrb[0].mxu0
        %v1636 = vadd.f32 %v1514, %v1635
        %1637 = vmatprep.mubr.bf16.mxu0 0
        %1638 = vmatmul.mubr.bf16.gmra.mrb[0].mxu0 %v1472
        %v1639 = vpop.f32.mrb[0].mxu0
        %v1640 = vadd.f32 %v1510, %v1639
        %v1641 = vpop.f32.mrb[0].mxu0
        %v1642 = vadd.f32 %v1514, %v1641
        %v1643 = vpop.f32.mrb[0].mxu0
        %v1644 = vadd.f32 %v1510, %v1643
        %v1645 = vpop.f32.mrb[0].mxu0
        %v1646 = vadd.f32 %v1514, %v1645
        %1647 = vmatprep.mubr.bf16.mxu0 0
        %1648 = vmatmul.mubr.bf16.gmra.mrb[0].mxu0 %v1473
        %v1649 = vpop.f32.mrb[0].mxu0
        %v1650 = vadd.f32 %v1510, %v1649
        %v1651 = vpop.f32.mrb[0].mxu0
        %v1652 = vadd.f32 %v1514, %v1651
        %v1653 = vpop.f32.mrb[0].mxu0
        %v1654 = vadd.f32 %v1510, %v1653
        %v1655 = vpop.f32.mrb[0].mxu0
        %v1656 = vadd.f32 %v1514, %v1655
        %1657 = vmatprep.mubr.bf16.mxu0 0
        %1658 = vmatmul.mubr.bf16.gmra.mrb[0].mxu0 %v1474
        %v1659 = vpop.f32.mrb[0].mxu0
        %v1660 = vadd.f32 %v1510, %v1659
        %v1661 = vpop.f32.mrb[0].mxu0
        %v1662 = vadd.f32 %v1514, %v1661
        %v1663 = vpop.f32.mrb[0].mxu0
        %v1664 = vadd.f32 %v1510, %v1663
        %v1665 = vpop.f32.mrb[0].mxu0
        %v1666 = vadd.f32 %v1514, %v1665
        %1667 = vmatprep.mubr.bf16.mxu0 0
        %1668 = vmatmul.mubr.bf16.gmra.mrb[0].mxu0 %v1475
        %v1669 = vpop.f32.mrb[0].mxu0
        %v1670 = vadd.f32 %v1510, %v1669
        %v1671 = vpop.f32.mrb[0].mxu0
        %v1672 = vadd.f32 %v1514, %v1671
        %v1673 = vpop.f32.mrb[0].mxu0
        %v1674 = vadd.f32 %v1510, %v1673
        %v1675 = vpop.f32.mrb[0].mxu0
        %v1676 = vadd.f32 %v1514, %v1675
        %1677 = vmatprep.mubr.bf16.mxu0 0
        %1678 = vmatmul.mubr.bf16.gmra.mrb[0].mxu0 %v1476
        %v1679 = vpop.f32.mrb[0].mxu0
        %v1680 = vadd.f32 %v1510, %v1679
        %v1681 = vpop.f32.mrb[0].mxu0
        %v1682 = vadd.f32 %v1514, %v1681
        %v1683 = vpop.f32.mrb[0].mxu0
        %v1684 = vadd.f32 %v1510, %v1683
        %v1685 = vpop.f32.mrb[0].mxu0
        %v1686 = vadd.f32 %v1514, %v1685
        %1687 = vmatprep.mubr.bf16.mxu0 0
        %1688 = vmatmul.mubr.bf16.gmra.mrb[0].mxu0 %v1477
        %v1689 = vpop.f32.mrb[0].mxu0
        %v1690 = vadd.f32 %v1510, %v1689
        %v1691 = vpop.f32.mrb[0].mxu0
        %v1692 = vadd.f32 %v1514, %v1691
        %v1693 = vpop.f32.mrb[0].mxu0
        %v1694 = vadd.f32 %v1510, %v1693
        %v1695 = vpop.f32.mrb[0].mxu0
        %v1696 = vadd.f32 %v1514, %v1695
        %1697 = vmatprep.mubr.bf16.mxu0 0
        %1698 = vmatmul.mubr.bf16.gmra.mrb[0].mxu0 %v1478
        %v1699 = vpop.f32.mrb[0].mxu0
        %v1700 = vadd.f32 %v1510, %v1699
        %v1701 = vpop.f32.mrb[0].mxu0
        %v1702 = vadd.f32 %v1514, %v1701
        %v1703 = vpop.f32.mrb[0].mxu0
        %v1704 = vadd.f32 %v1510, %v1703
        %v1705 = vpop.f32.mrb[0].mxu0
        %v1706 = vadd.f32 %v1514, %v1705
        %1707 = vdwg.mxu0
        %v1708 = vadd.f32 %v1630, %v1632
        %1709 = vadd.xlane.f32.xlu0 %v1708
        %v1710 = vpop.xlane.xlu0 %1709
        %v1711 = vadd.f32 %v1634, %v1636
        %1712 = vadd.xlane.f32.xlu0 %v1711
        %v1713 = vpop.xlane.xlu0 %1712
        %v1714 = vadd.f32 %v1640, %v1642
        %1715 = vadd.xlane.f32.xlu0 %v1714
        %v1716 = vpop.xlane.xlu0 %1715
        %v1717 = vadd.f32 %v1644, %v1646
        %1718 = vadd.xlane.f32.xlu0 %v1717
        %v1719 = vpop.xlane.xlu0 %1718
        %v1720 = vadd.f32 %v1650, %v1652
        %1721 = vadd.xlane.f32.xlu0 %v1720
        %v1722 = vpop.xlane.xlu0 %1721
        %v1723 = vadd.f32 %v1654, %v1656
        %1724 = vadd.xlane.f32.xlu0 %v1723
        %v1725 = vpop.xlane.xlu0 %1724
        %v1726 = vadd.f32 %v1660, %v1662
        %1727 = vadd.xlane.f32.xlu0 %v1726
        %v1728 = vpop.xlane.xlu0 %1727
        %v1729 = vadd.f32 %v1664, %v1666
        %1730 = vadd.xlane.f32.xlu0 %v1729
        %v1731 = vpop.xlane.xlu0 %1730
        %v1732 = vadd.f32 %v1670, %v1672
        %1733 = vadd.xlane.f32.xlu0 %v1732
        %v1734 = vpop.xlane.xlu0 %1733
        %v1735 = vadd.f32 %v1674, %v1676
        %1736 = vadd.xlane.f32.xlu0 %v1735
        %v1737 = vpop.xlane.xlu0 %1736
        %v1738 = vadd.f32 %v1680, %v1682
        %1739 = vadd.xlane.f32.xlu0 %v1738
        %v1740 = vpop.xlane.xlu0 %1739
        %v1741 = vadd.f32 %v1684, %v1686
        %1742 = vadd.xlane.f32.xlu0 %v1741
        %v1743 = vpop.xlane.xlu0 %1742
        %v1744 = vadd.f32 %v1690, %v1692
        %1745 = vadd.xlane.f32.xlu0 %v1744
        %v1746 = vpop.xlane.xlu0 %1745
        %v1747 = vadd.f32 %v1694, %v1696
        %1748 = vadd.xlane.f32.xlu0 %v1747
        %v1749 = vpop.xlane.xlu0 %1748
        %v1750 = vadd.f32 %v1700, %v1702
        %1751 = vadd.xlane.f32.xlu0 %v1750
        %v1752 = vpop.xlane.xlu0 %1751
        %v1753 = vadd.f32 %v1704, %v1706
        %1754 = vadd.xlane.f32.xlu0 %v1753
        %v1755 = vpop.xlane.xlu0 %1754
        %v1756 = vrcp.pop 256.0
        %v1757 = vmul.f32 %v1710, %v1756
        %v1758 = vmul.f32 %v1713, %v1756
        %v1759 = vmul.f32 %v1716, %v1756
        %v1760 = vmul.f32 %v1719, %v1756
        %v1761 = vmul.f32 %v1722, %v1756
        %v1762 = vmul.f32 %v1725, %v1756
        %v1763 = vmul.f32 %v1728, %v1756
        %v1764 = vmul.f32 %v1731, %v1756
        %v1765 = vmul.f32 %v1734, %v1756
        %v1766 = vmul.f32 %v1737, %v1756
        %v1767 = vmul.f32 %v1740, %v1756
        %v1768 = vmul.f32 %v1743, %v1756
        %v1769 = vmul.f32 %v1746, %v1756
        %v1770 = vmul.f32 %v1749, %v1756
        %v1771 = vmul.f32 %v1752, %v1756
        %v1772 = vmul.f32 %v1755, %v1756
        %v1773 = vsub.f32 %v1630, %v1757
        %v1774 = vsub.f32 %v1632, %v1757
        %v1775 = vsub.f32 %v1634, %v1758
        %v1776 = vsub.f32 %v1636, %v1758
        %v1777 = vsub.f32 %v1640, %v1759
        %v1778 = vsub.f32 %v1642, %v1759
        %v1779 = vsub.f32 %v1644, %v1760
        %v1780 = vsub.f32 %v1646, %v1760
        %v1781 = vsub.f32 %v1650, %v1761
        %v1782 = vsub.f32 %v1652, %v1761
        %v1783 = vsub.f32 %v1654, %v1762
        %v1784 = vsub.f32 %v1656, %v1762
        %v1785 = vsub.f32 %v1660, %v1763
        %v1786 = vsub.f32 %v1662, %v1763
        %v1787 = vsub.f32 %v1664, %v1764
        %v1788 = vsub.f32 %v1666, %v1764
        %v1789 = vsub.f32 %v1670, %v1765
        %v1790 = vsub.f32 %v1672, %v1765
        %v1791 = vsub.f32 %v1674, %v1766
        %v1792 = vsub.f32 %v1676, %v1766
        %v1793 = vsub.f32 %v1680, %v1767
        %v1794 = vsub.f32 %v1682, %v1767
        %v1795 = vsub.f32 %v1684, %v1768
        %v1796 = vsub.f32 %v1686, %v1768
        %v1797 = vsub.f32 %v1690, %v1769
        %v1798 = vsub.f32 %v1692, %v1769
        %v1799 = vsub.f32 %v1694, %v1770
        %v1800 = vsub.f32 %v1696, %v1770
        %v1801 = vsub.f32 %v1700, %v1771
        %v1802 = vsub.f32 %v1702, %v1771
        %v1803 = vsub.f32 %v1704, %v1772
        %v1804 = vsub.f32 %v1706, %v1772
        %v1805 = vmul.f32 %v1773, %v1773
        %v1806 = vmul.f32 %v1774, %v1774
        %v1807 = vmul.f32 %v1775, %v1775
        %v1808 = vmul.f32 %v1776, %v1776
        %v1809 = vmul.f32 %v1777, %v1777
        %v1810 = vmul.f32 %v1778, %v1778
        %v1811 = vmul.f32 %v1779, %v1779
        %v1812 = vmul.f32 %v1780, %v1780
        %v1813 = vmul.f32 %v1781, %v1781
        %v1814 = vmul.f32 %v1782, %v1782
        %v1815 = vmul.f32 %v1783, %v1783
        %v1816 = vmul.f32 %v1784, %v1784
        %v1817 = vmul.f32 %v1785, %v1785
        %v1818 = vmul.f32 %v1786, %v1786
        %v1819 = vmul.f32 %v1787, %v1787
        %v1820 = vmul.f32 %v1788, %v1788
        %v1821 = vmul.f32 %v1789, %v1789
        %v1822 = vmul.f32 %v1790, %v1790
        %v1823 = vmul.f32 %v1791, %v1791
        %v1824 = vmul.f32 %v1792, %v1792
        %v1825 = vmul.f32 %v1793, %v1793
        %v1826 = vmul.f32 %v1794, %v1794
        %v1827 = vmul.f32 %v1795, %v1795
        %v1828 = vmul.f32 %v1796, %v1796
        %v1829 = vmul.f32 %v1797, %v1797
        %v1830 = vmul.f32 %v1798, %v1798
        %v1831 = vmul.f32 %v1799, %v1799
        %v1832 = vmul.f32 %v1800, %v1800
        %v1833 = vmul.f32 %v1801, %v1801
        %v1834 = vmul.f32 %v1802, %v1802
        %v1835 = vmul.f32 %v1803, %v1803
        %v1836 = vmul.f32 %v1804, %v1804
        %v1837 = vadd.f32 %v1805, %v1806
        %1838 = vadd.xlane.f32.xlu0 %v1837
        %v1839 = vpop.xlane.xlu0 %1838
        %v1840 = vadd.f32 %v1807, %v1808
        %1841 = vadd.xlane.f32.xlu0 %v1840
        %v1842 = vpop.xlane.xlu0 %1841
        %v1843 = vadd.f32 %v1809, %v1810
        %1844 = vadd.xlane.f32.xlu0 %v1843
        %v1845 = vpop.xlane.xlu0 %1844
        %v1846 = vadd.f32 %v1811, %v1812
        %1847 = vadd.xlane.f32.xlu0 %v1846
        %v1848 = vpop.xlane.xlu0 %1847
        %v1849 = vadd.f32 %v1813, %v1814
        %1850 = vadd.xlane.f32.xlu0 %v1849
        %v1851 = vpop.xlane.xlu0 %1850
        %v1852 = vadd.f32 %v1815, %v1816
        %1853 = vadd.xlane.f32.xlu0 %v1852
        %v1854 = vpop.xlane.xlu0 %1853
        %v1855 = vadd.f32 %v1817, %v1818
        %1856 = vadd.xlane.f32.xlu0 %v1855
        %v1857 = vpop.xlane.xlu0 %1856
        %v1858 = vadd.f32 %v1819, %v1820
        %1859 = vadd.xlane.f32.xlu0 %v1858
        %v1860 = vpop.xlane.xlu0 %1859
        %v1861 = vadd.f32 %v1821, %v1822
        %1862 = vadd.xlane.f32.xlu0 %v1861
        %v1863 = vpop.xlane.xlu0 %1862
        %v1864 = vadd.f32 %v1823, %v1824
        %1865 = vadd.xlane.f32.xlu0 %v1864
        %v1866 = vpop.xlane.xlu0 %1865
        %v1867 = vadd.f32 %v1825, %v1826
        %1868 = vadd.xlane.f32.xlu0 %v1867
        %v1869 = vpop.xlane.xlu0 %1868
        %v1870 = vadd.f32 %v1827, %v1828
        %1871 = vadd.xlane.f32.xlu0 %v1870
        %v1872 = vpop.xlane.xlu0 %1871
        %v1873 = vadd.f32 %v1829, %v1830
        %1874 = vadd.xlane.f32.xlu0 %v1873
        %v1875 = vpop.xlane.xlu0 %1874
        %v1876 = vadd.f32 %v1831, %v1832
        %1877 = vadd.xlane.f32.xlu0 %v1876
        %v1878 = vpop.xlane.xlu0 %1877
        %v1879 = vadd.f32 %v1833, %v1834
        %1880 = vadd.xlane.f32.xlu0 %v1879
        %v1881 = vpop.xlane.xlu0 %1880
        %v1882 = vadd.f32 %v1835, %v1836
        %1883 = vadd.xlane.f32.xlu0 %v1882
        %v1884 = vpop.xlane.xlu0 %1883
        %v1885 = vmul.f32 %v1839, %v1756
        %v1886 = vmul.f32 %v1842, %v1756
        %v1887 = vmul.f32 %v1845, %v1756
        %v1888 = vmul.f32 %v1848, %v1756
        %v1889 = vmul.f32 %v1851, %v1756
        %v1890 = vmul.f32 %v1854, %v1756
        %v1891 = vmul.f32 %v1857, %v1756
        %v1892 = vmul.f32 %v1860, %v1756
        %v1893 = vmul.f32 %v1863, %v1756
        %v1894 = vmul.f32 %v1866, %v1756
        %v1895 = vmul.f32 %v1869, %v1756
        %v1896 = vmul.f32 %v1872, %v1756
        %v1897 = vmul.f32 %v1875, %v1756
        %v1898 = vmul.f32 %v1878, %v1756
        %v1899 = vmul.f32 %v1881, %v1756
        %v1900 = vmul.f32 %v1884, %v1756
        %v1901 = vadd.f32 %v1885, 1e-05
        %v1902 = vadd.f32 %v1886, 1e-05
        %v1903 = vadd.f32 %v1887, 1e-05
        %v1904 = vadd.f32 %v1888, 1e-05
        %v1905 = vadd.f32 %v1889, 1e-05
        %v1906 = vadd.f32 %v1890, 1e-05
        %v1907 = vadd.f32 %v1891, 1e-05
        %v1908 = vadd.f32 %v1892, 1e-05
        %v1909 = vadd.f32 %v1893, 1e-05
        %v1910 = vadd.f32 %v1894, 1e-05
        %v1911 = vadd.f32 %v1895, 1e-05
        %v1912 = vadd.f32 %v1896, 1e-05
        %v1913 = vadd.f32 %v1897, 1e-05
        %v1914 = vadd.f32 %v1898, 1e-05
        %v1915 = vadd.f32 %v1899, 1e-05
        %v1916 = vadd.f32 %v1900, 1e-05
        %v1917 = vrsqrt.pop %v1901
        %v1918 = vrsqrt.pop %v1902
        %v1919 = vrsqrt.pop %v1903
        %v1920 = vrsqrt.pop %v1904
        %v1921 = vrsqrt.pop %v1905
        %v1922 = vrsqrt.pop %v1906
        %v1923 = vrsqrt.pop %v1907
        %v1924 = vrsqrt.pop %v1908
        %v1925 = vrsqrt.pop %v1909
        %v1926 = vrsqrt.pop %v1910
        %v1927 = vrsqrt.pop %v1911
        %v1928 = vrsqrt.pop %v1912
        %v1929 = vrsqrt.pop %v1913
        %v1930 = vrsqrt.pop %v1914
        %v1931 = vrsqrt.pop %v1915
        %v1932 = vrsqrt.pop %v1916
        %v1933 = vmul.f32 %v1773, %v1917
        %v1934 = vmul.f32 %v1774, %v1917
        %v1935 = vmul.f32 %v1775, %v1918
        %v1936 = vmul.f32 %v1776, %v1918
        %v1937 = vmul.f32 %v1777, %v1919
        %v1938 = vmul.f32 %v1778, %v1919
        %v1939 = vmul.f32 %v1779, %v1920
        %v1940 = vmul.f32 %v1780, %v1920
        %v1941 = vmul.f32 %v1781, %v1921
        %v1942 = vmul.f32 %v1782, %v1921
        %v1943 = vmul.f32 %v1783, %v1922
        %v1944 = vmul.f32 %v1784, %v1922
        %v1945 = vmul.f32 %v1785, %v1923
        %v1946 = vmul.f32 %v1786, %v1923
        %v1947 = vmul.f32 %v1787, %v1924
        %v1948 = vmul.f32 %v1788, %v1924
        %v1949 = vmul.f32 %v1789, %v1925
        %v1950 = vmul.f32 %v1790, %v1925
        %v1951 = vmul.f32 %v1791, %v1926
        %v1952 = vmul.f32 %v1792, %v1926
        %v1953 = vmul.f32 %v1793, %v1927
        %v1954 = vmul.f32 %v1794, %v1927
        %v1955 = vmul.f32 %v1795, %v1928
        %v1956 = vmul.f32 %v1796, %v1928
        %v1957 = vmul.f32 %v1797, %v1929
        %v1958 = vmul.f32 %v1798, %v1929
        %v1959 = vmul.f32 %v1799, %v1930
        %v1960 = vmul.f32 %v1800, %v1930
        %v1961 = vmul.f32 %v1801, %v1931
        %v1962 = vmul.f32 %v1802, %v1931
        %v1963 = vmul.f32 %v1803, %v1932
        %v1964 = vmul.f32 %v1804, %v1932
        %v1965 = vlaneseq
        %v1966 = vshrl.u32 %v1965, 7
        %v1967 = vsub.s32 1, %v1966
        %v1968 = vrot.slane %v1495, %v1967
        %v1969 = vlaneseq
        %v1970 = vshrl.u32 %v1969, 7
        %v1971 = vsub.s32 5, %v1970
        %v1972 = vrot.slane %v1495, %v1971
        %v1975 = vlaneseq
        %v1976 = vshrl.u32 %v1975, 7
        %v1977 = vsub.s32 1, %v1976
        %v1978 = vrot.slane %v1968, %v1977
        %v1979 = vlaneseq
        %v1980 = vshrl.u32 %v1979, 7
        %v1981 = vsub.s32 1, %v1980
        %v1982 = vrot.slane %v1972, %v1981
        %v1983 = vmul.f32 %v1933, %v1978
        %v1984 = vmul.f32 %v1934, %v1982
        %v1985 = vmul.f32 %v1935, %v1978
        %v1986 = vmul.f32 %v1936, %v1982
        %v1987 = vmul.f32 %v1937, %v1978
        %v1988 = vmul.f32 %v1938, %v1982
        %v1989 = vmul.f32 %v1939, %v1978
        %v1990 = vmul.f32 %v1940, %v1982
        %v1991 = vmul.f32 %v1941, %v1978
        %v1992 = vmul.f32 %v1942, %v1982
        %v1993 = vmul.f32 %v1943, %v1978
        %v1994 = vmul.f32 %v1944, %v1982
        %v1995 = vmul.f32 %v1945, %v1978
        %v1996 = vmul.f32 %v1946, %v1982
        %v1997 = vmul.f32 %v1947, %v1978
        %v1998 = vmul.f32 %v1948, %v1982
        %v1999 = vmul.f32 %v1949, %v1978
        %v2000 = vmul.f32 %v1950, %v1982
        %v2001 = vmul.f32 %v1951, %v1978
        %v2002 = vmul.f32 %v1952, %v1982
        %v2003 = vmul.f32 %v1953, %v1978
        %v2004 = vmul.f32 %v1954, %v1982
        %v2005 = vmul.f32 %v1955, %v1978
        %v2006 = vmul.f32 %v1956, %v1982
        %v2007 = vmul.f32 %v1957, %v1978
        %v2008 = vmul.f32 %v1958, %v1982
        %v2009 = vmul.f32 %v1959, %v1978
        %v2010 = vmul.f32 %v1960, %v1982
        %v2011 = vmul.f32 %v1961, %v1978
        %v2012 = vmul.f32 %v1962, %v1982
        %v2013 = vmul.f32 %v1963, %v1978
        %v2014 = vmul.f32 %v1964, %v1982
        %v2015 = vlaneseq
        %v2016 = vshrl.u32 %v2015, 7
        %v2017 = vsub.s32 2, %v2016
        %v2018 = vrot.slane %v1495, %v2017
        %v2019 = vlaneseq
        %v2020 = vshrl.u32 %v2019, 7
        %v2021 = vsub.s32 6, %v2020
        %v2022 = vrot.slane %v1495, %v2021
        %v2025 = vlaneseq
        %v2026 = vshrl.u32 %v2025, 7
        %v2027 = vsub.s32 2, %v2026
        %v2028 = vrot.slane %v2018, %v2027
        %v2029 = vlaneseq
        %v2030 = vshrl.u32 %v2029, 7
        %v2031 = vsub.s32 2, %v2030
        %v2032 = vrot.slane %v2022, %v2031
        %v2033 = vadd.f32 %v1983, %v2028
        %v2034 = vadd.f32 %v1984, %v2032
        %v2035 = vadd.f32 %v1985, %v2028
        %v2036 = vadd.f32 %v1986, %v2032
        %v2037 = vadd.f32 %v1987, %v2028
        %v2038 = vadd.f32 %v1988, %v2032
        %v2039 = vadd.f32 %v1989, %v2028
        %v2040 = vadd.f32 %v1990, %v2032
        %v2041 = vadd.f32 %v1991, %v2028
        %v2042 = vadd.f32 %v1992, %v2032
        %v2043 = vadd.f32 %v1993, %v2028
        %v2044 = vadd.f32 %v1994, %v2032
        %v2045 = vadd.f32 %v1995, %v2028
        %v2046 = vadd.f32 %v1996, %v2032
        %v2047 = vadd.f32 %v1997, %v2028
        %v2048 = vadd.f32 %v1998, %v2032
        %v2049 = vadd.f32 %v1999, %v2028
        %v2050 = vadd.f32 %v2000, %v2032
        %v2051 = vadd.f32 %v2001, %v2028
        %v2052 = vadd.f32 %v2002, %v2032
        %v2053 = vadd.f32 %v2003, %v2028
        %v2054 = vadd.f32 %v2004, %v2032
        %v2055 = vadd.f32 %v2005, %v2028
        %v2056 = vadd.f32 %v2006, %v2032
        %v2057 = vadd.f32 %v2007, %v2028
        %v2058 = vadd.f32 %v2008, %v2032
        %v2059 = vadd.f32 %v2009, %v2028
        %v2060 = vadd.f32 %v2010, %v2032
        %v2061 = vadd.f32 %v2011, %v2028
        %v2062 = vadd.f32 %v2012, %v2032
        %v2063 = vadd.f32 %v2013, %v2028
        %v2064 = vadd.f32 %v2014, %v2032
        %v2065 = vmax.f32 %v2033, 0.0
        %v2066 = vmax.f32 %v2034, 0.0
        %v2067 = vmax.f32 %v2035, 0.0
        %v2068 = vmax.f32 %v2036, 0.0
        %v2069 = vmax.f32 %v2037, 0.0
        %v2070 = vmax.f32 %v2038, 0.0
        %v2071 = vmax.f32 %v2039, 0.0
        %v2072 = vmax.f32 %v2040, 0.0
        %v2073 = vmax.f32 %v2041, 0.0
        %v2074 = vmax.f32 %v2042, 0.0
        %v2075 = vmax.f32 %v2043, 0.0
        %v2076 = vmax.f32 %v2044, 0.0
        %v2077 = vmax.f32 %v2045, 0.0
        %v2078 = vmax.f32 %v2046, 0.0
        %v2079 = vmax.f32 %v2047, 0.0
        %v2080 = vmax.f32 %v2048, 0.0
        %v2081 = vmax.f32 %v2049, 0.0
        %v2082 = vmax.f32 %v2050, 0.0
        %v2083 = vmax.f32 %v2051, 0.0
        %v2084 = vmax.f32 %v2052, 0.0
        %v2085 = vmax.f32 %v2053, 0.0
        %v2086 = vmax.f32 %v2054, 0.0
        %v2087 = vmax.f32 %v2055, 0.0
        %v2088 = vmax.f32 %v2056, 0.0
        %v2089 = vmax.f32 %v2057, 0.0
        %v2090 = vmax.f32 %v2058, 0.0
        %v2091 = vmax.f32 %v2059, 0.0
        %v2092 = vmax.f32 %v2060, 0.0
        %v2093 = vmax.f32 %v2061, 0.0
        %v2094 = vmax.f32 %v2062, 0.0
        %v2095 = vmax.f32 %v2063, 0.0
        %v2096 = vmax.f32 %v2064, 0.0
        %v2097 = vpack.c.bf16 %v2067, %v2065
        %v2098 = vpack.c.bf16 %v2068, %v2066
        %v2099 = vpack.c.bf16 %v2071, %v2069
        %v2100 = vpack.c.bf16 %v2072, %v2070
        %v2101 = vpack.c.bf16 %v2075, %v2073
        %v2102 = vpack.c.bf16 %v2076, %v2074
        %v2103 = vpack.c.bf16 %v2079, %v2077
        %v2104 = vpack.c.bf16 %v2080, %v2078
        %v2105 = vpack.c.bf16 %v2083, %v2081
        %v2106 = vpack.c.bf16 %v2084, %v2082
        %v2107 = vpack.c.bf16 %v2087, %v2085
        %v2108 = vpack.c.bf16 %v2088, %v2086
        %v2109 = vpack.c.bf16 %v2091, %v2089
        %v2110 = vpack.c.bf16 %v2092, %v2090
        %v2111 = vpack.c.bf16 %v2095, %v2093
        %v2112 = vpack.c.bf16 %v2096, %v2094
        %v2113 = vld [vmem:[%s9] sm:$0xff]
        %v2114 = vld [vmem:[%s9 + $0x8] sm:$0xff]
        %v2115 = vld [vmem:[%s9 + $0x10] sm:$0xff]
        %v2116 = vld [vmem:[%s9 + $0x18] sm:$0xff]
        %v2117 = vld [vmem:[%s9 + $0x20] sm:$0xff]
        %v2118 = vld [vmem:[%s9 + $0x28] sm:$0xff]
        %v2119 = vld [vmem:[%s9 + $0x30] sm:$0xff]
        %v2120 = vld [vmem:[%s9 + $0x38] sm:$0xff]
        %v2121 = vld [vmem:[%s9 + $0x40] sm:$0xff]
        %v2122 = vld [vmem:[%s9 + $0x48] sm:$0xff]
        %v2123 = vld [vmem:[%s9 + $0x50] sm:$0xff]
        %v2124 = vld [vmem:[%s9 + $0x58] sm:$0xff]
        %v2125 = vld [vmem:[%s9 + $0x60] sm:$0xff]
        %v2126 = vld [vmem:[%s9 + $0x68] sm:$0xff]
        %v2127 = vld [vmem:[%s9 + $0x70] sm:$0xff]
        %v2128 = vld [vmem:[%s9 + $0x78] sm:$0xff]
        %v2129 = vld [vmem:[%s9 + $0x80] sm:$0xff]
        %v2130 = vld [vmem:[%s9 + $0x88] sm:$0xff]
        %v2131 = vld [vmem:[%s9 + $0x90] sm:$0xff]
        %v2132 = vld [vmem:[%s9 + $0x98] sm:$0xff]
        %v2133 = vld [vmem:[%s9 + $0xa0] sm:$0xff]
        %v2134 = vld [vmem:[%s9 + $0xa8] sm:$0xff]
        %v2135 = vld [vmem:[%s9 + $0xb0] sm:$0xff]
        %v2136 = vld [vmem:[%s9 + $0xb8] sm:$0xff]
        %v2137 = vld [vmem:[%s9 + $0xc0] sm:$0xff]
        %v2138 = vld [vmem:[%s9 + $0xc8] sm:$0xff]
        %v2139 = vld [vmem:[%s9 + $0xd0] sm:$0xff]
        %v2140 = vld [vmem:[%s9 + $0xd8] sm:$0xff]
        %v2141 = vld [vmem:[%s9 + $0xe0] sm:$0xff]
        %v2142 = vld [vmem:[%s9 + $0xe8] sm:$0xff]
        %v2143 = vld [vmem:[%s9 + $0xf0] sm:$0xff]
        %v2144 = vld [vmem:[%s9 + $0xf8] sm:$0xff]
        %v2145 = vld [vmem:[%s10] sm:$0x77]
        %v2146 = vld [vmem:[%s11] sm:$0xff]
        %v2147 = vld [vmem:[%s11 + $0x8] sm:$0xff]
        %v2148 = vld [vmem:[%s11 + $0x10] sm:$0xff]
        %v2149 = vld [vmem:[%s11 + $0x18] sm:$0xff]
        %v2150 = vld [vmem:[%s11 + $0x20] sm:$0xff]
        %v2151 = vld [vmem:[%s11 + $0x28] sm:$0xff]
        %v2152 = vld [vmem:[%s11 + $0x30] sm:$0xff]
        %v2153 = vld [vmem:[%s11 + $0x38] sm:$0xff]
        %v2154 = vld [vmem:[%s11 + $0x40] sm:$0xff]
        %v2155 = vld [vmem:[%s11 + $0x48] sm:$0xff]
        %v2156 = vld [vmem:[%s11 + $0x50] sm:$0xff]
        %v2157 = vld [vmem:[%s11 + $0x58] sm:$0xff]
        %v2158 = vld [vmem:[%s11 + $0x60] sm:$0xff]
        %v2159 = vld [vmem:[%s11 + $0x68] sm:$0xff]
        %v2160 = vld [vmem:[%s11 + $0x70] sm:$0xff]
        %v2161 = vld [vmem:[%s11 + $0x78] sm:$0xff]
        %v2162 = vld [vmem:[%s11 + $0x80] sm:$0xff]
        %v2163 = vld [vmem:[%s11 + $0x88] sm:$0xff]
        %v2164 = vld [vmem:[%s11 + $0x90] sm:$0xff]
        %v2165 = vld [vmem:[%s11 + $0x98] sm:$0xff]
        %v2166 = vld [vmem:[%s11 + $0xa0] sm:$0xff]
        %v2167 = vld [vmem:[%s11 + $0xa8] sm:$0xff]
        %v2168 = vld [vmem:[%s11 + $0xb0] sm:$0xff]
        %v2169 = vld [vmem:[%s11 + $0xb8] sm:$0xff]
        %v2170 = vld [vmem:[%s11 + $0xc0] sm:$0xff]
        %v2171 = vld [vmem:[%s11 + $0xc8] sm:$0xff]
        %v2172 = vld [vmem:[%s11 + $0xd0] sm:$0xff]
        %v2173 = vld [vmem:[%s11 + $0xd8] sm:$0xff]
        %v2174 = vld [vmem:[%s11 + $0xe0] sm:$0xff]
        %v2175 = vld [vmem:[%s11 + $0xe8] sm:$0xff]
        %v2176 = vld [vmem:[%s11 + $0xf0] sm:$0xff]
        %v2177 = vld [vmem:[%s11 + $0xf8] sm:$0xff]
        %v2178 = vld [vmem:[%s12] sm:$0x77]
        %v2180 = vlaneseq
        %v2181 = vshrl.u32 %v2180, 7
        %v2182 = vsub.s32 0, %v2181
        %v2183 = vrot.slane %v2145, %v2182
        %v2184 = vlaneseq
        %v2185 = vshrl.u32 %v2184, 7
        %v2186 = vsub.s32 4, %v2185
        %v2187 = vrot.slane %v2145, %v2186
        %v2190 = vlaneseq
        %v2191 = vshrl.u32 %v2190, 7
        %v2192 = vsub.s32 0, %v2191
        %v2193 = vrot.slane %v2183, %v2192
        %v2194 = vlaneseq
        %v2195 = vshrl.u32 %v2194, 7
        %v2196 = vsub.s32 0, %v2195
        %v2197 = vrot.slane %v2187, %v2196
        %v2230 = vunpack.c.l.b16 %v2113
        %v2231 = vunpack.c.h.b16 %v2113
        %v2232 = vunpack.c.l.b16 %v2114
        %v2233 = vunpack.c.h.b16 %v2114
        %v2234 = vunpack.c.l.b16 %v2115
        %v2235 = vunpack.c.h.b16 %v2115
        %v2236 = vunpack.c.l.b16 %v2116
        %v2237 = vunpack.c.h.b16 %v2116
        %v2238 = vunpack.c.l.b16 %v2117
        %v2239 = vunpack.c.h.b16 %v2117
        %v2240 = vunpack.c.l.b16 %v2118
        %v2241 = vunpack.c.h.b16 %v2118
        %v2242 = vunpack.c.l.b16 %v2119
        %v2243 = vunpack.c.h.b16 %v2119
        %v2244 = vunpack.c.l.b16 %v2120
        %v2245 = vunpack.c.h.b16 %v2120
        %v2246 = vunpack.c.l.b16 %v2121
        %v2247 = vunpack.c.h.b16 %v2121
        %v2248 = vunpack.c.l.b16 %v2122
        %v2249 = vunpack.c.h.b16 %v2122
        %v2250 = vunpack.c.l.b16 %v2123
        %v2251 = vunpack.c.h.b16 %v2123
        %v2252 = vunpack.c.l.b16 %v2124
        %v2253 = vunpack.c.h.b16 %v2124
        %v2254 = vunpack.c.l.b16 %v2125
        %v2255 = vunpack.c.h.b16 %v2125
        %v2256 = vunpack.c.l.b16 %v2126
        %v2257 = vunpack.c.h.b16 %v2126
        %v2258 = vunpack.c.l.b16 %v2127
        %v2259 = vunpack.c.h.b16 %v2127
        %v2260 = vunpack.c.l.b16 %v2128
        %v2261 = vunpack.c.h.b16 %v2128
        %v2262 = vunpack.c.l.b16 %v2129
        %v2263 = vunpack.c.h.b16 %v2129
        %v2264 = vunpack.c.l.b16 %v2130
        %v2265 = vunpack.c.h.b16 %v2130
        %v2266 = vunpack.c.l.b16 %v2131
        %v2267 = vunpack.c.h.b16 %v2131
        %v2268 = vunpack.c.l.b16 %v2132
        %v2269 = vunpack.c.h.b16 %v2132
        %v2270 = vunpack.c.l.b16 %v2133
        %v2271 = vunpack.c.h.b16 %v2133
        %v2272 = vunpack.c.l.b16 %v2134
        %v2273 = vunpack.c.h.b16 %v2134
        %v2274 = vunpack.c.l.b16 %v2135
        %v2275 = vunpack.c.h.b16 %v2135
        %v2276 = vunpack.c.l.b16 %v2136
        %v2277 = vunpack.c.h.b16 %v2136
        %v2278 = vunpack.c.l.b16 %v2137
        %v2279 = vunpack.c.h.b16 %v2137
        %v2280 = vunpack.c.l.b16 %v2138
        %v2281 = vunpack.c.h.b16 %v2138
        %v2282 = vunpack.c.l.b16 %v2139
        %v2283 = vunpack.c.h.b16 %v2139
        %v2284 = vunpack.c.l.b16 %v2140
        %v2285 = vunpack.c.h.b16 %v2140
        %v2286 = vunpack.c.l.b16 %v2141
        %v2287 = vunpack.c.h.b16 %v2141
        %v2288 = vunpack.c.l.b16 %v2142
        %v2289 = vunpack.c.h.b16 %v2142
        %v2290 = vunpack.c.l.b16 %v2143
        %v2291 = vunpack.c.h.b16 %v2143
        %v2292 = vunpack.c.l.b16 %v2144
        %v2293 = vunpack.c.h.b16 %v2144
        %v2294 = vpack.c.b16 %v2232, %v2230
        %v2295 = vpack.c.b16 %v2233, %v2231
        %v2296 = vpack.c.b16 %v2236, %v2234
        %v2297 = vpack.c.b16 %v2237, %v2235
        %v2298 = vpack.c.b16 %v2240, %v2238
        %v2299 = vpack.c.b16 %v2241, %v2239
        %v2300 = vpack.c.b16 %v2244, %v2242
        %v2301 = vpack.c.b16 %v2245, %v2243
        %v2302 = vpack.c.b16 %v2248, %v2246
        %v2303 = vpack.c.b16 %v2249, %v2247
        %v2304 = vpack.c.b16 %v2252, %v2250
        %v2305 = vpack.c.b16 %v2253, %v2251
        %v2306 = vpack.c.b16 %v2256, %v2254
        %v2307 = vpack.c.b16 %v2257, %v2255
        %v2308 = vpack.c.b16 %v2260, %v2258
        %v2309 = vpack.c.b16 %v2261, %v2259
        %v2310 = vpack.c.b16 %v2264, %v2262
        %v2311 = vpack.c.b16 %v2265, %v2263
        %v2312 = vpack.c.b16 %v2268, %v2266
        %v2313 = vpack.c.b16 %v2269, %v2267
        %v2314 = vpack.c.b16 %v2272, %v2270
        %v2315 = vpack.c.b16 %v2273, %v2271
        %v2316 = vpack.c.b16 %v2276, %v2274
        %v2317 = vpack.c.b16 %v2277, %v2275
        %v2318 = vpack.c.b16 %v2280, %v2278
        %v2319 = vpack.c.b16 %v2281, %v2279
        %v2320 = vpack.c.b16 %v2284, %v2282
        %v2321 = vpack.c.b16 %v2285, %v2283
        %v2322 = vpack.c.b16 %v2288, %v2286
        %v2323 = vpack.c.b16 %v2289, %v2287
        %v2324 = vpack.c.b16 %v2292, %v2290
        %v2325 = vpack.c.b16 %v2293, %v2291
        %2358 = vmatprep.subr.bf16.mxu0 %v2295
        %2359 = vmatpush1.bf16.msra.mxu0 %v2294
        %2360 = vmatprep.subr.bf16.mxu0 %v2297
        %2361 = vmatpush1.bf16.msra.mxu0 %v2296
        %2362 = vmatprep.subr.bf16.mxu0 %v2299
        %2363 = vmatpush1.bf16.msra.mxu0 %v2298
        %2364 = vmatprep.subr.bf16.mxu0 %v2301
        %2365 = vmatpush1.bf16.msra.mxu0 %v2300
        %2366 = vmatprep.subr.bf16.mxu0 %v2303
        %2367 = vmatpush1.bf16.msra.mxu0 %v2302
        %2368 = vmatprep.subr.bf16.mxu0 %v2305
        %2369 = vmatpush1.bf16.msra.mxu0 %v2304
        %2370 = vmatprep.subr.bf16.mxu0 %v2307
        %2371 = vmatpush1.bf16.msra.mxu0 %v2306
        %2372 = vmatprep.subr.bf16.mxu0 %v2309
        %2373 = vmatpush1.bf16.msra.mxu0 %v2308
        %2374 = vmatprep.subr.bf16.mxu0 %v2311
        %2375 = vmatpush1.bf16.msra.mxu0 %v2310
        %2376 = vmatprep.subr.bf16.mxu0 %v2313
        %2377 = vmatpush1.bf16.msra.mxu0 %v2312
        %2378 = vmatprep.subr.bf16.mxu0 %v2315
        %2379 = vmatpush1.bf16.msra.mxu0 %v2314
        %2380 = vmatprep.subr.bf16.mxu0 %v2317
        %2381 = vmatpush1.bf16.msra.mxu0 %v2316
        %2382 = vmatprep.subr.bf16.mxu0 %v2319
        %2383 = vmatpush1.bf16.msra.mxu0 %v2318
        %2384 = vmatprep.subr.bf16.mxu0 %v2321
        %2385 = vmatpush1.bf16.msra.mxu0 %v2320
        %2386 = vmatprep.subr.bf16.mxu0 %v2323
        %2387 = vmatpush1.bf16.msra.mxu0 %v2322
        %2388 = vmatprep.subr.bf16.mxu0 %v2325
        %2389 = vmatpush1.bf16.msra.mxu0 %v2324
        %2390 = vmatprep.mubr.bf16.mxu0 %v2098
        %2391 = vmatmul.mubr.bf16.gmra.mrb[0].mxu0 %v2097
        %v2392 = vpop.f32.mrb[0].mxu0
        %v2393 = vadd.f32 %v2193, %v2392
        %v2394 = vpop.f32.mrb[0].mxu0
        %v2395 = vadd.f32 %v2197, %v2394
        %v2396 = vpop.f32.mrb[0].mxu0
        %v2397 = vadd.f32 %v2193, %v2396
        %v2398 = vpop.f32.mrb[0].mxu0
        %v2399 = vadd.f32 %v2197, %v2398
        %2400 = vmatprep.mubr.bf16.mxu0 %v2100
        %2401 = vmatmul.mubr.bf16.gmra.mrb[0].mxu0 %v2099
        %v2402 = vpop.f32.mrb[0].mxu0
        %v2403 = vadd.f32 %v2193, %v2402
        %v2404 = vpop.f32.mrb[0].mxu0
        %v2405 = vadd.f32 %v2197, %v2404
        %v2406 = vpop.f32.mrb[0].mxu0
        %v2407 = vadd.f32 %v2193, %v2406
        %v2408 = vpop.f32.mrb[0].mxu0
        %v2409 = vadd.f32 %v2197, %v2408
        %2410 = vmatprep.mubr.bf16.mxu0 %v2102
        %2411 = vmatmul.mubr.bf16.gmra.mrb[0].mxu0 %v2101
        %v2412 = vpop.f32.mrb[0].mxu0
        %v2413 = vadd.f32 %v2193, %v2412
        %v2414 = vpop.f32.mrb[0].mxu0
        %v2415 = vadd.f32 %v2197, %v2414
        %v2416 = vpop.f32.mrb[0].mxu0
        %v2417 = vadd.f32 %v2193, %v2416
        %v2418 = vpop.f32.mrb[0].mxu0
        %v2419 = vadd.f32 %v2197, %v2418
        %2420 = vmatprep.mubr.bf16.mxu0 %v2104
        %2421 = vmatmul.mubr.bf16.gmra.mrb[0].mxu0 %v2103
        %v2422 = vpop.f32.mrb[0].mxu0
        %v2423 = vadd.f32 %v2193, %v2422
        %v2424 = vpop.f32.mrb[0].mxu0
        %v2425 = vadd.f32 %v2197, %v2424
        %v2426 = vpop.f32.mrb[0].mxu0
        %v2427 = vadd.f32 %v2193, %v2426
        %v2428 = vpop.f32.mrb[0].mxu0
        %v2429 = vadd.f32 %v2197, %v2428
        %2430 = vmatprep.mubr.bf16.mxu0 %v2106
        %2431 = vmatmul.mubr.bf16.gmra.mrb[0].mxu0 %v2105
        %v2432 = vpop.f32.mrb[0].mxu0
        %v2433 = vadd.f32 %v2193, %v2432
        %v2434 = vpop.f32.mrb[0].mxu0
        %v2435 = vadd.f32 %v2197, %v2434
        %v2436 = vpop.f32.mrb[0].mxu0
        %v2437 = vadd.f32 %v2193, %v2436
        %v2438 = vpop.f32.mrb[0].mxu0
        %v2439 = vadd.f32 %v2197, %v2438
        %2440 = vmatprep.mubr.bf16.mxu0 %v2108
        %2441 = vmatmul.mubr.bf16.gmra.mrb[0].mxu0 %v2107
        %v2442 = vpop.f32.mrb[0].mxu0
        %v2443 = vadd.f32 %v2193, %v2442
        %v2444 = vpop.f32.mrb[0].mxu0
        %v2445 = vadd.f32 %v2197, %v2444
        %v2446 = vpop.f32.mrb[0].mxu0
        %v2447 = vadd.f32 %v2193, %v2446
        %v2448 = vpop.f32.mrb[0].mxu0
        %v2449 = vadd.f32 %v2197, %v2448
        %2450 = vmatprep.mubr.bf16.mxu0 %v2110
        %2451 = vmatmul.mubr.bf16.gmra.mrb[0].mxu0 %v2109
        %v2452 = vpop.f32.mrb[0].mxu0
        %v2453 = vadd.f32 %v2193, %v2452
        %v2454 = vpop.f32.mrb[0].mxu0
        %v2455 = vadd.f32 %v2197, %v2454
        %v2456 = vpop.f32.mrb[0].mxu0
        %v2457 = vadd.f32 %v2193, %v2456
        %v2458 = vpop.f32.mrb[0].mxu0
        %v2459 = vadd.f32 %v2197, %v2458
        %2460 = vmatprep.mubr.bf16.mxu0 %v2112
        %2461 = vmatmul.mubr.bf16.gmra.mrb[0].mxu0 %v2111
        %v2462 = vpop.f32.mrb[0].mxu0
        %v2463 = vadd.f32 %v2193, %v2462
        %v2464 = vpop.f32.mrb[0].mxu0
        %v2465 = vadd.f32 %v2197, %v2464
        %v2466 = vpop.f32.mrb[0].mxu0
        %v2467 = vadd.f32 %v2193, %v2466
        %v2468 = vpop.f32.mrb[0].mxu0
        %v2469 = vadd.f32 %v2197, %v2468
        %2470 = vdwg.mxu0
        %v2471 = vadd.f32 %v2393, %v2395
        %2472 = vadd.xlane.f32.xlu0 %v2471
        %v2473 = vpop.xlane.xlu0 %2472
        %v2474 = vadd.f32 %v2397, %v2399
        %2475 = vadd.xlane.f32.xlu0 %v2474
        %v2476 = vpop.xlane.xlu0 %2475
        %v2477 = vadd.f32 %v2403, %v2405
        %2478 = vadd.xlane.f32.xlu0 %v2477
        %v2479 = vpop.xlane.xlu0 %2478
        %v2480 = vadd.f32 %v2407, %v2409
        %2481 = vadd.xlane.f32.xlu0 %v2480
        %v2482 = vpop.xlane.xlu0 %2481
        %v2483 = vadd.f32 %v2413, %v2415
        %2484 = vadd.xlane.f32.xlu0 %v2483
        %v2485 = vpop.xlane.xlu0 %2484
        %v2486 = vadd.f32 %v2417, %v2419
        %2487 = vadd.xlane.f32.xlu0 %v2486
        %v2488 = vpop.xlane.xlu0 %2487
        %v2489 = vadd.f32 %v2423, %v2425
        %2490 = vadd.xlane.f32.xlu0 %v2489
        %v2491 = vpop.xlane.xlu0 %2490
        %v2492 = vadd.f32 %v2427, %v2429
        %2493 = vadd.xlane.f32.xlu0 %v2492
        %v2494 = vpop.xlane.xlu0 %2493
        %v2495 = vadd.f32 %v2433, %v2435
        %2496 = vadd.xlane.f32.xlu0 %v2495
        %v2497 = vpop.xlane.xlu0 %2496
        %v2498 = vadd.f32 %v2437, %v2439
        %2499 = vadd.xlane.f32.xlu0 %v2498
        %v2500 = vpop.xlane.xlu0 %2499
        %v2501 = vadd.f32 %v2443, %v2445
        %2502 = vadd.xlane.f32.xlu0 %v2501
        %v2503 = vpop.xlane.xlu0 %2502
        %v2504 = vadd.f32 %v2447, %v2449
        %2505 = vadd.xlane.f32.xlu0 %v2504
        %v2506 = vpop.xlane.xlu0 %2505
        %v2507 = vadd.f32 %v2453, %v2455
        %2508 = vadd.xlane.f32.xlu0 %v2507
        %v2509 = vpop.xlane.xlu0 %2508
        %v2510 = vadd.f32 %v2457, %v2459
        %2511 = vadd.xlane.f32.xlu0 %v2510
        %v2512 = vpop.xlane.xlu0 %2511
        %v2513 = vadd.f32 %v2463, %v2465
        %2514 = vadd.xlane.f32.xlu0 %v2513
        %v2515 = vpop.xlane.xlu0 %2514
        %v2516 = vadd.f32 %v2467, %v2469
        %2517 = vadd.xlane.f32.xlu0 %v2516
        %v2518 = vpop.xlane.xlu0 %2517
        %v2519 = vmul.f32 %v2473, %v1756
        %v2520 = vmul.f32 %v2476, %v1756
        %v2521 = vmul.f32 %v2479, %v1756
        %v2522 = vmul.f32 %v2482, %v1756
        %v2523 = vmul.f32 %v2485, %v1756
        %v2524 = vmul.f32 %v2488, %v1756
        %v2525 = vmul.f32 %v2491, %v1756
        %v2526 = vmul.f32 %v2494, %v1756
        %v2527 = vmul.f32 %v2497, %v1756
        %v2528 = vmul.f32 %v2500, %v1756
        %v2529 = vmul.f32 %v2503, %v1756
        %v2530 = vmul.f32 %v2506, %v1756
        %v2531 = vmul.f32 %v2509, %v1756
        %v2532 = vmul.f32 %v2512, %v1756
        %v2533 = vmul.f32 %v2515, %v1756
        %v2534 = vmul.f32 %v2518, %v1756
        %v2535 = vsub.f32 %v2393, %v2519
        %v2536 = vsub.f32 %v2395, %v2519
        %v2537 = vsub.f32 %v2397, %v2520
        %v2538 = vsub.f32 %v2399, %v2520
        %v2539 = vsub.f32 %v2403, %v2521
        %v2540 = vsub.f32 %v2405, %v2521
        %v2541 = vsub.f32 %v2407, %v2522
        %v2542 = vsub.f32 %v2409, %v2522
        %v2543 = vsub.f32 %v2413, %v2523
        %v2544 = vsub.f32 %v2415, %v2523
        %v2545 = vsub.f32 %v2417, %v2524
        %v2546 = vsub.f32 %v2419, %v2524
        %v2547 = vsub.f32 %v2423, %v2525
        %v2548 = vsub.f32 %v2425, %v2525
        %v2549 = vsub.f32 %v2427, %v2526
        %v2550 = vsub.f32 %v2429, %v2526
        %v2551 = vsub.f32 %v2433, %v2527
        %v2552 = vsub.f32 %v2435, %v2527
        %v2553 = vsub.f32 %v2437, %v2528
        %v2554 = vsub.f32 %v2439, %v2528
        %v2555 = vsub.f32 %v2443, %v2529
        %v2556 = vsub.f32 %v2445, %v2529
        %v2557 = vsub.f32 %v2447, %v2530
        %v2558 = vsub.f32 %v2449, %v2530
        %v2559 = vsub.f32 %v2453, %v2531
        %v2560 = vsub.f32 %v2455, %v2531
        %v2561 = vsub.f32 %v2457, %v2532
        %v2562 = vsub.f32 %v2459, %v2532
        %v2563 = vsub.f32 %v2463, %v2533
        %v2564 = vsub.f32 %v2465, %v2533
        %v2565 = vsub.f32 %v2467, %v2534
        %v2566 = vsub.f32 %v2469, %v2534
        %v2567 = vmul.f32 %v2535, %v2535
        %v2568 = vmul.f32 %v2536, %v2536
        %v2569 = vmul.f32 %v2537, %v2537
        %v2570 = vmul.f32 %v2538, %v2538
        %v2571 = vmul.f32 %v2539, %v2539
        %v2572 = vmul.f32 %v2540, %v2540
        %v2573 = vmul.f32 %v2541, %v2541
        %v2574 = vmul.f32 %v2542, %v2542
        %v2575 = vmul.f32 %v2543, %v2543
        %v2576 = vmul.f32 %v2544, %v2544
        %v2577 = vmul.f32 %v2545, %v2545
        %v2578 = vmul.f32 %v2546, %v2546
        %v2579 = vmul.f32 %v2547, %v2547
        %v2580 = vmul.f32 %v2548, %v2548
        %v2581 = vmul.f32 %v2549, %v2549
        %v2582 = vmul.f32 %v2550, %v2550
        %v2583 = vmul.f32 %v2551, %v2551
        %v2584 = vmul.f32 %v2552, %v2552
        %v2585 = vmul.f32 %v2553, %v2553
        %v2586 = vmul.f32 %v2554, %v2554
        %v2587 = vmul.f32 %v2555, %v2555
        %v2588 = vmul.f32 %v2556, %v2556
        %v2589 = vmul.f32 %v2557, %v2557
        %v2590 = vmul.f32 %v2558, %v2558
        %v2591 = vmul.f32 %v2559, %v2559
        %v2592 = vmul.f32 %v2560, %v2560
        %v2593 = vmul.f32 %v2561, %v2561
        %v2594 = vmul.f32 %v2562, %v2562
        %v2595 = vmul.f32 %v2563, %v2563
        %v2596 = vmul.f32 %v2564, %v2564
        %v2597 = vmul.f32 %v2565, %v2565
        %v2598 = vmul.f32 %v2566, %v2566
        %v2599 = vadd.f32 %v2567, %v2568
        %2600 = vadd.xlane.f32.xlu0 %v2599
        %v2601 = vpop.xlane.xlu0 %2600
        %v2602 = vadd.f32 %v2569, %v2570
        %2603 = vadd.xlane.f32.xlu0 %v2602
        %v2604 = vpop.xlane.xlu0 %2603
        %v2605 = vadd.f32 %v2571, %v2572
        %2606 = vadd.xlane.f32.xlu0 %v2605
        %v2607 = vpop.xlane.xlu0 %2606
        %v2608 = vadd.f32 %v2573, %v2574
        %2609 = vadd.xlane.f32.xlu0 %v2608
        %v2610 = vpop.xlane.xlu0 %2609
        %v2611 = vadd.f32 %v2575, %v2576
        %2612 = vadd.xlane.f32.xlu0 %v2611
        %v2613 = vpop.xlane.xlu0 %2612
        %v2614 = vadd.f32 %v2577, %v2578
        %2615 = vadd.xlane.f32.xlu0 %v2614
        %v2616 = vpop.xlane.xlu0 %2615
        %v2617 = vadd.f32 %v2579, %v2580
        %2618 = vadd.xlane.f32.xlu0 %v2617
        %v2619 = vpop.xlane.xlu0 %2618
        %v2620 = vadd.f32 %v2581, %v2582
        %2621 = vadd.xlane.f32.xlu0 %v2620
        %v2622 = vpop.xlane.xlu0 %2621
        %v2623 = vadd.f32 %v2583, %v2584
        %2624 = vadd.xlane.f32.xlu0 %v2623
        %v2625 = vpop.xlane.xlu0 %2624
        %v2626 = vadd.f32 %v2585, %v2586
        %2627 = vadd.xlane.f32.xlu0 %v2626
        %v2628 = vpop.xlane.xlu0 %2627
        %v2629 = vadd.f32 %v2587, %v2588
        %2630 = vadd.xlane.f32.xlu0 %v2629
        %v2631 = vpop.xlane.xlu0 %2630
        %v2632 = vadd.f32 %v2589, %v2590
        %2633 = vadd.xlane.f32.xlu0 %v2632
        %v2634 = vpop.xlane.xlu0 %2633
        %v2635 = vadd.f32 %v2591, %v2592
        %2636 = vadd.xlane.f32.xlu0 %v2635
        %v2637 = vpop.xlane.xlu0 %2636
        %v2638 = vadd.f32 %v2593, %v2594
        %2639 = vadd.xlane.f32.xlu0 %v2638
        %v2640 = vpop.xlane.xlu0 %2639
        %v2641 = vadd.f32 %v2595, %v2596
        %2642 = vadd.xlane.f32.xlu0 %v2641
        %v2643 = vpop.xlane.xlu0 %2642
        %v2644 = vadd.f32 %v2597, %v2598
        %2645 = vadd.xlane.f32.xlu0 %v2644
        %v2646 = vpop.xlane.xlu0 %2645
        %v2647 = vmul.f32 %v2601, %v1756
        %v2648 = vmul.f32 %v2604, %v1756
        %v2649 = vmul.f32 %v2607, %v1756
        %v2650 = vmul.f32 %v2610, %v1756
        %v2651 = vmul.f32 %v2613, %v1756
        %v2652 = vmul.f32 %v2616, %v1756
        %v2653 = vmul.f32 %v2619, %v1756
        %v2654 = vmul.f32 %v2622, %v1756
        %v2655 = vmul.f32 %v2625, %v1756
        %v2656 = vmul.f32 %v2628, %v1756
        %v2657 = vmul.f32 %v2631, %v1756
        %v2658 = vmul.f32 %v2634, %v1756
        %v2659 = vmul.f32 %v2637, %v1756
        %v2660 = vmul.f32 %v2640, %v1756
        %v2661 = vmul.f32 %v2643, %v1756
        %v2662 = vmul.f32 %v2646, %v1756
        %v2663 = vadd.f32 %v2647, 1e-05
        %v2664 = vadd.f32 %v2648, 1e-05
        %v2665 = vadd.f32 %v2649, 1e-05
        %v2666 = vadd.f32 %v2650, 1e-05
        %v2667 = vadd.f32 %v2651, 1e-05
        %v2668 = vadd.f32 %v2652, 1e-05
        %v2669 = vadd.f32 %v2653, 1e-05
        %v2670 = vadd.f32 %v2654, 1e-05
        %v2671 = vadd.f32 %v2655, 1e-05
        %v2672 = vadd.f32 %v2656, 1e-05
        %v2673 = vadd.f32 %v2657, 1e-05
        %v2674 = vadd.f32 %v2658, 1e-05
        %v2675 = vadd.f32 %v2659, 1e-05
        %v2676 = vadd.f32 %v2660, 1e-05
        %v2677 = vadd.f32 %v2661, 1e-05
        %v2678 = vadd.f32 %v2662, 1e-05
        %v2679 = vrsqrt.pop %v2663
        %v2680 = vrsqrt.pop %v2664
        %v2681 = vrsqrt.pop %v2665
        %v2682 = vrsqrt.pop %v2666
        %v2683 = vrsqrt.pop %v2667
        %v2684 = vrsqrt.pop %v2668
        %v2685 = vrsqrt.pop %v2669
        %v2686 = vrsqrt.pop %v2670
        %v2687 = vrsqrt.pop %v2671
        %v2688 = vrsqrt.pop %v2672
        %v2689 = vrsqrt.pop %v2673
        %v2690 = vrsqrt.pop %v2674
        %v2691 = vrsqrt.pop %v2675
        %v2692 = vrsqrt.pop %v2676
        %v2693 = vrsqrt.pop %v2677
        %v2694 = vrsqrt.pop %v2678
        %v2695 = vmul.f32 %v2535, %v2679
        %v2696 = vmul.f32 %v2536, %v2679
        %v2697 = vmul.f32 %v2537, %v2680
        %v2698 = vmul.f32 %v2538, %v2680
        %v2699 = vmul.f32 %v2539, %v2681
        %v2700 = vmul.f32 %v2540, %v2681
        %v2701 = vmul.f32 %v2541, %v2682
        %v2702 = vmul.f32 %v2542, %v2682
        %v2703 = vmul.f32 %v2543, %v2683
        %v2704 = vmul.f32 %v2544, %v2683
        %v2705 = vmul.f32 %v2545, %v2684
        %v2706 = vmul.f32 %v2546, %v2684
        %v2707 = vmul.f32 %v2547, %v2685
        %v2708 = vmul.f32 %v2548, %v2685
        %v2709 = vmul.f32 %v2549, %v2686
        %v2710 = vmul.f32 %v2550, %v2686
        %v2711 = vmul.f32 %v2551, %v2687
        %v2712 = vmul.f32 %v2552, %v2687
        %v2713 = vmul.f32 %v2553, %v2688
        %v2714 = vmul.f32 %v2554, %v2688
        %v2715 = vmul.f32 %v2555, %v2689
        %v2716 = vmul.f32 %v2556, %v2689
        %v2717 = vmul.f32 %v2557, %v2690
        %v2718 = vmul.f32 %v2558, %v2690
        %v2719 = vmul.f32 %v2559, %v2691
        %v2720 = vmul.f32 %v2560, %v2691
        %v2721 = vmul.f32 %v2561, %v2692
        %v2722 = vmul.f32 %v2562, %v2692
        %v2723 = vmul.f32 %v2563, %v2693
        %v2724 = vmul.f32 %v2564, %v2693
        %v2725 = vmul.f32 %v2565, %v2694
        %v2726 = vmul.f32 %v2566, %v2694
        %v2727 = vlaneseq
        %v2728 = vshrl.u32 %v2727, 7
        %v2729 = vsub.s32 1, %v2728
        %v2730 = vrot.slane %v2145, %v2729
        %v2731 = vlaneseq
        %v2732 = vshrl.u32 %v2731, 7
        %v2733 = vsub.s32 5, %v2732
        %v2734 = vrot.slane %v2145, %v2733
        %v2737 = vlaneseq
        %v2738 = vshrl.u32 %v2737, 7
        %v2739 = vsub.s32 1, %v2738
        %v2740 = vrot.slane %v2730, %v2739
        %v2741 = vlaneseq
        %v2742 = vshrl.u32 %v2741, 7
        %v2743 = vsub.s32 1, %v2742
        %v2744 = vrot.slane %v2734, %v2743
        %v2745 = vmul.f32 %v2695, %v2740
        %v2746 = vmul.f32 %v2696, %v2744
        %v2747 = vmul.f32 %v2697, %v2740
        %v2748 = vmul.f32 %v2698, %v2744
        %v2749 = vmul.f32 %v2699, %v2740
        %v2750 = vmul.f32 %v2700, %v2744
        %v2751 = vmul.f32 %v2701, %v2740
        %v2752 = vmul.f32 %v2702, %v2744
        %v2753 = vmul.f32 %v2703, %v2740
        %v2754 = vmul.f32 %v2704, %v2744
        %v2755 = vmul.f32 %v2705, %v2740
        %v2756 = vmul.f32 %v2706, %v2744
        %v2757 = vmul.f32 %v2707, %v2740
        %v2758 = vmul.f32 %v2708, %v2744
        %v2759 = vmul.f32 %v2709, %v2740
        %v2760 = vmul.f32 %v2710, %v2744
        %v2761 = vmul.f32 %v2711, %v2740
        %v2762 = vmul.f32 %v2712, %v2744
        %v2763 = vmul.f32 %v2713, %v2740
        %v2764 = vmul.f32 %v2714, %v2744
        %v2765 = vmul.f32 %v2715, %v2740
        %v2766 = vmul.f32 %v2716, %v2744
        %v2767 = vmul.f32 %v2717, %v2740
        %v2768 = vmul.f32 %v2718, %v2744
        %v2769 = vmul.f32 %v2719, %v2740
        %v2770 = vmul.f32 %v2720, %v2744
        %v2771 = vmul.f32 %v2721, %v2740
        %v2772 = vmul.f32 %v2722, %v2744
        %v2773 = vmul.f32 %v2723, %v2740
        %v2774 = vmul.f32 %v2724, %v2744
        %v2775 = vmul.f32 %v2725, %v2740
        %v2776 = vmul.f32 %v2726, %v2744
        %v2777 = vlaneseq
        %v2778 = vshrl.u32 %v2777, 7
        %v2779 = vsub.s32 2, %v2778
        %v2780 = vrot.slane %v2145, %v2779
        %v2781 = vlaneseq
        %v2782 = vshrl.u32 %v2781, 7
        %v2783 = vsub.s32 6, %v2782
        %v2784 = vrot.slane %v2145, %v2783
        %v2787 = vlaneseq
        %v2788 = vshrl.u32 %v2787, 7
        %v2789 = vsub.s32 2, %v2788
        %v2790 = vrot.slane %v2780, %v2789
        %v2791 = vlaneseq
        %v2792 = vshrl.u32 %v2791, 7
        %v2793 = vsub.s32 2, %v2792
        %v2794 = vrot.slane %v2784, %v2793
        %v2795 = vadd.f32 %v2745, %v2790
        %v2796 = vadd.f32 %v2746, %v2794
        %v2797 = vadd.f32 %v2747, %v2790
        %v2798 = vadd.f32 %v2748, %v2794
        %v2799 = vadd.f32 %v2749, %v2790
        %v2800 = vadd.f32 %v2750, %v2794
        %v2801 = vadd.f32 %v2751, %v2790
        %v2802 = vadd.f32 %v2752, %v2794
        %v2803 = vadd.f32 %v2753, %v2790
        %v2804 = vadd.f32 %v2754, %v2794
        %v2805 = vadd.f32 %v2755, %v2790
        %v2806 = vadd.f32 %v2756, %v2794
        %v2807 = vadd.f32 %v2757, %v2790
        %v2808 = vadd.f32 %v2758, %v2794
        %v2809 = vadd.f32 %v2759, %v2790
        %v2810 = vadd.f32 %v2760, %v2794
        %v2811 = vadd.f32 %v2761, %v2790
        %v2812 = vadd.f32 %v2762, %v2794
        %v2813 = vadd.f32 %v2763, %v2790
        %v2814 = vadd.f32 %v2764, %v2794
        %v2815 = vadd.f32 %v2765, %v2790
        %v2816 = vadd.f32 %v2766, %v2794
        %v2817 = vadd.f32 %v2767, %v2790
        %v2818 = vadd.f32 %v2768, %v2794
        %v2819 = vadd.f32 %v2769, %v2790
        %v2820 = vadd.f32 %v2770, %v2794
        %v2821 = vadd.f32 %v2771, %v2790
        %v2822 = vadd.f32 %v2772, %v2794
        %v2823 = vadd.f32 %v2773, %v2790
        %v2824 = vadd.f32 %v2774, %v2794
        %v2825 = vadd.f32 %v2775, %v2790
        %v2826 = vadd.f32 %v2776, %v2794
        %v2827 = vmax.f32 %v2795, 0.0
        %v2828 = vmax.f32 %v2796, 0.0
        %v2829 = vmax.f32 %v2797, 0.0
        %v2830 = vmax.f32 %v2798, 0.0
        %v2831 = vmax.f32 %v2799, 0.0
        %v2832 = vmax.f32 %v2800, 0.0
        %v2833 = vmax.f32 %v2801, 0.0
        %v2834 = vmax.f32 %v2802, 0.0
        %v2835 = vmax.f32 %v2803, 0.0
        %v2836 = vmax.f32 %v2804, 0.0
        %v2837 = vmax.f32 %v2805, 0.0
        %v2838 = vmax.f32 %v2806, 0.0
        %v2839 = vmax.f32 %v2807, 0.0
        %v2840 = vmax.f32 %v2808, 0.0
        %v2841 = vmax.f32 %v2809, 0.0
        %v2842 = vmax.f32 %v2810, 0.0
        %v2843 = vmax.f32 %v2811, 0.0
        %v2844 = vmax.f32 %v2812, 0.0
        %v2845 = vmax.f32 %v2813, 0.0
        %v2846 = vmax.f32 %v2814, 0.0
        %v2847 = vmax.f32 %v2815, 0.0
        %v2848 = vmax.f32 %v2816, 0.0
        %v2849 = vmax.f32 %v2817, 0.0
        %v2850 = vmax.f32 %v2818, 0.0
        %v2851 = vmax.f32 %v2819, 0.0
        %v2852 = vmax.f32 %v2820, 0.0
        %v2853 = vmax.f32 %v2821, 0.0
        %v2854 = vmax.f32 %v2822, 0.0
        %v2855 = vmax.f32 %v2823, 0.0
        %v2856 = vmax.f32 %v2824, 0.0
        %v2857 = vmax.f32 %v2825, 0.0
        %v2858 = vmax.f32 %v2826, 0.0
        %v2859 = vpack.c.bf16 %v2829, %v2827
        %v2860 = vpack.c.bf16 %v2830, %v2828
        %v2861 = vpack.c.bf16 %v2833, %v2831
        %v2862 = vpack.c.bf16 %v2834, %v2832
        %v2863 = vpack.c.bf16 %v2837, %v2835
        %v2864 = vpack.c.bf16 %v2838, %v2836
        %v2865 = vpack.c.bf16 %v2841, %v2839
        %v2866 = vpack.c.bf16 %v2842, %v2840
        %v2867 = vpack.c.bf16 %v2845, %v2843
        %v2868 = vpack.c.bf16 %v2846, %v2844
        %v2869 = vpack.c.bf16 %v2849, %v2847
        %v2870 = vpack.c.bf16 %v2850, %v2848
        %v2871 = vpack.c.bf16 %v2853, %v2851
        %v2872 = vpack.c.bf16 %v2854, %v2852
        %v2873 = vpack.c.bf16 %v2857, %v2855
        %v2874 = vpack.c.bf16 %v2858, %v2856
        %v2876 = vlaneseq
        %v2877 = vshrl.u32 %v2876, 7
        %v2878 = vsub.s32 0, %v2877
        %v2879 = vrot.slane %v2178, %v2878
        %v2880 = vlaneseq
        %v2881 = vshrl.u32 %v2880, 7
        %v2882 = vsub.s32 4, %v2881
        %v2883 = vrot.slane %v2178, %v2882
        %v2886 = vlaneseq
        %v2887 = vshrl.u32 %v2886, 7
        %v2888 = vsub.s32 0, %v2887
        %v2889 = vrot.slane %v2879, %v2888
        %v2890 = vlaneseq
        %v2891 = vshrl.u32 %v2890, 7
        %v2892 = vsub.s32 0, %v2891
        %v2893 = vrot.slane %v2883, %v2892
        %v2926 = vunpack.c.l.b16 %v2146
        %v2927 = vunpack.c.h.b16 %v2146
        %v2928 = vunpack.c.l.b16 %v2147
        %v2929 = vunpack.c.h.b16 %v2147
        %v2930 = vunpack.c.l.b16 %v2148
        %v2931 = vunpack.c.h.b16 %v2148
        %v2932 = vunpack.c.l.b16 %v2149
        %v2933 = vunpack.c.h.b16 %v2149
        %v2934 = vunpack.c.l.b16 %v2150
        %v2935 = vunpack.c.h.b16 %v2150
        %v2936 = vunpack.c.l.b16 %v2151
        %v2937 = vunpack.c.h.b16 %v2151
        %v2938 = vunpack.c.l.b16 %v2152
        %v2939 = vunpack.c.h.b16 %v2152
        %v2940 = vunpack.c.l.b16 %v2153
        %v2941 = vunpack.c.h.b16 %v2153
        %v2942 = vunpack.c.l.b16 %v2154
        %v2943 = vunpack.c.h.b16 %v2154
        %v2944 = vunpack.c.l.b16 %v2155
        %v2945 = vunpack.c.h.b16 %v2155
        %v2946 = vunpack.c.l.b16 %v2156
        %v2947 = vunpack.c.h.b16 %v2156
        %v2948 = vunpack.c.l.b16 %v2157
        %v2949 = vunpack.c.h.b16 %v2157
        %v2950 = vunpack.c.l.b16 %v2158
        %v2951 = vunpack.c.h.b16 %v2158
        %v2952 = vunpack.c.l.b16 %v2159
        %v2953 = vunpack.c.h.b16 %v2159
        %v2954 = vunpack.c.l.b16 %v2160
        %v2955 = vunpack.c.h.b16 %v2160
        %v2956 = vunpack.c.l.b16 %v2161
        %v2957 = vunpack.c.h.b16 %v2161
        %v2958 = vunpack.c.l.b16 %v2162
        %v2959 = vunpack.c.h.b16 %v2162
        %v2960 = vunpack.c.l.b16 %v2163
        %v2961 = vunpack.c.h.b16 %v2163
        %v2962 = vunpack.c.l.b16 %v2164
        %v2963 = vunpack.c.h.b16 %v2164
        %v2964 = vunpack.c.l.b16 %v2165
        %v2965 = vunpack.c.h.b16 %v2165
        %v2966 = vunpack.c.l.b16 %v2166
        %v2967 = vunpack.c.h.b16 %v2166
        %v2968 = vunpack.c.l.b16 %v2167
        %v2969 = vunpack.c.h.b16 %v2167
        %v2970 = vunpack.c.l.b16 %v2168
        %v2971 = vunpack.c.h.b16 %v2168
        %v2972 = vunpack.c.l.b16 %v2169
        %v2973 = vunpack.c.h.b16 %v2169
        %v2974 = vunpack.c.l.b16 %v2170
        %v2975 = vunpack.c.h.b16 %v2170
        %v2976 = vunpack.c.l.b16 %v2171
        %v2977 = vunpack.c.h.b16 %v2171
        %v2978 = vunpack.c.l.b16 %v2172
        %v2979 = vunpack.c.h.b16 %v2172
        %v2980 = vunpack.c.l.b16 %v2173
        %v2981 = vunpack.c.h.b16 %v2173
        %v2982 = vunpack.c.l.b16 %v2174
        %v2983 = vunpack.c.h.b16 %v2174
        %v2984 = vunpack.c.l.b16 %v2175
        %v2985 = vunpack.c.h.b16 %v2175
        %v2986 = vunpack.c.l.b16 %v2176
        %v2987 = vunpack.c.h.b16 %v2176
        %v2988 = vunpack.c.l.b16 %v2177
        %v2989 = vunpack.c.h.b16 %v2177
        %v2990 = vpack.c.b16 %v2928, %v2926
        %v2991 = vpack.c.b16 %v2929, %v2927
        %v2992 = vpack.c.b16 %v2932, %v2930
        %v2993 = vpack.c.b16 %v2933, %v2931
        %v2994 = vpack.c.b16 %v2936, %v2934
        %v2995 = vpack.c.b16 %v2937, %v2935
        %v2996 = vpack.c.b16 %v2940, %v2938
        %v2997 = vpack.c.b16 %v2941, %v2939
        %v2998 = vpack.c.b16 %v2944, %v2942
        %v2999 = vpack.c.b16 %v2945, %v2943
        %v3000 = vpack.c.b16 %v2948, %v2946
        %v3001 = vpack.c.b16 %v2949, %v2947
        %v3002 = vpack.c.b16 %v2952, %v2950
        %v3003 = vpack.c.b16 %v2953, %v2951
        %v3004 = vpack.c.b16 %v2956, %v2954
        %v3005 = vpack.c.b16 %v2957, %v2955
        %v3006 = vpack.c.b16 %v2960, %v2958
        %v3007 = vpack.c.b16 %v2961, %v2959
        %v3008 = vpack.c.b16 %v2964, %v2962
        %v3009 = vpack.c.b16 %v2965, %v2963
        %v3010 = vpack.c.b16 %v2968, %v2966
        %v3011 = vpack.c.b16 %v2969, %v2967
        %v3012 = vpack.c.b16 %v2972, %v2970
        %v3013 = vpack.c.b16 %v2973, %v2971
        %v3014 = vpack.c.b16 %v2976, %v2974
        %v3015 = vpack.c.b16 %v2977, %v2975
        %v3016 = vpack.c.b16 %v2980, %v2978
        %v3017 = vpack.c.b16 %v2981, %v2979
        %v3018 = vpack.c.b16 %v2984, %v2982
        %v3019 = vpack.c.b16 %v2985, %v2983
        %v3020 = vpack.c.b16 %v2988, %v2986
        %v3021 = vpack.c.b16 %v2989, %v2987
        %3054 = vmatprep.subr.bf16.mxu0 %v2991
        %3055 = vmatpush1.bf16.msra.mxu0 %v2990
        %3056 = vmatprep.subr.bf16.mxu0 %v2993
        %3057 = vmatpush1.bf16.msra.mxu0 %v2992
        %3058 = vmatprep.subr.bf16.mxu0 %v2995
        %3059 = vmatpush1.bf16.msra.mxu0 %v2994
        %3060 = vmatprep.subr.bf16.mxu0 %v2997
        %3061 = vmatpush1.bf16.msra.mxu0 %v2996
        %3062 = vmatprep.subr.bf16.mxu0 %v2999
        %3063 = vmatpush1.bf16.msra.mxu0 %v2998
        %3064 = vmatprep.subr.bf16.mxu0 %v3001
        %3065 = vmatpush1.bf16.msra.mxu0 %v3000
        %3066 = vmatprep.subr.bf16.mxu0 %v3003
        %3067 = vmatpush1.bf16.msra.mxu0 %v3002
        %3068 = vmatprep.subr.bf16.mxu0 %v3005
        %3069 = vmatpush1.bf16.msra.mxu0 %v3004
        %3070 = vmatprep.subr.bf16.mxu0 %v3007
        %3071 = vmatpush1.bf16.msra.mxu0 %v3006
        %3072 = vmatprep.subr.bf16.mxu0 %v3009
        %3073 = vmatpush1.bf16.msra.mxu0 %v3008
        %3074 = vmatprep.subr.bf16.mxu0 %v3011
        %3075 = vmatpush1.bf16.msra.mxu0 %v3010
        %3076 = vmatprep.subr.bf16.mxu0 %v3013
        %3077 = vmatpush1.bf16.msra.mxu0 %v3012
        %3078 = vmatprep.subr.bf16.mxu0 %v3015
        %3079 = vmatpush1.bf16.msra.mxu0 %v3014
        %3080 = vmatprep.subr.bf16.mxu0 %v3017
        %3081 = vmatpush1.bf16.msra.mxu0 %v3016
        %3082 = vmatprep.subr.bf16.mxu0 %v3019
        %3083 = vmatpush1.bf16.msra.mxu0 %v3018
        %3084 = vmatprep.subr.bf16.mxu0 %v3021
        %3085 = vmatpush1.bf16.msra.mxu0 %v3020
        %3086 = vmatprep.mubr.bf16.mxu0 %v2860
        %3087 = vmatmul.mubr.bf16.gmra.mrb[0].mxu0 %v2859
        %v3088 = vpop.f32.mrb[0].mxu0
        %v3089 = vadd.f32 %v2889, %v3088
        %v3090 = vpop.f32.mrb[0].mxu0
        %v3091 = vadd.f32 %v2893, %v3090
        %v3092 = vpop.f32.mrb[0].mxu0
        %v3093 = vadd.f32 %v2889, %v3092
        %v3094 = vpop.f32.mrb[0].mxu0
        %v3095 = vadd.f32 %v2893, %v3094
        %3096 = vmatprep.mubr.bf16.mxu0 %v2862
        %3097 = vmatmul.mubr.bf16.gmra.mrb[0].mxu0 %v2861
        %v3098 = vpop.f32.mrb[0].mxu0
        %v3099 = vadd.f32 %v2889, %v3098
        %v3100 = vpop.f32.mrb[0].mxu0
        %v3101 = vadd.f32 %v2893, %v3100
        %v3102 = vpop.f32.mrb[0].mxu0
        %v3103 = vadd.f32 %v2889, %v3102
        %v3104 = vpop.f32.mrb[0].mxu0
        %v3105 = vadd.f32 %v2893, %v3104
        %3106 = vmatprep.mubr.bf16.mxu0 %v2864
        %3107 = vmatmul.mubr.bf16.gmra.mrb[0].mxu0 %v2863
        %v3108 = vpop.f32.mrb[0].mxu0
        %v3109 = vadd.f32 %v2889, %v3108
        %v3110 = vpop.f32.mrb[0].mxu0
        %v3111 = vadd.f32 %v2893, %v3110
        %v3112 = vpop.f32.mrb[0].mxu0
        %v3113 = vadd.f32 %v2889, %v3112
        %v3114 = vpop.f32.mrb[0].mxu0
        %v3115 = vadd.f32 %v2893, %v3114
        %3116 = vmatprep.mubr.bf16.mxu0 %v2866
        %3117 = vmatmul.mubr.bf16.gmra.mrb[0].mxu0 %v2865
        %v3118 = vpop.f32.mrb[0].mxu0
        %v3119 = vadd.f32 %v2889, %v3118
        %v3120 = vpop.f32.mrb[0].mxu0
        %v3121 = vadd.f32 %v2893, %v3120
        %v3122 = vpop.f32.mrb[0].mxu0
        %v3123 = vadd.f32 %v2889, %v3122
        %v3124 = vpop.f32.mrb[0].mxu0
        %v3125 = vadd.f32 %v2893, %v3124
        %3126 = vmatprep.mubr.bf16.mxu0 %v2868
        %3127 = vmatmul.mubr.bf16.gmra.mrb[0].mxu0 %v2867
        %v3128 = vpop.f32.mrb[0].mxu0
        %v3129 = vadd.f32 %v2889, %v3128
        %v3130 = vpop.f32.mrb[0].mxu0
        %v3131 = vadd.f32 %v2893, %v3130
        %v3132 = vpop.f32.mrb[0].mxu0
        %v3133 = vadd.f32 %v2889, %v3132
        %v3134 = vpop.f32.mrb[0].mxu0
        %v3135 = vadd.f32 %v2893, %v3134
        %3136 = vmatprep.mubr.bf16.mxu0 %v2870
        %3137 = vmatmul.mubr.bf16.gmra.mrb[0].mxu0 %v2869
        %v3138 = vpop.f32.mrb[0].mxu0
        %v3139 = vadd.f32 %v2889, %v3138
        %v3140 = vpop.f32.mrb[0].mxu0
        %v3141 = vadd.f32 %v2893, %v3140
        %v3142 = vpop.f32.mrb[0].mxu0
        %v3143 = vadd.f32 %v2889, %v3142
        %v3144 = vpop.f32.mrb[0].mxu0
        %v3145 = vadd.f32 %v2893, %v3144
        %3146 = vmatprep.mubr.bf16.mxu0 %v2872
        %3147 = vmatmul.mubr.bf16.gmra.mrb[0].mxu0 %v2871
        %v3148 = vpop.f32.mrb[0].mxu0
        %v3149 = vadd.f32 %v2889, %v3148
        %v3150 = vpop.f32.mrb[0].mxu0
        %v3151 = vadd.f32 %v2893, %v3150
        %v3152 = vpop.f32.mrb[0].mxu0
        %v3153 = vadd.f32 %v2889, %v3152
        %v3154 = vpop.f32.mrb[0].mxu0
        %v3155 = vadd.f32 %v2893, %v3154
        %3156 = vmatprep.mubr.bf16.mxu0 %v2874
        %3157 = vmatmul.mubr.bf16.gmra.mrb[0].mxu0 %v2873
        %v3158 = vpop.f32.mrb[0].mxu0
        %v3159 = vadd.f32 %v2889, %v3158
        %v3160 = vpop.f32.mrb[0].mxu0
        %v3161 = vadd.f32 %v2893, %v3160
        %v3162 = vpop.f32.mrb[0].mxu0
        %v3163 = vadd.f32 %v2889, %v3162
        %v3164 = vpop.f32.mrb[0].mxu0
        %v3165 = vadd.f32 %v2893, %v3164
        %3166 = vdwg.mxu0
        %v3167 = vadd.f32 %v3089, %v3091
        %3168 = vadd.xlane.f32.xlu0 %v3167
        %v3169 = vpop.xlane.xlu0 %3168
        %v3170 = vadd.f32 %v3093, %v3095
        %3171 = vadd.xlane.f32.xlu0 %v3170
        %v3172 = vpop.xlane.xlu0 %3171
        %v3173 = vadd.f32 %v3099, %v3101
        %3174 = vadd.xlane.f32.xlu0 %v3173
        %v3175 = vpop.xlane.xlu0 %3174
        %v3176 = vadd.f32 %v3103, %v3105
        %3177 = vadd.xlane.f32.xlu0 %v3176
        %v3178 = vpop.xlane.xlu0 %3177
        %v3179 = vadd.f32 %v3109, %v3111
        %3180 = vadd.xlane.f32.xlu0 %v3179
        %v3181 = vpop.xlane.xlu0 %3180
        %v3182 = vadd.f32 %v3113, %v3115
        %3183 = vadd.xlane.f32.xlu0 %v3182
        %v3184 = vpop.xlane.xlu0 %3183
        %v3185 = vadd.f32 %v3119, %v3121
        %3186 = vadd.xlane.f32.xlu0 %v3185
        %v3187 = vpop.xlane.xlu0 %3186
        %v3188 = vadd.f32 %v3123, %v3125
        %3189 = vadd.xlane.f32.xlu0 %v3188
        %v3190 = vpop.xlane.xlu0 %3189
        %v3191 = vadd.f32 %v3129, %v3131
        %3192 = vadd.xlane.f32.xlu0 %v3191
        %v3193 = vpop.xlane.xlu0 %3192
        %v3194 = vadd.f32 %v3133, %v3135
        %3195 = vadd.xlane.f32.xlu0 %v3194
        %v3196 = vpop.xlane.xlu0 %3195
        %v3197 = vadd.f32 %v3139, %v3141
        %3198 = vadd.xlane.f32.xlu0 %v3197
        %v3199 = vpop.xlane.xlu0 %3198
        %v3200 = vadd.f32 %v3143, %v3145
        %3201 = vadd.xlane.f32.xlu0 %v3200
        %v3202 = vpop.xlane.xlu0 %3201
        %v3203 = vadd.f32 %v3149, %v3151
        %3204 = vadd.xlane.f32.xlu0 %v3203
        %v3205 = vpop.xlane.xlu0 %3204
        %v3206 = vadd.f32 %v3153, %v3155
        %3207 = vadd.xlane.f32.xlu0 %v3206
        %v3208 = vpop.xlane.xlu0 %3207
        %v3209 = vadd.f32 %v3159, %v3161
        %3210 = vadd.xlane.f32.xlu0 %v3209
        %v3211 = vpop.xlane.xlu0 %3210
        %v3212 = vadd.f32 %v3163, %v3165
        %3213 = vadd.xlane.f32.xlu0 %v3212
        %v3214 = vpop.xlane.xlu0 %3213
        %v3215 = vmul.f32 %v3169, %v1756
        %v3216 = vmul.f32 %v3172, %v1756
        %v3217 = vmul.f32 %v3175, %v1756
        %v3218 = vmul.f32 %v3178, %v1756
        %v3219 = vmul.f32 %v3181, %v1756
        %v3220 = vmul.f32 %v3184, %v1756
        %v3221 = vmul.f32 %v3187, %v1756
        %v3222 = vmul.f32 %v3190, %v1756
        %v3223 = vmul.f32 %v3193, %v1756
        %v3224 = vmul.f32 %v3196, %v1756
        %v3225 = vmul.f32 %v3199, %v1756
        %v3226 = vmul.f32 %v3202, %v1756
        %v3227 = vmul.f32 %v3205, %v1756
        %v3228 = vmul.f32 %v3208, %v1756
        %v3229 = vmul.f32 %v3211, %v1756
        %v3230 = vmul.f32 %v3214, %v1756
        %v3231 = vsub.f32 %v3089, %v3215
        %v3232 = vsub.f32 %v3091, %v3215
        %v3233 = vsub.f32 %v3093, %v3216
        %v3234 = vsub.f32 %v3095, %v3216
        %v3235 = vsub.f32 %v3099, %v3217
        %v3236 = vsub.f32 %v3101, %v3217
        %v3237 = vsub.f32 %v3103, %v3218
        %v3238 = vsub.f32 %v3105, %v3218
        %v3239 = vsub.f32 %v3109, %v3219
        %v3240 = vsub.f32 %v3111, %v3219
        %v3241 = vsub.f32 %v3113, %v3220
        %v3242 = vsub.f32 %v3115, %v3220
        %v3243 = vsub.f32 %v3119, %v3221
        %v3244 = vsub.f32 %v3121, %v3221
        %v3245 = vsub.f32 %v3123, %v3222
        %v3246 = vsub.f32 %v3125, %v3222
        %v3247 = vsub.f32 %v3129, %v3223
        %v3248 = vsub.f32 %v3131, %v3223
        %v3249 = vsub.f32 %v3133, %v3224
        %v3250 = vsub.f32 %v3135, %v3224
        %v3251 = vsub.f32 %v3139, %v3225
        %v3252 = vsub.f32 %v3141, %v3225
        %v3253 = vsub.f32 %v3143, %v3226
        %v3254 = vsub.f32 %v3145, %v3226
        %v3255 = vsub.f32 %v3149, %v3227
        %v3256 = vsub.f32 %v3151, %v3227
        %v3257 = vsub.f32 %v3153, %v3228
        %v3258 = vsub.f32 %v3155, %v3228
        %v3259 = vsub.f32 %v3159, %v3229
        %v3260 = vsub.f32 %v3161, %v3229
        %v3261 = vsub.f32 %v3163, %v3230
        %v3262 = vsub.f32 %v3165, %v3230
        %v3263 = vmul.f32 %v3231, %v3231
        %v3264 = vmul.f32 %v3232, %v3232
        %v3265 = vmul.f32 %v3233, %v3233
        %v3266 = vmul.f32 %v3234, %v3234
        %v3267 = vmul.f32 %v3235, %v3235
        %v3268 = vmul.f32 %v3236, %v3236
        %v3269 = vmul.f32 %v3237, %v3237
        %v3270 = vmul.f32 %v3238, %v3238
        %v3271 = vmul.f32 %v3239, %v3239
        %v3272 = vmul.f32 %v3240, %v3240
        %v3273 = vmul.f32 %v3241, %v3241
        %v3274 = vmul.f32 %v3242, %v3242
        %v3275 = vmul.f32 %v3243, %v3243
        %v3276 = vmul.f32 %v3244, %v3244
        %v3277 = vmul.f32 %v3245, %v3245
        %v3278 = vmul.f32 %v3246, %v3246
        %v3279 = vmul.f32 %v3247, %v3247
        %v3280 = vmul.f32 %v3248, %v3248
        %v3281 = vmul.f32 %v3249, %v3249
        %v3282 = vmul.f32 %v3250, %v3250
        %v3283 = vmul.f32 %v3251, %v3251
        %v3284 = vmul.f32 %v3252, %v3252
        %v3285 = vmul.f32 %v3253, %v3253
        %v3286 = vmul.f32 %v3254, %v3254
        %v3287 = vmul.f32 %v3255, %v3255
        %v3288 = vmul.f32 %v3256, %v3256
        %v3289 = vmul.f32 %v3257, %v3257
        %v3290 = vmul.f32 %v3258, %v3258
        %v3291 = vmul.f32 %v3259, %v3259
        %v3292 = vmul.f32 %v3260, %v3260
        %v3293 = vmul.f32 %v3261, %v3261
        %v3294 = vmul.f32 %v3262, %v3262
        %v3295 = vadd.f32 %v3263, %v3264
        %3296 = vadd.xlane.f32.xlu0 %v3295
        %v3297 = vpop.xlane.xlu0 %3296
        %v3298 = vadd.f32 %v3265, %v3266
        %3299 = vadd.xlane.f32.xlu0 %v3298
        %v3300 = vpop.xlane.xlu0 %3299
        %v3301 = vadd.f32 %v3267, %v3268
        %3302 = vadd.xlane.f32.xlu0 %v3301
        %v3303 = vpop.xlane.xlu0 %3302
        %v3304 = vadd.f32 %v3269, %v3270
        %3305 = vadd.xlane.f32.xlu0 %v3304
        %v3306 = vpop.xlane.xlu0 %3305
        %v3307 = vadd.f32 %v3271, %v3272
        %3308 = vadd.xlane.f32.xlu0 %v3307
        %v3309 = vpop.xlane.xlu0 %3308
        %v3310 = vadd.f32 %v3273, %v3274
        %3311 = vadd.xlane.f32.xlu0 %v3310
        %v3312 = vpop.xlane.xlu0 %3311
        %v3313 = vadd.f32 %v3275, %v3276
        %3314 = vadd.xlane.f32.xlu0 %v3313
        %v3315 = vpop.xlane.xlu0 %3314
        %v3316 = vadd.f32 %v3277, %v3278
        %3317 = vadd.xlane.f32.xlu0 %v3316
        %v3318 = vpop.xlane.xlu0 %3317
        %v3319 = vadd.f32 %v3279, %v3280
        %3320 = vadd.xlane.f32.xlu0 %v3319
        %v3321 = vpop.xlane.xlu0 %3320
        %v3322 = vadd.f32 %v3281, %v3282
        %3323 = vadd.xlane.f32.xlu0 %v3322
        %v3324 = vpop.xlane.xlu0 %3323
        %v3325 = vadd.f32 %v3283, %v3284
        %3326 = vadd.xlane.f32.xlu0 %v3325
        %v3327 = vpop.xlane.xlu0 %3326
        %v3328 = vadd.f32 %v3285, %v3286
        %3329 = vadd.xlane.f32.xlu0 %v3328
        %v3330 = vpop.xlane.xlu0 %3329
        %v3331 = vadd.f32 %v3287, %v3288
        %3332 = vadd.xlane.f32.xlu0 %v3331
        %v3333 = vpop.xlane.xlu0 %3332
        %v3334 = vadd.f32 %v3289, %v3290
        %3335 = vadd.xlane.f32.xlu0 %v3334
        %v3336 = vpop.xlane.xlu0 %3335
        %v3337 = vadd.f32 %v3291, %v3292
        %3338 = vadd.xlane.f32.xlu0 %v3337
        %v3339 = vpop.xlane.xlu0 %3338
        %v3340 = vadd.f32 %v3293, %v3294
        %3341 = vadd.xlane.f32.xlu0 %v3340
        %v3342 = vpop.xlane.xlu0 %3341
        %v3343 = vmul.f32 %v3297, %v1756
        %v3344 = vmul.f32 %v3300, %v1756
        %v3345 = vmul.f32 %v3303, %v1756
        %v3346 = vmul.f32 %v3306, %v1756
        %v3347 = vmul.f32 %v3309, %v1756
        %v3348 = vmul.f32 %v3312, %v1756
        %v3349 = vmul.f32 %v3315, %v1756
        %v3350 = vmul.f32 %v3318, %v1756
        %v3351 = vmul.f32 %v3321, %v1756
        %v3352 = vmul.f32 %v3324, %v1756
        %v3353 = vmul.f32 %v3327, %v1756
        %v3354 = vmul.f32 %v3330, %v1756
        %v3355 = vmul.f32 %v3333, %v1756
        %v3356 = vmul.f32 %v3336, %v1756
        %v3357 = vmul.f32 %v3339, %v1756
        %v3358 = vmul.f32 %v3342, %v1756
        %v3359 = vadd.f32 %v3343, 1e-05
        %v3360 = vadd.f32 %v3344, 1e-05
        %v3361 = vadd.f32 %v3345, 1e-05
        %v3362 = vadd.f32 %v3346, 1e-05
        %v3363 = vadd.f32 %v3347, 1e-05
        %v3364 = vadd.f32 %v3348, 1e-05
        %v3365 = vadd.f32 %v3349, 1e-05
        %v3366 = vadd.f32 %v3350, 1e-05
        %v3367 = vadd.f32 %v3351, 1e-05
        %v3368 = vadd.f32 %v3352, 1e-05
        %v3369 = vadd.f32 %v3353, 1e-05
        %v3370 = vadd.f32 %v3354, 1e-05
        %v3371 = vadd.f32 %v3355, 1e-05
        %v3372 = vadd.f32 %v3356, 1e-05
        %v3373 = vadd.f32 %v3357, 1e-05
        %v3374 = vadd.f32 %v3358, 1e-05
        %v3375 = vrsqrt.pop %v3359
        %v3376 = vrsqrt.pop %v3360
        %v3377 = vrsqrt.pop %v3361
        %v3378 = vrsqrt.pop %v3362
        %v3379 = vrsqrt.pop %v3363
        %v3380 = vrsqrt.pop %v3364
        %v3381 = vrsqrt.pop %v3365
        %v3382 = vrsqrt.pop %v3366
        %v3383 = vrsqrt.pop %v3367
        %v3384 = vrsqrt.pop %v3368
        %v3385 = vrsqrt.pop %v3369
        %v3386 = vrsqrt.pop %v3370
        %v3387 = vrsqrt.pop %v3371
        %v3388 = vrsqrt.pop %v3372
        %v3389 = vrsqrt.pop %v3373
        %v3390 = vrsqrt.pop %v3374
        %v3391 = vmul.f32 %v3231, %v3375
        %v3392 = vmul.f32 %v3232, %v3375
        %v3393 = vmul.f32 %v3233, %v3376
        %v3394 = vmul.f32 %v3234, %v3376
        %v3395 = vmul.f32 %v3235, %v3377
        %v3396 = vmul.f32 %v3236, %v3377
        %v3397 = vmul.f32 %v3237, %v3378
        %v3398 = vmul.f32 %v3238, %v3378
        %v3399 = vmul.f32 %v3239, %v3379
        %v3400 = vmul.f32 %v3240, %v3379
        %v3401 = vmul.f32 %v3241, %v3380
        %v3402 = vmul.f32 %v3242, %v3380
        %v3403 = vmul.f32 %v3243, %v3381
        %v3404 = vmul.f32 %v3244, %v3381
        %v3405 = vmul.f32 %v3245, %v3382
        %v3406 = vmul.f32 %v3246, %v3382
        %v3407 = vmul.f32 %v3247, %v3383
        %v3408 = vmul.f32 %v3248, %v3383
        %v3409 = vmul.f32 %v3249, %v3384
        %v3410 = vmul.f32 %v3250, %v3384
        %v3411 = vmul.f32 %v3251, %v3385
        %v3412 = vmul.f32 %v3252, %v3385
        %v3413 = vmul.f32 %v3253, %v3386
        %v3414 = vmul.f32 %v3254, %v3386
        %v3415 = vmul.f32 %v3255, %v3387
        %v3416 = vmul.f32 %v3256, %v3387
        %v3417 = vmul.f32 %v3257, %v3388
        %v3418 = vmul.f32 %v3258, %v3388
        %v3419 = vmul.f32 %v3259, %v3389
        %v3420 = vmul.f32 %v3260, %v3389
        %v3421 = vmul.f32 %v3261, %v3390
        %v3422 = vmul.f32 %v3262, %v3390
        %v3423 = vlaneseq
        %v3424 = vshrl.u32 %v3423, 7
        %v3425 = vsub.s32 1, %v3424
        %v3426 = vrot.slane %v2178, %v3425
        %v3427 = vlaneseq
        %v3428 = vshrl.u32 %v3427, 7
        %v3429 = vsub.s32 5, %v3428
        %v3430 = vrot.slane %v2178, %v3429
        %v3433 = vlaneseq
        %v3434 = vshrl.u32 %v3433, 7
        %v3435 = vsub.s32 1, %v3434
        %v3436 = vrot.slane %v3426, %v3435
        %v3437 = vlaneseq
        %v3438 = vshrl.u32 %v3437, 7
        %v3439 = vsub.s32 1, %v3438
        %v3440 = vrot.slane %v3430, %v3439
        %v3441 = vmul.f32 %v3391, %v3436
        %v3442 = vmul.f32 %v3392, %v3440
        %v3443 = vmul.f32 %v3393, %v3436
        %v3444 = vmul.f32 %v3394, %v3440
        %v3445 = vmul.f32 %v3395, %v3436
        %v3446 = vmul.f32 %v3396, %v3440
        %v3447 = vmul.f32 %v3397, %v3436
        %v3448 = vmul.f32 %v3398, %v3440
        %v3449 = vmul.f32 %v3399, %v3436
        %v3450 = vmul.f32 %v3400, %v3440
        %v3451 = vmul.f32 %v3401, %v3436
        %v3452 = vmul.f32 %v3402, %v3440
        %v3453 = vmul.f32 %v3403, %v3436
        %v3454 = vmul.f32 %v3404, %v3440
        %v3455 = vmul.f32 %v3405, %v3436
        %v3456 = vmul.f32 %v3406, %v3440
        %v3457 = vmul.f32 %v3407, %v3436
        %v3458 = vmul.f32 %v3408, %v3440
        %v3459 = vmul.f32 %v3409, %v3436
        %v3460 = vmul.f32 %v3410, %v3440
        %v3461 = vmul.f32 %v3411, %v3436
        %v3462 = vmul.f32 %v3412, %v3440
        %v3463 = vmul.f32 %v3413, %v3436
        %v3464 = vmul.f32 %v3414, %v3440
        %v3465 = vmul.f32 %v3415, %v3436
        %v3466 = vmul.f32 %v3416, %v3440
        %v3467 = vmul.f32 %v3417, %v3436
        %v3468 = vmul.f32 %v3418, %v3440
        %v3469 = vmul.f32 %v3419, %v3436
        %v3470 = vmul.f32 %v3420, %v3440
        %v3471 = vmul.f32 %v3421, %v3436
        %v3472 = vmul.f32 %v3422, %v3440
        %v3473 = vlaneseq
        %v3474 = vshrl.u32 %v3473, 7
        %v3475 = vsub.s32 2, %v3474
        %v3476 = vrot.slane %v2178, %v3475
        %v3477 = vlaneseq
        %v3478 = vshrl.u32 %v3477, 7
        %v3479 = vsub.s32 6, %v3478
        %v3480 = vrot.slane %v2178, %v3479
        %v3483 = vlaneseq
        %v3484 = vshrl.u32 %v3483, 7
        %v3485 = vsub.s32 2, %v3484
        %v3486 = vrot.slane %v3476, %v3485
        %v3487 = vlaneseq
        %v3488 = vshrl.u32 %v3487, 7
        %v3489 = vsub.s32 2, %v3488
        %v3490 = vrot.slane %v3480, %v3489
        %v3491 = vadd.f32 %v3441, %v3486
        %v3492 = vadd.f32 %v3442, %v3490
        %v3493 = vadd.f32 %v3443, %v3486
        %v3494 = vadd.f32 %v3444, %v3490
        %v3495 = vadd.f32 %v3445, %v3486
        %v3496 = vadd.f32 %v3446, %v3490
        %v3497 = vadd.f32 %v3447, %v3486
        %v3498 = vadd.f32 %v3448, %v3490
        %v3499 = vadd.f32 %v3449, %v3486
        %v3500 = vadd.f32 %v3450, %v3490
        %v3501 = vadd.f32 %v3451, %v3486
        %v3502 = vadd.f32 %v3452, %v3490
        %v3503 = vadd.f32 %v3453, %v3486
        %v3504 = vadd.f32 %v3454, %v3490
        %v3505 = vadd.f32 %v3455, %v3486
        %v3506 = vadd.f32 %v3456, %v3490
        %v3507 = vadd.f32 %v3457, %v3486
        %v3508 = vadd.f32 %v3458, %v3490
        %v3509 = vadd.f32 %v3459, %v3486
        %v3510 = vadd.f32 %v3460, %v3490
        %v3511 = vadd.f32 %v3461, %v3486
        %v3512 = vadd.f32 %v3462, %v3490
        %v3513 = vadd.f32 %v3463, %v3486
        %v3514 = vadd.f32 %v3464, %v3490
        %v3515 = vadd.f32 %v3465, %v3486
        %v3516 = vadd.f32 %v3466, %v3490
        %v3517 = vadd.f32 %v3467, %v3486
        %v3518 = vadd.f32 %v3468, %v3490
        %v3519 = vadd.f32 %v3469, %v3486
        %v3520 = vadd.f32 %v3470, %v3490
        %v3521 = vadd.f32 %v3471, %v3486
        %v3522 = vadd.f32 %v3472, %v3490
        %v3523 = vadd.f32 %v2065, %v3491
        %v3524 = vadd.f32 %v2066, %v3492
        %v3525 = vadd.f32 %v2067, %v3493
        %v3526 = vadd.f32 %v2068, %v3494
        %v3527 = vadd.f32 %v2069, %v3495
        %v3528 = vadd.f32 %v2070, %v3496
        %v3529 = vadd.f32 %v2071, %v3497
        %v3530 = vadd.f32 %v2072, %v3498
        %v3531 = vadd.f32 %v2073, %v3499
        %v3532 = vadd.f32 %v2074, %v3500
        %v3533 = vadd.f32 %v2075, %v3501
        %v3534 = vadd.f32 %v2076, %v3502
        %v3535 = vadd.f32 %v2077, %v3503
        %v3536 = vadd.f32 %v2078, %v3504
        %v3537 = vadd.f32 %v2079, %v3505
        %v3538 = vadd.f32 %v2080, %v3506
        %v3539 = vadd.f32 %v2081, %v3507
        %v3540 = vadd.f32 %v2082, %v3508
        %v3541 = vadd.f32 %v2083, %v3509
        %v3542 = vadd.f32 %v2084, %v3510
        %v3543 = vadd.f32 %v2085, %v3511
        %v3544 = vadd.f32 %v2086, %v3512
        %v3545 = vadd.f32 %v2087, %v3513
        %v3546 = vadd.f32 %v2088, %v3514
        %v3547 = vadd.f32 %v2089, %v3515
        %v3548 = vadd.f32 %v2090, %v3516
        %v3549 = vadd.f32 %v2091, %v3517
        %v3550 = vadd.f32 %v2092, %v3518
        %v3551 = vadd.f32 %v2093, %v3519
        %v3552 = vadd.f32 %v2094, %v3520
        %v3553 = vadd.f32 %v2095, %v3521
        %v3554 = vadd.f32 %v2096, %v3522
        %v3555 = vld [vmem:[%s13] sm:$0xff]
        %v3556 = vld [vmem:[#allocation2] sm:$0x1]
        %3557 = vxpose.xlu0.b32.start [1/16] %v3523, 128
        %3558 = vxpose.xlu0.b32.cont [2/16] %v3525, 128
        %3559 = vxpose.xlu0.b32.cont [3/16] %v3527, 128
        %3560 = vxpose.xlu0.b32.cont [4/16] %v3529, 128
        %3561 = vxpose.xlu0.b32.cont [5/16] %v3531, 128
        %3562 = vxpose.xlu0.b32.cont [6/16] %v3533, 128
        %3563 = vxpose.xlu0.b32.cont [7/16] %v3535, 128
        %3564 = vxpose.xlu0.b32.cont [8/16] %v3537, 128
        %3565 = vxpose.xlu0.b32.cont [9/16] %v3539, 128
        %3566 = vxpose.xlu0.b32.cont [10/16] %v3541, 128
        %3567 = vxpose.xlu0.b32.cont [11/16] %v3543, 128
        %3568 = vxpose.xlu0.b32.cont [12/16] %v3545, 128
        %3569 = vxpose.xlu0.b32.cont [13/16] %v3547, 128
        %3570 = vxpose.xlu0.b32.cont [14/16] %v3549, 128
        %3571 = vxpose.xlu0.b32.cont [15/16] %v3551, 128
        %3572 = vxpose.xlu0.b32.end [16/16] %v3553, 128
        %v3573 = vpop.trf.xlu0
        %v3574 = vpop.trf.xlu0
        %v3575 = vpop.trf.xlu0
        %v3576 = vpop.trf.xlu0
        %v3577 = vpop.trf.xlu0
        %v3578 = vpop.trf.xlu0
        %v3579 = vpop.trf.xlu0
        %v3580 = vpop.trf.xlu0
        %v3581 = vpop.trf.xlu0
        %v3582 = vpop.trf.xlu0
        %v3583 = vpop.trf.xlu0
        %v3584 = vpop.trf.xlu0
        %v3585 = vpop.trf.xlu0
        %v3586 = vpop.trf.xlu0
        %v3587 = vpop.trf.xlu0
        %v3588 = vpop.trf.xlu0
        %3589 = vxpose.xlu0.b32.start [1/16] %v3524, 128
        %3590 = vxpose.xlu0.b32.cont [2/16] %v3526, 128
        %3591 = vxpose.xlu0.b32.cont [3/16] %v3528, 128
        %3592 = vxpose.xlu0.b32.cont [4/16] %v3530, 128
        %3593 = vxpose.xlu0.b32.cont [5/16] %v3532, 128
        %3594 = vxpose.xlu0.b32.cont [6/16] %v3534, 128
        %3595 = vxpose.xlu0.b32.cont [7/16] %v3536, 128
        %3596 = vxpose.xlu0.b32.cont [8/16] %v3538, 128
        %3597 = vxpose.xlu0.b32.cont [9/16] %v3540, 128
        %3598 = vxpose.xlu0.b32.cont [10/16] %v3542, 128
        %3599 = vxpose.xlu0.b32.cont [11/16] %v3544, 128
        %3600 = vxpose.xlu0.b32.cont [12/16] %v3546, 128
        %3601 = vxpose.xlu0.b32.cont [13/16] %v3548, 128
        %3602 = vxpose.xlu0.b32.cont [14/16] %v3550, 128
        %3603 = vxpose.xlu0.b32.cont [15/16] %v3552, 128
        %3604 = vxpose.xlu0.b32.end [16/16] %v3554, 128
        %v3605 = vpop.trf.xlu0
        %v3606 = vpop.trf.xlu0
        %v3607 = vpop.trf.xlu0
        %v3608 = vpop.trf.xlu0
        %v3609 = vpop.trf.xlu0
        %v3610 = vpop.trf.xlu0
        %v3611 = vpop.trf.xlu0
        %v3612 = vpop.trf.xlu0
        %v3613 = vpop.trf.xlu0
        %v3614 = vpop.trf.xlu0
        %v3615 = vpop.trf.xlu0
        %v3616 = vpop.trf.xlu0
        %v3617 = vpop.trf.xlu0
        %v3618 = vpop.trf.xlu0
        %v3619 = vpop.trf.xlu0
        %v3620 = vpop.trf.xlu0
        %v3621 = vpack.c.bf16 %v3574, %v3573
        %v3622 = vpack.c.bf16 %v3576, %v3575
        %v3623 = vpack.c.bf16 %v3578, %v3577
        %v3624 = vpack.c.bf16 %v3580, %v3579
        %v3625 = vpack.c.bf16 %v3582, %v3581
        %v3626 = vpack.c.bf16 %v3584, %v3583
        %v3627 = vpack.c.bf16 %v3586, %v3585
        %v3628 = vpack.c.bf16 %v3588, %v3587
        %v3629 = vpack.c.bf16 %v3606, %v3605
        %v3630 = vpack.c.bf16 %v3608, %v3607
        %v3631 = vpack.c.bf16 %v3610, %v3609
        %v3632 = vpack.c.bf16 %v3612, %v3611
        %v3633 = vpack.c.bf16 %v3614, %v3613
        %v3634 = vpack.c.bf16 %v3616, %v3615
        %v3635 = vpack.c.bf16 %v3618, %v3617
        %v3636 = vpack.c.bf16 %v3620, %v3619
        %v3638 = vunpack.c.l.b16 %v3555
        %v3639 = vunpack.c.h.b16 %v3555
        %v3640 = vpack.c.b16 %v3638, %v3638
        %v3641 = vpack.c.b16 %v3639, %v3639
        %3644 = vmatprep.subr.bf16.mxu0 0
        %3645 = vmatpush1.bf16.msra.mxu0 %v3621
        %3646 = vmatprep.subr.bf16.mxu0 0
        %3647 = vmatpush1.bf16.msra.mxu0 %v3622
        %3648 = vmatprep.subr.bf16.mxu0 0
        %3649 = vmatpush1.bf16.msra.mxu0 %v3623
        %3650 = vmatprep.subr.bf16.mxu0 0
        %3651 = vmatpush1.bf16.msra.mxu0 %v3624
        %3652 = vmatprep.subr.bf16.mxu0 0
        %3653 = vmatpush1.bf16.msra.mxu0 %v3625
        %3654 = vmatprep.subr.bf16.mxu0 0
        %3655 = vmatpush1.bf16.msra.mxu0 %v3626
        %3656 = vmatprep.subr.bf16.mxu0 0
        %3657 = vmatpush1.bf16.msra.mxu0 %v3627
        %3658 = vmatprep.subr.bf16.mxu0 0
        %3659 = vmatpush1.bf16.msra.mxu0 %v3628
        %3660 = vmatprep.subr.bf16.mxu0 0
        %3661 = vmatpush1.bf16.msra.mxu0 %v3629
        %3662 = vmatprep.subr.bf16.mxu0 0
        %3663 = vmatpush1.bf16.msra.mxu0 %v3630
        %3664 = vmatprep.subr.bf16.mxu0 0
        %3665 = vmatpush1.bf16.msra.mxu0 %v3631
        %3666 = vmatprep.subr.bf16.mxu0 0
        %3667 = vmatpush1.bf16.msra.mxu0 %v3632
        %3668 = vmatprep.subr.bf16.mxu0 0
        %3669 = vmatpush1.bf16.msra.mxu0 %v3633
        %3670 = vmatprep.subr.bf16.mxu0 0
        %3671 = vmatpush1.bf16.msra.mxu0 %v3634
        %3672 = vmatprep.subr.bf16.mxu0 0
        %3673 = vmatpush1.bf16.msra.mxu0 %v3635
        %3674 = vmatprep.subr.bf16.mxu0 0
        %3675 = vmatpush1.bf16.msra.mxu0 %v3636
        %3676 = vmatprep.mubr.bf16.mxu0 %v3641
        %3677 = vmatmul.mubr.bf16.gmra.mrb[0].mxu0 %v3640
        %v3678 = vpop.f32.mrb[0].mxu0
        %v3679 = vadd.f32 0.0, %v3678
        %v3680 = vpop.f32.mrb[0].mxu0
        %v3681 = vpop.f32.mrb[0].mxu0
        %v3682 = vpop.f32.mrb[0].mxu0
        %3683 = vdwg.mxu0
        %3685 = vset.pattern.permute.xlu0 0
        %3686 = vperm.xlu0 %3685, %v3556
        %v3687 = vpop.permute.xlu0 %3686
        %v3689 = vlaneseq
        %v3690 = vshrl.u32 %v3689, 7
        %v3691 = vsub.s32 0, %v3690
        %v3692 = vrot.slane %v3687, %v3691
        %v3693 = vadd.f32 %v3679, %v3692
        %v3694 = vxor.u32 %v3693, 2147483648
        %v3695 = vmul.f32 %v3694, 1.442695
        %v3696 = vpow.pop %v3695
        %v3697 = vadd.f32 %v3696, 1.0
        %v3698 = vrcp.pop %v3697
        %v3699 = vmul.f32 1.0, %v3698
        %3700 = vst [vmem:[%s489] sm:$0x1] %v3699
        %s3701 = sand.u32 %s359, 1
        %s3702 = scalar_lea.sflag [#allocation4], %s3701
        %s3703 = sand.u32 %s359, 1
        %s3704 = scalar_lea.vmem [#allocation3], %s3703
        // Predicated region
        $region81: #{res_ffn_forward.1} parent=79 // pred_check
          %p3705 = pneg %p369
        $region82: #{res_ffn_forward.1} parent=79 // pred_check_branch
          %3707 = sbr.rel (%p3705) target = $region84
        $region83: #{res_ffn_forward.1} parent=79 // pred_region
          %s3709 = ssub.s32 16, 16
          %3710 = vsyncadd %s3702, %s3709
          %s3711 = smul.addr %s31, 16
          %s3712 = scalar_lea.hbm %s15, %s3711
          %s3714 = sshll.u32 %s3704, 4
          %s3715 = int_to_ptr.vmem [resolvable:$true] %s3714
          %3717 = dma.vmem_to_hbm [thread:$0]  %s3715, 16, %s3712, %s3702
        $region84: #{res_ffn_forward.1} parent=79 // pred_fallthru
          _
      $region80: #{res_ffn_forward.1} parent=5 // pred_fallthru
        _
      %p3718 = scmp.le.s32.totalorder 2, %s26
      // Predicated region
      $region85: #{res_ffn_forward.1} parent=5 // pred_check
        %p3719 = pneg %p3718
      $region86: #{res_ffn_forward.1} parent=5 // pred_check_branch
        %3721 = sbr.rel (%p3719) target = $region88
      $region87: #{res_ffn_forward.1} parent=5 // pred_region
        %s3722 = ssub.s32 %s26, 2
        // Predicated region
        $region89: #{res_ffn_forward.1} parent=87 // pred_check
          %p3723 = pneg %p375
        $region90: #{res_ffn_forward.1} parent=87 // pred_check_branch
          %3725 = sbr.rel (%p3723) target = $region92
        $region91: #{res_ffn_forward.1} parent=87 // pred_region
          %s3726 = sand.u32 %s360, 1
          %s3727 = scalar_lea.sflag [#allocation4], %s3726
          %s3728 = sand.u32 %s360, 1
          %s3729 = scalar_lea.vmem [#allocation3], %s3728
          %3730 = dma.done %s3727, 16
        $region92: #{res_ffn_forward.1} parent=87 // pred_fallthru
          _
      $region88: #{res_ffn_forward.1} parent=5 // pred_fallthru
        _
    $region6: #{res_ffn_forward.1} parent=1 // loop_footer
      %s30 = sadd.s32 1, %s26
    $region7: #{res_ffn_forward.1} parent=1 // loop_footer_branch
      %25 = sbr.rel target = $region3
    $region8: #{res_ffn_forward.1} parent=1 // loop_exit
      _
    %3731 = vsyncpa [#allocation4], 1
    %s3732 = scalar_lea.sflag [#allocation4], 1
    %3733 = vsyncpa %s3732, 1

</llo_original>
